<compile_context>
chip_gen: v7x
topology: tpu7x:2x2x1
jax: 0.10.0
libtpu: 0.0.40
codegen_flags: <defaults>
</compile_context>

<pallas_src>
import math
import functools

import jax
import jax.numpy as jnp
from jax.experimental import pallas as pl
from jax.experimental.pallas import tpu as pltpu


def deepar_kernel(Xproj_ref, y_ref, eps_ref,
                  Wey0_ref, Whh0_ref, Wih1_ref, Whh1_ref, b1_ref,
                  Whead_ref, bhead_ref,
                  out_ref, *, seq_len):
    """Whole encode+decode recurrence in one program (no grid).

    Shapes (time-major, batch padded to 8 sublanes; gate columns [i,f,g,o], the
    i/f/o columns of every weight/bias already pre-scaled by 0.5 in the wrapper):
      Xproj_ref (T, B, 4H)   X @ Wx0 + (be@Wy0 + b_ih0 + b_hh0), precomputed
      y_ref     (S, B, 1)    encoder targets (teacher forcing), S = seq_len
      eps_ref   (T, B, 1)    std-normal noise per step
      Wey0_ref  (1, 4H)      We @ Wy0          (target -> layer-0 gates, rank-1)
      Whh0_ref  (H, 4H)      layer-0 recurrent weights
      Wih1_ref  (H, 4H)      layer-1 input weights
      Whh1_ref  (H, 4H)      layer-1 recurrent weights
      b1_ref    (1, 4H)      layer-1 bias (b_ih + b_hh)
      Whead_ref (H, 2)       [Wmu | Wsigma]
      bhead_ref (1, 2)
      out_ref   (B, 3T)      lanes = [mu(0:T) | sigma(T:2T) | sample(2T:3T)]
    """
    T, B, _ = Xproj_ref.shape
    H = Whh0_ref.shape[0]

    Wey0 = Wey0_ref[...]
    Whh0 = Whh0_ref[...]
    Wih1 = Wih1_ref[...]
    Whh1 = Whh1_ref[...]
    b1 = b1_ref[...]
    Whead = Whead_ref[...]
    bhead = bhead_ref[...]

    def lstm_gates(gates, c_prev):
        # one full-vreg tanh; sigmoid(x) = 0.5 * tanh(x/2) + 0.5 (weights pre-scaled)
        t = jnp.tanh(gates)                                  # (B, 4H), one EUP pass
        i = 0.5 * t[:, 0:H] + 0.5
        f = 0.5 * t[:, H:2 * H] + 0.5
        g = t[:, 2 * H:3 * H]
        o = 0.5 * t[:, 3 * H:4 * H] + 0.5
        c_new = f * c_prev + i * g
        h_new = o * jnp.tanh(c_new)
        return h_new, c_new

    z = jnp.zeros((B, H), jnp.float32)
    h0, c0, h1, c1 = z, z, z, z
    yprev = jnp.zeros((B, 1), jnp.float32)

    mus, sigmas, samples = [], [], []
    for s in range(T):                                       # static unroll
        if s < seq_len:
            yn = y_ref[s]                                    # teacher forcing (static slice)
        else:
            yn = yprev                                       # previous Gaussian sample

        # layer 0: hoisted covariate projection + rank-1 target term + one recurrent matmul
        gates0 = (Xproj_ref[s]
                  + yn * Wey0
                  + jnp.dot(h0, Whh0, preferred_element_type=jnp.float32))
        h0, c0 = lstm_gates(gates0, c0)

        # layer 1: split matmuls (h1 term depends only on the previous step's state)
        gates1 = (jnp.dot(h1, Whh1, preferred_element_type=jnp.float32)
                  + jnp.dot(h0, Wih1, preferred_element_type=jnp.float32)
                  + b1)
        h1, c1 = lstm_gates(gates1, c1)

        # Gaussian head: mu & sigma from one matmul, stable softplus
        hs = jnp.maximum(h1, 0.0)                            # relu(h[-1])
        head = jnp.dot(hs, Whead, preferred_element_type=jnp.float32) + bhead   # (B, 2)
        mu = head[:, 0:1]
        sraw = head[:, 1:2]
        sigma = (jnp.maximum(sraw, 0.0)
                 + jnp.log(1.0 + jnp.exp(-jnp.abs(sraw)))
                 + 1e-6)
        sample = mu + sigma * eps_ref[s]                     # reparameterized Normal
        yprev = sample

        mus.append(mu)
        sigmas.append(sigma)
        samples.append(sample)

    # single packed store, off the critical path
    out_ref[...] = jnp.concatenate(mus + sigmas + samples, axis=1)   # (B, 3T)


def init_params(key, F, E, H):
    ks = jax.random.split(key, 15)

    def u(k, shape, fan_in):
        bound = 1.0 / math.sqrt(fan_in)
        return jax.random.uniform(k, shape, jnp.float32, -bound, bound)

    return dict(
        # input_embed = nn.Linear(1, E): weight (E,1) stored transposed as (1,E)
        We=u(ks[0], (1, E), 1), be=u(ks[1], (1, E), 1),
        # LSTM layer 0 (input = [x, yembed] of size F+E), weights transposed, gates [i,f,g,o]
        Wx0=u(ks[2], (F, 4 * H), H), Wy0=u(ks[3], (E, 4 * H), H),
        Whh0=u(ks[4], (H, 4 * H), H),
        b0=u(ks[5], (1, 4 * H), H) + u(ks[6], (1, 4 * H), H),   # b_ih + b_hh
        # LSTM layer 1
        Wih1=u(ks[7], (H, 4 * H), H), Whh1=u(ks[8], (H, 4 * H), H),
        b1=u(ks[9], (1, 4 * H), H) + u(ks[10], (1, 4 * H), H),
        # Gaussian head (Linear(H, 1) x2), weights transposed
        Wmu=u(ks[11], (H, 1), H), bmu=u(ks[12], (1, 1), H),
        Wsig=u(ks[13], (H, 1), H), bsig=u(ks[14], (1, 1), H),
    )


@jax.jit
def deepar_forward(X, y, Xf, eps, params):
    B, seq_len, F = X.shape
    _, horizon, _ = Xf.shape
    T = seq_len + horizon
    H = params["Whh0"].shape[0]
    B_pad = max(8, ((B + 7) // 8) * 8)          # fill all 8 sublanes of each vreg

    # --- glue: time-major layout, batch padded ------------------------------------
    X_all = jnp.concatenate([X, Xf], axis=1)                           # (B, T, F)
    X_t = jnp.transpose(X_all, (1, 0, 2))                              # (T, B, F)
    y_t = jnp.transpose(y, (1, 0))[:, :, None]                         # (S, B, 1)
    eps_t = jnp.transpose(eps, (1, 0))[:, :, None]                     # (T, B, 1)

    pad = ((0, 0), (0, B_pad - B), (0, 0))
    X_t = jnp.pad(X_t, pad)
    y_t = jnp.pad(y_t, pad)
    eps_t = jnp.pad(eps_t, pad)

    # --- weight folding ------------------------------------------------------------
    # one-tanh gates: sigmoid(x) = 0.5*tanh(x/2)+0.5 -> pre-scale i/f/o columns by 0.5
    gate_scale = jnp.concatenate([jnp.full((H,), 0.5, jnp.float32),    # i
                                  jnp.full((H,), 0.5, jnp.float32),    # f
                                  jnp.ones((H,), jnp.float32),         # g (tanh)
                                  jnp.full((H,), 0.5, jnp.float32)])   # o

    Wx0 = params["Wx0"] * gate_scale                                   # (F, 4H)
    b0 = (params["be"] @ params["Wy0"] + params["b0"]) * gate_scale    # (1, 4H)
    Wey0 = (params["We"] @ params["Wy0"]) * gate_scale                 # (1, 4H)
    Whh0 = params["Whh0"] * gate_scale                                 # (H, 4H)
    Wih1 = params["Wih1"] * gate_scale
    Whh1 = params["Whh1"] * gate_scale
    b1 = params["b1"] * gate_scale
    Whead = jnp.concatenate([params["Wmu"], params["Wsig"]], axis=1)   # (H, 2)
    bhead = jnp.concatenate([params["bmu"], params["bsig"]], axis=1)   # (1, 2)

    # hoist the covariate projection (and fused layer-0 biases) out of the recurrence
    Xproj = jnp.einsum("tbf,fg->tbg", X_t, Wx0) + b0                   # (T, B_pad, 4H)

    vmem = pl.BlockSpec(memory_space=pltpu.MemorySpace.VMEM)
    kernel = functools.partial(deepar_kernel, seq_len=seq_len)

    flops = 2 * T * B_pad * (3 * H * 4 * H + 2 * H)                    # 3 recurrent matmuls + head
    transc = T * B_pad * (10 * H + 2)                                  # gate/c tanh + softplus exp
    bytes_accessed = 4 * (Xproj.size + y_t.size + eps_t.size + Wey0.size + Whh0.size
                          + Wih1.size + Whh1.size + b1.size + Whead.size + bhead.size
                          + B_pad * 3 * T)

    packed = pl.pallas_call(
        kernel,
        out_shape=jax.ShapeDtypeStruct((B_pad, 3 * T), jnp.float32),
        in_specs=[vmem] * 10,
        out_specs=vmem,
        cost_estimate=pl.CostEstimate(flops=flops, transcendentals=transc,
                                      bytes_accessed=bytes_accessed),
    )(Xproj, y_t, eps_t, Wey0, Whh0, Wih1, Whh1, b1, Whead, bhead)

    mu = packed[:B, 0:T]                                               # (B, T)
    sigma = packed[:B, T:2 * T]                                        # (B, T)
    samples = packed[:B, 2 * T:3 * T]                                  # (B, T)
    # ypred = samples produced at steps s in [seq_len-1, seq_len+horizon-2]
    ypred = samples[:, seq_len - 1: seq_len - 1 + horizon]             # (B, horizon)
    return ypred, mu, sigma


if __name__ == "__main__":
    # DeepAR(input_size=4, embedding_size=8, hidden_size=32, num_layers=2)
    B, F, E, H = 2, 4, 8, 32
    seq_len, horizon = 8, 4
    T = seq_len + horizon

    key = jax.random.PRNGKey(0)
    kp, kx, ky, kxf, ke = jax.random.split(key, 5)
    params = init_params(kp, F, E, H)

    X = jax.random.normal(kx, (B, seq_len, F), jnp.float32)
    y = jax.random.normal(ky, (B, seq_len), jnp.float32)
    Xf = jax.random.normal(kxf, (B, horizon, F), jnp.float32)
    eps = jax.random.normal(ke, (B, T), jnp.float32)   # std-normal noise per step

    ypred, mu, sigma = deepar_forward(X, y, Xf, eps, params)
    jax.block_until_ready((ypred, mu, sigma))

    assert ypred.shape == (B, horizon)
    assert mu.shape == (B, T) and sigma.shape == (B, T)
    assert bool(jnp.all(jnp.isfinite(ypred))
                & jnp.all(jnp.isfinite(mu))
                & jnp.all(jnp.isfinite(sigma))
                & jnp.all(sigma > 0))
    print("KERNEL_OK")
</pallas_src>

<mosaic_0001>
module attributes {stable_mosaic.version = 11 : i64} {
  func.func @deepar_kernel(%arg0: memref<12x8x128xf32, #tpu.memory_space<vmem>>, %arg1: memref<8x8x1xf32, #tpu.memory_space<vmem>>, %arg2: memref<12x8x1xf32, #tpu.memory_space<vmem>>, %arg3: memref<1x128xf32, #tpu.memory_space<vmem>>, %arg4: memref<32x128xf32, #tpu.memory_space<vmem>>, %arg5: memref<32x128xf32, #tpu.memory_space<vmem>>, %arg6: memref<32x128xf32, #tpu.memory_space<vmem>>, %arg7: memref<1x128xf32, #tpu.memory_space<vmem>>, %arg8: memref<32x2xf32, #tpu.memory_space<vmem>>, %arg9: memref<1x2xf32, #tpu.memory_space<vmem>>, %arg10: memref<8x36xf32, #tpu.memory_space<vmem>>) attributes {dimension_semantics = [], scalar_prefetch = 0 : i64, scratch_operands = 0 : i64, tpu.core_type = #tpu.core_type<tc>} {
    %c0 = arith.constant 0 : index
    %c0_0 = arith.constant 0 : index
    %0 = vector.load %arg3[%c0, %c0_0] : memref<1x128xf32, #tpu.memory_space<vmem>>, vector<1x128xf32>
    %c0_1 = arith.constant 0 : index
    %c0_2 = arith.constant 0 : index
    %1 = vector.load %arg4[%c0_1, %c0_2] : memref<32x128xf32, #tpu.memory_space<vmem>>, vector<32x128xf32>
    %c0_3 = arith.constant 0 : index
    %c0_4 = arith.constant 0 : index
    %2 = vector.load %arg5[%c0_3, %c0_4] : memref<32x128xf32, #tpu.memory_space<vmem>>, vector<32x128xf32>
    %c0_5 = arith.constant 0 : index
    %c0_6 = arith.constant 0 : index
    %3 = vector.load %arg6[%c0_5, %c0_6] : memref<32x128xf32, #tpu.memory_space<vmem>>, vector<32x128xf32>
    %c0_7 = arith.constant 0 : index
    %c0_8 = arith.constant 0 : index
    %4 = vector.load %arg7[%c0_7, %c0_8] : memref<1x128xf32, #tpu.memory_space<vmem>>, vector<1x128xf32>
    %c0_9 = arith.constant 0 : index
    %c0_10 = arith.constant 0 : index
    %5 = vector.load %arg8[%c0_9, %c0_10] : memref<32x2xf32, #tpu.memory_space<vmem>>, vector<32x2xf32>
    %c0_11 = arith.constant 0 : index
    %c0_12 = arith.constant 0 : index
    %6 = vector.load %arg9[%c0_11, %c0_12] : memref<1x2xf32, #tpu.memory_space<vmem>>, vector<1x2xf32>
    %cst = arith.constant 0.000000e+00 : f32
    %7 = vector.broadcast %cst : f32 to vector<8x32xf32>
    %c0_13 = arith.constant 0 : index
    %c0_14 = arith.constant 0 : index
    %c0_15 = arith.constant 0 : index
    %8 = vector.load %arg1[%c0_13, %c0_14, %c0_15] : memref<8x8x1xf32, #tpu.memory_space<vmem>>, vector<1x8x1xf32>
    %9 = vector.shape_cast %8 : vector<1x8x1xf32> to vector<8x1xf32>
    %c0_16 = arith.constant 0 : index
    %c0_17 = arith.constant 0 : index
    %c0_18 = arith.constant 0 : index
    %10 = vector.load %arg0[%c0_16, %c0_17, %c0_18] : memref<12x8x128xf32, #tpu.memory_space<vmem>>, vector<1x8x128xf32>
    %11 = vector.shape_cast %10 : vector<1x8x128xf32> to vector<8x128xf32>
    %12 = vector.broadcast %9 : vector<8x1xf32> to vector<8x128xf32>
    %13 = vector.broadcast %0 : vector<1x128xf32> to vector<8x128xf32>
    %14 = arith.mulf %12, %13 : vector<8x128xf32>
    %15 = arith.addf %11, %14 : vector<8x128xf32>
    %cst_19 = arith.constant dense<0.000000e+00> : vector<8x128xf32>
    %16 = tpu.matmul %7, %1, %cst_19 {dimension_numbers = #tpu.dot_dimension_numbers<[1], [0], [0], [1], [0, 0, 1, 1], [], []>} : vector<8x32xf32>, vector<32x128xf32>, vector<8x128xf32> -> vector<8x128xf32>
    %17 = arith.addf %15, %16 : vector<8x128xf32>
    %18 = math.tanh %17 : vector<8x128xf32>
    %19 = vector.extract_strided_slice %18 {offsets = [0, 0], sizes = [8, 32], strides = [1, 1]} : vector<8x128xf32> to vector<8x32xf32>
    %cst_20 = arith.constant 5.000000e-01 : f32
    %20 = vector.broadcast %cst_20 : f32 to vector<8x32xf32>
    %21 = arith.mulf %20, %19 : vector<8x32xf32>
    %cst_21 = arith.constant 5.000000e-01 : f32
    %22 = vector.broadcast %cst_21 : f32 to vector<8x32xf32>
    %23 = arith.addf %21, %22 : vector<8x32xf32>
    %24 = vector.extract_strided_slice %18 {offsets = [0, 32], sizes = [8, 32], strides = [1, 1]} : vector<8x128xf32> to vector<8x32xf32>
    %cst_22 = arith.constant 5.000000e-01 : f32
    %25 = vector.broadcast %cst_22 : f32 to vector<8x32xf32>
    %26 = arith.mulf %25, %24 : vector<8x32xf32>
    %cst_23 = arith.constant 5.000000e-01 : f32
    %27 = vector.broadcast %cst_23 : f32 to vector<8x32xf32>
    %28 = arith.addf %26, %27 : vector<8x32xf32>
    %29 = vector.extract_strided_slice %18 {offsets = [0, 64], sizes = [8, 32], strides = [1, 1]} : vector<8x128xf32> to vector<8x32xf32>
    %30 = vector.extract_strided_slice %18 {offsets = [0, 96], sizes = [8, 32], strides = [1, 1]} : vector<8x128xf32> to vector<8x32xf32>
    %cst_24 = arith.constant 5.000000e-01 : f32
    %31 = vector.broadcast %cst_24 : f32 to vector<8x32xf32>
    %32 = arith.mulf %31, %30 : vector<8x32xf32>
    %cst_25 = arith.constant 5.000000e-01 : f32
    %33 = vector.broadcast %cst_25 : f32 to vector<8x32xf32>
    %34 = arith.addf %32, %33 : vector<8x32xf32>
    %35 = arith.mulf %28, %7 : vector<8x32xf32>
    %36 = arith.mulf %23, %29 : vector<8x32xf32>
    %37 = arith.addf %35, %36 : vector<8x32xf32>
    %38 = math.tanh %37 : vector<8x32xf32>
    %39 = arith.mulf %34, %38 : vector<8x32xf32>
    %cst_26 = arith.constant dense<0.000000e+00> : vector<8x128xf32>
    %40 = tpu.matmul %7, %3, %cst_26 {dimension_numbers = #tpu.dot_dimension_numbers<[1], [0], [0], [1], [0, 0, 1, 1], [], []>} : vector<8x32xf32>, vector<32x128xf32>, vector<8x128xf32> -> vector<8x128xf32>
    %cst_27 = arith.constant dense<0.000000e+00> : vector<8x128xf32>
    %41 = tpu.matmul %39, %2, %cst_27 {dimension_numbers = #tpu.dot_dimension_numbers<[1], [0], [0], [1], [0, 0, 1, 1], [], []>} : vector<8x32xf32>, vector<32x128xf32>, vector<8x128xf32> -> vector<8x128xf32>
    %42 = arith.addf %40, %41 : vector<8x128xf32>
    %43 = vector.broadcast %4 : vector<1x128xf32> to vector<8x128xf32>
    %44 = arith.addf %42, %43 : vector<8x128xf32>
    %45 = math.tanh %44 : vector<8x128xf32>
    %46 = vector.extract_strided_slice %45 {offsets = [0, 0], sizes = [8, 32], strides = [1, 1]} : vector<8x128xf32> to vector<8x32xf32>
    %cst_28 = arith.constant 5.000000e-01 : f32
    %47 = vector.broadcast %cst_28 : f32 to vector<8x32xf32>
    %48 = arith.mulf %47, %46 : vector<8x32xf32>
    %cst_29 = arith.constant 5.000000e-01 : f32
    %49 = vector.broadcast %cst_29 : f32 to vector<8x32xf32>
    %50 = arith.addf %48, %49 : vector<8x32xf32>
    %51 = vector.extract_strided_slice %45 {offsets = [0, 32], sizes = [8, 32], strides = [1, 1]} : vector<8x128xf32> to vector<8x32xf32>
    %cst_30 = arith.constant 5.000000e-01 : f32
    %52 = vector.broadcast %cst_30 : f32 to vector<8x32xf32>
    %53 = arith.mulf %52, %51 : vector<8x32xf32>
    %cst_31 = arith.constant 5.000000e-01 : f32
    %54 = vector.broadcast %cst_31 : f32 to vector<8x32xf32>
    %55 = arith.addf %53, %54 : vector<8x32xf32>
    %56 = vector.extract_strided_slice %45 {offsets = [0, 64], sizes = [8, 32], strides = [1, 1]} : vector<8x128xf32> to vector<8x32xf32>
    %57 = vector.extract_strided_slice %45 {offsets = [0, 96], sizes = [8, 32], strides = [1, 1]} : vector<8x128xf32> to vector<8x32xf32>
    %cst_32 = arith.constant 5.000000e-01 : f32
    %58 = vector.broadcast %cst_32 : f32 to vector<8x32xf32>
    %59 = arith.mulf %58, %57 : vector<8x32xf32>
    %cst_33 = arith.constant 5.000000e-01 : f32
    %60 = vector.broadcast %cst_33 : f32 to vector<8x32xf32>
    %61 = arith.addf %59, %60 : vector<8x32xf32>
    %62 = arith.mulf %55, %7 : vector<8x32xf32>
    %63 = arith.mulf %50, %56 : vector<8x32xf32>
    %64 = arith.addf %62, %63 : vector<8x32xf32>
    %65 = math.tanh %64 : vector<8x32xf32>
    %66 = arith.mulf %61, %65 : vector<8x32xf32>
    %cst_34 = arith.constant 0.000000e+00 : f32
    %67 = vector.broadcast %cst_34 : f32 to vector<8x32xf32>
    %68 = arith.maximumf %66, %67 : vector<8x32xf32>
    %cst_35 = arith.constant dense<0.000000e+00> : vector<8x2xf32>
    %69 = tpu.matmul %68, %5, %cst_35 {dimension_numbers = #tpu.dot_dimension_numbers<[1], [0], [0], [1], [0, 0, 1, 1], [], []>} : vector<8x32xf32>, vector<32x2xf32>, vector<8x2xf32> -> vector<8x2xf32>
    %70 = vector.broadcast %6 : vector<1x2xf32> to vector<8x2xf32>
    %71 = arith.addf %69, %70 : vector<8x2xf32>
    %72 = vector.extract_strided_slice %71 {offsets = [0, 0], sizes = [8, 1], strides = [1, 1]} : vector<8x2xf32> to vector<8x1xf32>
    %73 = vector.extract_strided_slice %71 {offsets = [0, 1], sizes = [8, 1], strides = [1, 1]} : vector<8x2xf32> to vector<8x1xf32>
    %cst_36 = arith.constant 0.000000e+00 : f32
    %74 = vector.broadcast %cst_36 : f32 to vector<8x1xf32>
    %75 = arith.maximumf %73, %74 : vector<8x1xf32>
    %76 = math.absf %73 : vector<8x1xf32>
    %cst_37 = arith.constant 0.000000e+00 : f32
    %77 = vector.broadcast %cst_37 : f32 to vector<8x1xf32>
    %78 = arith.subf %77, %76 : vector<8x1xf32>
    %79 = math.exp %78 : vector<8x1xf32>
    %cst_38 = arith.constant 1.000000e+00 : f32
    %80 = vector.broadcast %cst_38 : f32 to vector<8x1xf32>
    %81 = arith.addf %80, %79 : vector<8x1xf32>
    %82 = math.log %81 : vector<8x1xf32>
    %83 = arith.addf %75, %82 : vector<8x1xf32>
    %cst_39 = arith.constant 9.99999997E-7 : f32
    %84 = vector.broadcast %cst_39 : f32 to vector<8x1xf32>
    %85 = arith.addf %83, %84 : vector<8x1xf32>
    %c0_40 = arith.constant 0 : index
    %c0_41 = arith.constant 0 : index
    %c0_42 = arith.constant 0 : index
    %86 = vector.load %arg2[%c0_40, %c0_41, %c0_42] : memref<12x8x1xf32, #tpu.memory_space<vmem>>, vector<1x8x1xf32>
    %87 = vector.shape_cast %86 : vector<1x8x1xf32> to vector<8x1xf32>
    %88 = arith.mulf %85, %87 : vector<8x1xf32>
    %89 = arith.addf %72, %88 : vector<8x1xf32>
    %c1 = arith.constant 1 : index
    %c0_43 = arith.constant 0 : index
    %c0_44 = arith.constant 0 : index
    %90 = vector.load %arg1[%c1, %c0_43, %c0_44] : memref<8x8x1xf32, #tpu.memory_space<vmem>>, vector<1x8x1xf32>
    %91 = vector.shape_cast %90 : vector<1x8x1xf32> to vector<8x1xf32>
    %c1_45 = arith.constant 1 : index
    %c0_46 = arith.constant 0 : index
    %c0_47 = arith.constant 0 : index
    %92 = vector.load %arg0[%c1_45, %c0_46, %c0_47] : memref<12x8x128xf32, #tpu.memory_space<vmem>>, vector<1x8x128xf32>
    %93 = vector.shape_cast %92 : vector<1x8x128xf32> to vector<8x128xf32>
    %94 = vector.broadcast %91 : vector<8x1xf32> to vector<8x128xf32>
    %95 = vector.broadcast %0 : vector<1x128xf32> to vector<8x128xf32>
    %96 = arith.mulf %94, %95 : vector<8x128xf32>
    %97 = arith.addf %93, %96 : vector<8x128xf32>
    %cst_48 = arith.constant dense<0.000000e+00> : vector<8x128xf32>
    %98 = tpu.matmul %39, %1, %cst_48 {dimension_numbers = #tpu.dot_dimension_numbers<[1], [0], [0], [1], [0, 0, 1, 1], [], []>} : vector<8x32xf32>, vector<32x128xf32>, vector<8x128xf32> -> vector<8x128xf32>
    %99 = arith.addf %97, %98 : vector<8x128xf32>
    %100 = math.tanh %99 : vector<8x128xf32>
    %101 = vector.extract_strided_slice %100 {offsets = [0, 0], sizes = [8, 32], strides = [1, 1]} : vector<8x128xf32> to vector<8x32xf32>
    %cst_49 = arith.constant 5.000000e-01 : f32
    %102 = vector.broadcast %cst_49 : f32 to vector<8x32xf32>
    %103 = arith.mulf %102, %101 : vector<8x32xf32>
    %cst_50 = arith.constant 5.000000e-01 : f32
    %104 = vector.broadcast %cst_50 : f32 to vector<8x32xf32>
    %105 = arith.addf %103, %104 : vector<8x32xf32>
    %106 = vector.extract_strided_slice %100 {offsets = [0, 32], sizes = [8, 32], strides = [1, 1]} : vector<8x128xf32> to vector<8x32xf32>
    %cst_51 = arith.constant 5.000000e-01 : f32
    %107 = vector.broadcast %cst_51 : f32 to vector<8x32xf32>
    %108 = arith.mulf %107, %106 : vector<8x32xf32>
    %cst_52 = arith.constant 5.000000e-01 : f32
    %109 = vector.broadcast %cst_52 : f32 to vector<8x32xf32>
    %110 = arith.addf %108, %109 : vector<8x32xf32>
    %111 = vector.extract_strided_slice %100 {offsets = [0, 64], sizes = [8, 32], strides = [1, 1]} : vector<8x128xf32> to vector<8x32xf32>
    %112 = vector.extract_strided_slice %100 {offsets = [0, 96], sizes = [8, 32], strides = [1, 1]} : vector<8x128xf32> to vector<8x32xf32>
    %cst_53 = arith.constant 5.000000e-01 : f32
    %113 = vector.broadcast %cst_53 : f32 to vector<8x32xf32>
    %114 = arith.mulf %113, %112 : vector<8x32xf32>
    %cst_54 = arith.constant 5.000000e-01 : f32
    %115 = vector.broadcast %cst_54 : f32 to vector<8x32xf32>
    %116 = arith.addf %114, %115 : vector<8x32xf32>
    %117 = arith.mulf %110, %37 : vector<8x32xf32>
    %118 = arith.mulf %105, %111 : vector<8x32xf32>
    %119 = arith.addf %117, %118 : vector<8x32xf32>
    %120 = math.tanh %119 : vector<8x32xf32>
    %121 = arith.mulf %116, %120 : vector<8x32xf32>
    %cst_55 = arith.constant dense<0.000000e+00> : vector<8x128xf32>
    %122 = tpu.matmul %66, %3, %cst_55 {dimension_numbers = #tpu.dot_dimension_numbers<[1], [0], [0], [1], [0, 0, 1, 1], [], []>} : vector<8x32xf32>, vector<32x128xf32>, vector<8x128xf32> -> vector<8x128xf32>
    %cst_56 = arith.constant dense<0.000000e+00> : vector<8x128xf32>
    %123 = tpu.matmul %121, %2, %cst_56 {dimension_numbers = #tpu.dot_dimension_numbers<[1], [0], [0], [1], [0, 0, 1, 1], [], []>} : vector<8x32xf32>, vector<32x128xf32>, vector<8x128xf32> -> vector<8x128xf32>
    %124 = arith.addf %122, %123 : vector<8x128xf32>
    %125 = vector.broadcast %4 : vector<1x128xf32> to vector<8x128xf32>
    %126 = arith.addf %124, %125 : vector<8x128xf32>
    %127 = math.tanh %126 : vector<8x128xf32>
    %128 = vector.extract_strided_slice %127 {offsets = [0, 0], sizes = [8, 32], strides = [1, 1]} : vector<8x128xf32> to vector<8x32xf32>
    %cst_57 = arith.constant 5.000000e-01 : f32
    %129 = vector.broadcast %cst_57 : f32 to vector<8x32xf32>
    %130 = arith.mulf %129, %128 : vector<8x32xf32>
    %cst_58 = arith.constant 5.000000e-01 : f32
    %131 = vector.broadcast %cst_58 : f32 to vector<8x32xf32>
    %132 = arith.addf %130, %131 : vector<8x32xf32>
    %133 = vector.extract_strided_slice %127 {offsets = [0, 32], sizes = [8, 32], strides = [1, 1]} : vector<8x128xf32> to vector<8x32xf32>
    %cst_59 = arith.constant 5.000000e-01 : f32
    %134 = vector.broadcast %cst_59 : f32 to vector<8x32xf32>
    %135 = arith.mulf %134, %133 : vector<8x32xf32>
    %cst_60 = arith.constant 5.000000e-01 : f32
    %136 = vector.broadcast %cst_60 : f32 to vector<8x32xf32>
    %137 = arith.addf %135, %136 : vector<8x32xf32>
    %138 = vector.extract_strided_slice %127 {offsets = [0, 64], sizes = [8, 32], strides = [1, 1]} : vector<8x128xf32> to vector<8x32xf32>
    %139 = vector.extract_strided_slice %127 {offsets = [0, 96], sizes = [8, 32], strides = [1, 1]} : vector<8x128xf32> to vector<8x32xf32>
    %cst_61 = arith.constant 5.000000e-01 : f32
    %140 = vector.broadcast %cst_61 : f32 to vector<8x32xf32>
    %141 = arith.mulf %140, %139 : vector<8x32xf32>
    %cst_62 = arith.constant 5.000000e-01 : f32
    %142 = vector.broadcast %cst_62 : f32 to vector<8x32xf32>
    %143 = arith.addf %141, %142 : vector<8x32xf32>
    %144 = arith.mulf %137, %64 : vector<8x32xf32>
    %145 = arith.mulf %132, %138 : vector<8x32xf32>
    %146 = arith.addf %144, %145 : vector<8x32xf32>
    %147 = math.tanh %146 : vector<8x32xf32>
    %148 = arith.mulf %143, %147 : vector<8x32xf32>
    %cst_63 = arith.constant 0.000000e+00 : f32
    %149 = vector.broadcast %cst_63 : f32 to vector<8x32xf32>
    %150 = arith.maximumf %148, %149 : vector<8x32xf32>
    %cst_64 = arith.constant dense<0.000000e+00> : vector<8x2xf32>
    %151 = tpu.matmul %150, %5, %cst_64 {dimension_numbers = #tpu.dot_dimension_numbers<[1], [0], [0], [1], [0, 0, 1, 1], [], []>} : vector<8x32xf32>, vector<32x2xf32>, vector<8x2xf32> -> vector<8x2xf32>
    %152 = vector.broadcast %6 : vector<1x2xf32> to vector<8x2xf32>
    %153 = arith.addf %151, %152 : vector<8x2xf32>
    %154 = vector.extract_strided_slice %153 {offsets = [0, 0], sizes = [8, 1], strides = [1, 1]} : vector<8x2xf32> to vector<8x1xf32>
    %155 = vector.extract_strided_slice %153 {offsets = [0, 1], sizes = [8, 1], strides = [1, 1]} : vector<8x2xf32> to vector<8x1xf32>
    %cst_65 = arith.constant 0.000000e+00 : f32
    %156 = vector.broadcast %cst_65 : f32 to vector<8x1xf32>
    %157 = arith.maximumf %155, %156 : vector<8x1xf32>
    %158 = math.absf %155 : vector<8x1xf32>
    %cst_66 = arith.constant 0.000000e+00 : f32
    %159 = vector.broadcast %cst_66 : f32 to vector<8x1xf32>
    %160 = arith.subf %159, %158 : vector<8x1xf32>
    %161 = math.exp %160 : vector<8x1xf32>
    %cst_67 = arith.constant 1.000000e+00 : f32
    %162 = vector.broadcast %cst_67 : f32 to vector<8x1xf32>
    %163 = arith.addf %162, %161 : vector<8x1xf32>
    %164 = math.log %163 : vector<8x1xf32>
    %165 = arith.addf %157, %164 : vector<8x1xf32>
    %cst_68 = arith.constant 9.99999997E-7 : f32
    %166 = vector.broadcast %cst_68 : f32 to vector<8x1xf32>
    %167 = arith.addf %165, %166 : vector<8x1xf32>
    %c1_69 = arith.constant 1 : index
    %c0_70 = arith.constant 0 : index
    %c0_71 = arith.constant 0 : index
    %168 = vector.load %arg2[%c1_69, %c0_70, %c0_71] : memref<12x8x1xf32, #tpu.memory_space<vmem>>, vector<1x8x1xf32>
    %169 = vector.shape_cast %168 : vector<1x8x1xf32> to vector<8x1xf32>
    %170 = arith.mulf %167, %169 : vector<8x1xf32>
    %171 = arith.addf %154, %170 : vector<8x1xf32>
    %c2 = arith.constant 2 : index
    %c0_72 = arith.constant 0 : index
    %c0_73 = arith.constant 0 : index
    %172 = vector.load %arg1[%c2, %c0_72, %c0_73] : memref<8x8x1xf32, #tpu.memory_space<vmem>>, vector<1x8x1xf32>
    %173 = vector.shape_cast %172 : vector<1x8x1xf32> to vector<8x1xf32>
    %c2_74 = arith.constant 2 : index
    %c0_75 = arith.constant 0 : index
    %c0_76 = arith.constant 0 : index
    %174 = vector.load %arg0[%c2_74, %c0_75, %c0_76] : memref<12x8x128xf32, #tpu.memory_space<vmem>>, vector<1x8x128xf32>
    %175 = vector.shape_cast %174 : vector<1x8x128xf32> to vector<8x128xf32>
    %176 = vector.broadcast %173 : vector<8x1xf32> to vector<8x128xf32>
    %177 = vector.broadcast %0 : vector<1x128xf32> to vector<8x128xf32>
    %178 = arith.mulf %176, %177 : vector<8x128xf32>
    %179 = arith.addf %175, %178 : vector<8x128xf32>
    %cst_77 = arith.constant dense<0.000000e+00> : vector<8x128xf32>
    %180 = tpu.matmul %121, %1, %cst_77 {dimension_numbers = #tpu.dot_dimension_numbers<[1], [0], [0], [1], [0, 0, 1, 1], [], []>} : vector<8x32xf32>, vector<32x128xf32>, vector<8x128xf32> -> vector<8x128xf32>
    %181 = arith.addf %179, %180 : vector<8x128xf32>
    %182 = math.tanh %181 : vector<8x128xf32>
    %183 = vector.extract_strided_slice %182 {offsets = [0, 0], sizes = [8, 32], strides = [1, 1]} : vector<8x128xf32> to vector<8x32xf32>
    %cst_78 = arith.constant 5.000000e-01 : f32
    %184 = vector.broadcast %cst_78 : f32 to vector<8x32xf32>
    %185 = arith.mulf %184, %183 : vector<8x32xf32>
    %cst_79 = arith.constant 5.000000e-01 : f32
    %186 = vector.broadcast %cst_79 : f32 to vector<8x32xf32>
    %187 = arith.addf %185, %186 : vector<8x32xf32>
    %188 = vector.extract_strided_slice %182 {offsets = [0, 32], sizes = [8, 32], strides = [1, 1]} : vector<8x128xf32> to vector<8x32xf32>
    %cst_80 = arith.constant 5.000000e-01 : f32
    %189 = vector.broadcast %cst_80 : f32 to vector<8x32xf32>
    %190 = arith.mulf %189, %188 : vector<8x32xf32>
    %cst_81 = arith.constant 5.000000e-01 : f32
    %191 = vector.broadcast %cst_81 : f32 to vector<8x32xf32>
    %192 = arith.addf %190, %191 : vector<8x32xf32>
    %193 = vector.extract_strided_slice %182 {offsets = [0, 64], sizes = [8, 32], strides = [1, 1]} : vector<8x128xf32> to vector<8x32xf32>
    %194 = vector.extract_strided_slice %182 {offsets = [0, 96], sizes = [8, 32], strides = [1, 1]} : vector<8x128xf32> to vector<8x32xf32>
    %cst_82 = arith.constant 5.000000e-01 : f32
    %195 = vector.broadcast %cst_82 : f32 to vector<8x32xf32>
    %196 = arith.mulf %195, %194 : vector<8x32xf32>
    %cst_83 = arith.constant 5.000000e-01 : f32
    %197 = vector.broadcast %cst_83 : f32 to vector<8x32xf32>
    %198 = arith.addf %196, %197 : vector<8x32xf32>
    %199 = arith.mulf %192, %119 : vector<8x32xf32>
    %200 = arith.mulf %187, %193 : vector<8x32xf32>
    %201 = arith.addf %199, %200 : vector<8x32xf32>
    %202 = math.tanh %201 : vector<8x32xf32>
    %203 = arith.mulf %198, %202 : vector<8x32xf32>
    %cst_84 = arith.constant dense<0.000000e+00> : vector<8x128xf32>
    %204 = tpu.matmul %148, %3, %cst_84 {dimension_numbers = #tpu.dot_dimension_numbers<[1], [0], [0], [1], [0, 0, 1, 1], [], []>} : vector<8x32xf32>, vector<32x128xf32>, vector<8x128xf32> -> vector<8x128xf32>
    %cst_85 = arith.constant dense<0.000000e+00> : vector<8x128xf32>
    %205 = tpu.matmul %203, %2, %cst_85 {dimension_numbers = #tpu.dot_dimension_numbers<[1], [0], [0], [1], [0, 0, 1, 1], [], []>} : vector<8x32xf32>, vector<32x128xf32>, vector<8x128xf32> -> vector<8x128xf32>
    %206 = arith.addf %204, %205 : vector<8x128xf32>
    %207 = vector.broadcast %4 : vector<1x128xf32> to vector<8x128xf32>
    %208 = arith.addf %206, %207 : vector<8x128xf32>
    %209 = math.tanh %208 : vector<8x128xf32>
    %210 = vector.extract_strided_slice %209 {offsets = [0, 0], sizes = [8, 32], strides = [1, 1]} : vector<8x128xf32> to vector<8x32xf32>
    %cst_86 = arith.constant 5.000000e-01 : f32
    %211 = vector.broadcast %cst_86 : f32 to vector<8x32xf32>
    %212 = arith.mulf %211, %210 : vector<8x32xf32>
    %cst_87 = arith.constant 5.000000e-01 : f32
    %213 = vector.broadcast %cst_87 : f32 to vector<8x32xf32>
    %214 = arith.addf %212, %213 : vector<8x32xf32>
    %215 = vector.extract_strided_slice %209 {offsets = [0, 32], sizes = [8, 32], strides = [1, 1]} : vector<8x128xf32> to vector<8x32xf32>
    %cst_88 = arith.constant 5.000000e-01 : f32
    %216 = vector.broadcast %cst_88 : f32 to vector<8x32xf32>
    %217 = arith.mulf %216, %215 : vector<8x32xf32>
    %cst_89 = arith.constant 5.000000e-01 : f32
    %218 = vector.broadcast %cst_89 : f32 to vector<8x32xf32>
    %219 = arith.addf %217, %218 : vector<8x32xf32>
    %220 = vector.extract_strided_slice %209 {offsets = [0, 64], sizes = [8, 32], strides = [1, 1]} : vector<8x128xf32> to vector<8x32xf32>
    %221 = vector.extract_strided_slice %209 {offsets = [0, 96], sizes = [8, 32], strides = [1, 1]} : vector<8x128xf32> to vector<8x32xf32>
    %cst_90 = arith.constant 5.000000e-01 : f32
    %222 = vector.broadcast %cst_90 : f32 to vector<8x32xf32>
    %223 = arith.mulf %222, %221 : vector<8x32xf32>
    %cst_91 = arith.constant 5.000000e-01 : f32
    %224 = vector.broadcast %cst_91 : f32 to vector<8x32xf32>
    %225 = arith.addf %223, %224 : vector<8x32xf32>
    %226 = arith.mulf %219, %146 : vector<8x32xf32>
    %227 = arith.mulf %214, %220 : vector<8x32xf32>
    %228 = arith.addf %226, %227 : vector<8x32xf32>
    %229 = math.tanh %228 : vector<8x32xf32>
    %230 = arith.mulf %225, %229 : vector<8x32xf32>
    %cst_92 = arith.constant 0.000000e+00 : f32
    %231 = vector.broadcast %cst_92 : f32 to vector<8x32xf32>
    %232 = arith.maximumf %230, %231 : vector<8x32xf32>
    %cst_93 = arith.constant dense<0.000000e+00> : vector<8x2xf32>
    %233 = tpu.matmul %232, %5, %cst_93 {dimension_numbers = #tpu.dot_dimension_numbers<[1], [0], [0], [1], [0, 0, 1, 1], [], []>} : vector<8x32xf32>, vector<32x2xf32>, vector<8x2xf32> -> vector<8x2xf32>
    %234 = vector.broadcast %6 : vector<1x2xf32> to vector<8x2xf32>
    %235 = arith.addf %233, %234 : vector<8x2xf32>
    %236 = vector.extract_strided_slice %235 {offsets = [0, 0], sizes = [8, 1], strides = [1, 1]} : vector<8x2xf32> to vector<8x1xf32>
    %237 = vector.extract_strided_slice %235 {offsets = [0, 1], sizes = [8, 1], strides = [1, 1]} : vector<8x2xf32> to vector<8x1xf32>
    %cst_94 = arith.constant 0.000000e+00 : f32
    %238 = vector.broadcast %cst_94 : f32 to vector<8x1xf32>
    %239 = arith.maximumf %237, %238 : vector<8x1xf32>
    %240 = math.absf %237 : vector<8x1xf32>
    %cst_95 = arith.constant 0.000000e+00 : f32
    %241 = vector.broadcast %cst_95 : f32 to vector<8x1xf32>
    %242 = arith.subf %241, %240 : vector<8x1xf32>
    %243 = math.exp %242 : vector<8x1xf32>
    %cst_96 = arith.constant 1.000000e+00 : f32
    %244 = vector.broadcast %cst_96 : f32 to vector<8x1xf32>
    %245 = arith.addf %244, %243 : vector<8x1xf32>
    %246 = math.log %245 : vector<8x1xf32>
    %247 = arith.addf %239, %246 : vector<8x1xf32>
    %cst_97 = arith.constant 9.99999997E-7 : f32
    %248 = vector.broadcast %cst_97 : f32 to vector<8x1xf32>
    %249 = arith.addf %247, %248 : vector<8x1xf32>
    %c2_98 = arith.constant 2 : index
    %c0_99 = arith.constant 0 : index
    %c0_100 = arith.constant 0 : index
    %250 = vector.load %arg2[%c2_98, %c0_99, %c0_100] : memref<12x8x1xf32, #tpu.memory_space<vmem>>, vector<1x8x1xf32>
    %251 = vector.shape_cast %250 : vector<1x8x1xf32> to vector<8x1xf32>
    %252 = arith.mulf %249, %251 : vector<8x1xf32>
    %253 = arith.addf %236, %252 : vector<8x1xf32>
    %c3 = arith.constant 3 : index
    %c0_101 = arith.constant 0 : index
    %c0_102 = arith.constant 0 : index
    %254 = vector.load %arg1[%c3, %c0_101, %c0_102] : memref<8x8x1xf32, #tpu.memory_space<vmem>>, vector<1x8x1xf32>
    %255 = vector.shape_cast %254 : vector<1x8x1xf32> to vector<8x1xf32>
    %c3_103 = arith.constant 3 : index
    %c0_104 = arith.constant 0 : index
    %c0_105 = arith.constant 0 : index
    %256 = vector.load %arg0[%c3_103, %c0_104, %c0_105] : memref<12x8x128xf32, #tpu.memory_space<vmem>>, vector<1x8x128xf32>
    %257 = vector.shape_cast %256 : vector<1x8x128xf32> to vector<8x128xf32>
    %258 = vector.broadcast %255 : vector<8x1xf32> to vector<8x128xf32>
    %259 = vector.broadcast %0 : vector<1x128xf32> to vector<8x128xf32>
    %260 = arith.mulf %258, %259 : vector<8x128xf32>
    %261 = arith.addf %257, %260 : vector<8x128xf32>
    %cst_106 = arith.constant dense<0.000000e+00> : vector<8x128xf32>
    %262 = tpu.matmul %203, %1, %cst_106 {dimension_numbers = #tpu.dot_dimension_numbers<[1], [0], [0], [1], [0, 0, 1, 1], [], []>} : vector<8x32xf32>, vector<32x128xf32>, vector<8x128xf32> -> vector<8x128xf32>
    %263 = arith.addf %261, %262 : vector<8x128xf32>
    %264 = math.tanh %263 : vector<8x128xf32>
    %265 = vector.extract_strided_slice %264 {offsets = [0, 0], sizes = [8, 32], strides = [1, 1]} : vector<8x128xf32> to vector<8x32xf32>
    %cst_107 = arith.constant 5.000000e-01 : f32
    %266 = vector.broadcast %cst_107 : f32 to vector<8x32xf32>
    %267 = arith.mulf %266, %265 : vector<8x32xf32>
    %cst_108 = arith.constant 5.000000e-01 : f32
    %268 = vector.broadcast %cst_108 : f32 to vector<8x32xf32>
    %269 = arith.addf %267, %268 : vector<8x32xf32>
    %270 = vector.extract_strided_slice %264 {offsets = [0, 32], sizes = [8, 32], strides = [1, 1]} : vector<8x128xf32> to vector<8x32xf32>
    %cst_109 = arith.constant 5.000000e-01 : f32
    %271 = vector.broadcast %cst_109 : f32 to vector<8x32xf32>
    %272 = arith.mulf %271, %270 : vector<8x32xf32>
    %cst_110 = arith.constant 5.000000e-01 : f32
    %273 = vector.broadcast %cst_110 : f32 to vector<8x32xf32>
    %274 = arith.addf %272, %273 : vector<8x32xf32>
    %275 = vector.extract_strided_slice %264 {offsets = [0, 64], sizes = [8, 32], strides = [1, 1]} : vector<8x128xf32> to vector<8x32xf32>
    %276 = vector.extract_strided_slice %264 {offsets = [0, 96], sizes = [8, 32], strides = [1, 1]} : vector<8x128xf32> to vector<8x32xf32>
    %cst_111 = arith.constant 5.000000e-01 : f32
    %277 = vector.broadcast %cst_111 : f32 to vector<8x32xf32>
    %278 = arith.mulf %277, %276 : vector<8x32xf32>
    %cst_112 = arith.constant 5.000000e-01 : f32
    %279 = vector.broadcast %cst_112 : f32 to vector<8x32xf32>
    %280 = arith.addf %278, %279 : vector<8x32xf32>
    %281 = arith.mulf %274, %201 : vector<8x32xf32>
    %282 = arith.mulf %269, %275 : vector<8x32xf32>
    %283 = arith.addf %281, %282 : vector<8x32xf32>
    %284 = math.tanh %283 : vector<8x32xf32>
    %285 = arith.mulf %280, %284 : vector<8x32xf32>
    %cst_113 = arith.constant dense<0.000000e+00> : vector<8x128xf32>
    %286 = tpu.matmul %230, %3, %cst_113 {dimension_numbers = #tpu.dot_dimension_numbers<[1], [0], [0], [1], [0, 0, 1, 1], [], []>} : vector<8x32xf32>, vector<32x128xf32>, vector<8x128xf32> -> vector<8x128xf32>
    %cst_114 = arith.constant dense<0.000000e+00> : vector<8x128xf32>
    %287 = tpu.matmul %285, %2, %cst_114 {dimension_numbers = #tpu.dot_dimension_numbers<[1], [0], [0], [1], [0, 0, 1, 1], [], []>} : vector<8x32xf32>, vector<32x128xf32>, vector<8x128xf32> -> vector<8x128xf32>
    %288 = arith.addf %286, %287 : vector<8x128xf32>
    %289 = vector.broadcast %4 : vector<1x128xf32> to vector<8x128xf32>
    %290 = arith.addf %288, %289 : vector<8x128xf32>
    %291 = math.tanh %290 : vector<8x128xf32>
    %292 = vector.extract_strided_slice %291 {offsets = [0, 0], sizes = [8, 32], strides = [1, 1]} : vector<8x128xf32> to vector<8x32xf32>
    %cst_115 = arith.constant 5.000000e-01 : f32
    %293 = vector.broadcast %cst_115 : f32 to vector<8x32xf32>
    %294 = arith.mulf %293, %292 : vector<8x32xf32>
    %cst_116 = arith.constant 5.000000e-01 : f32
    %295 = vector.broadcast %cst_116 : f32 to vector<8x32xf32>
    %296 = arith.addf %294, %295 : vector<8x32xf32>
    %297 = vector.extract_strided_slice %291 {offsets = [0, 32], sizes = [8, 32], strides = [1, 1]} : vector<8x128xf32> to vector<8x32xf32>
    %cst_117 = arith.constant 5.000000e-01 : f32
    %298 = vector.broadcast %cst_117 : f32 to vector<8x32xf32>
    %299 = arith.mulf %298, %297 : vector<8x32xf32>
    %cst_118 = arith.constant 5.000000e-01 : f32
    %300 = vector.broadcast %cst_118 : f32 to vector<8x32xf32>
    %301 = arith.addf %299, %300 : vector<8x32xf32>
    %302 = vector.extract_strided_slice %291 {offsets = [0, 64], sizes = [8, 32], strides = [1, 1]} : vector<8x128xf32> to vector<8x32xf32>
    %303 = vector.extract_strided_slice %291 {offsets = [0, 96], sizes = [8, 32], strides = [1, 1]} : vector<8x128xf32> to vector<8x32xf32>
    %cst_119 = arith.constant 5.000000e-01 : f32
    %304 = vector.broadcast %cst_119 : f32 to vector<8x32xf32>
    %305 = arith.mulf %304, %303 : vector<8x32xf32>
    %cst_120 = arith.constant 5.000000e-01 : f32
    %306 = vector.broadcast %cst_120 : f32 to vector<8x32xf32>
    %307 = arith.addf %305, %306 : vector<8x32xf32>
    %308 = arith.mulf %301, %228 : vector<8x32xf32>
    %309 = arith.mulf %296, %302 : vector<8x32xf32>
    %310 = arith.addf %308, %309 : vector<8x32xf32>
    %311 = math.tanh %310 : vector<8x32xf32>
    %312 = arith.mulf %307, %311 : vector<8x32xf32>
    %cst_121 = arith.constant 0.000000e+00 : f32
    %313 = vector.broadcast %cst_121 : f32 to vector<8x32xf32>
    %314 = arith.maximumf %312, %313 : vector<8x32xf32>
    %cst_122 = arith.constant dense<0.000000e+00> : vector<8x2xf32>
    %315 = tpu.matmul %314, %5, %cst_122 {dimension_numbers = #tpu.dot_dimension_numbers<[1], [0], [0], [1], [0, 0, 1, 1], [], []>} : vector<8x32xf32>, vector<32x2xf32>, vector<8x2xf32> -> vector<8x2xf32>
    %316 = vector.broadcast %6 : vector<1x2xf32> to vector<8x2xf32>
    %317 = arith.addf %315, %316 : vector<8x2xf32>
    %318 = vector.extract_strided_slice %317 {offsets = [0, 0], sizes = [8, 1], strides = [1, 1]} : vector<8x2xf32> to vector<8x1xf32>
    %319 = vector.extract_strided_slice %317 {offsets = [0, 1], sizes = [8, 1], strides = [1, 1]} : vector<8x2xf32> to vector<8x1xf32>
    %cst_123 = arith.constant 0.000000e+00 : f32
    %320 = vector.broadcast %cst_123 : f32 to vector<8x1xf32>
    %321 = arith.maximumf %319, %320 : vector<8x1xf32>
    %322 = math.absf %319 : vector<8x1xf32>
    %cst_124 = arith.constant 0.000000e+00 : f32
    %323 = vector.broadcast %cst_124 : f32 to vector<8x1xf32>
    %324 = arith.subf %323, %322 : vector<8x1xf32>
    %325 = math.exp %324 : vector<8x1xf32>
    %cst_125 = arith.constant 1.000000e+00 : f32
    %326 = vector.broadcast %cst_125 : f32 to vector<8x1xf32>
    %327 = arith.addf %326, %325 : vector<8x1xf32>
    %328 = math.log %327 : vector<8x1xf32>
    %329 = arith.addf %321, %328 : vector<8x1xf32>
    %cst_126 = arith.constant 9.99999997E-7 : f32
    %330 = vector.broadcast %cst_126 : f32 to vector<8x1xf32>
    %331 = arith.addf %329, %330 : vector<8x1xf32>
    %c3_127 = arith.constant 3 : index
    %c0_128 = arith.constant 0 : index
    %c0_129 = arith.constant 0 : index
    %332 = vector.load %arg2[%c3_127, %c0_128, %c0_129] : memref<12x8x1xf32, #tpu.memory_space<vmem>>, vector<1x8x1xf32>
    %333 = vector.shape_cast %332 : vector<1x8x1xf32> to vector<8x1xf32>
    %334 = arith.mulf %331, %333 : vector<8x1xf32>
    %335 = arith.addf %318, %334 : vector<8x1xf32>
    %c4 = arith.constant 4 : index
    %c0_130 = arith.constant 0 : index
    %c0_131 = arith.constant 0 : index
    %336 = vector.load %arg1[%c4, %c0_130, %c0_131] : memref<8x8x1xf32, #tpu.memory_space<vmem>>, vector<1x8x1xf32>
    %337 = vector.shape_cast %336 : vector<1x8x1xf32> to vector<8x1xf32>
    %c4_132 = arith.constant 4 : index
    %c0_133 = arith.constant 0 : index
    %c0_134 = arith.constant 0 : index
    %338 = vector.load %arg0[%c4_132, %c0_133, %c0_134] : memref<12x8x128xf32, #tpu.memory_space<vmem>>, vector<1x8x128xf32>
    %339 = vector.shape_cast %338 : vector<1x8x128xf32> to vector<8x128xf32>
    %340 = vector.broadcast %337 : vector<8x1xf32> to vector<8x128xf32>
    %341 = vector.broadcast %0 : vector<1x128xf32> to vector<8x128xf32>
    %342 = arith.mulf %340, %341 : vector<8x128xf32>
    %343 = arith.addf %339, %342 : vector<8x128xf32>
    %cst_135 = arith.constant dense<0.000000e+00> : vector<8x128xf32>
    %344 = tpu.matmul %285, %1, %cst_135 {dimension_numbers = #tpu.dot_dimension_numbers<[1], [0], [0], [1], [0, 0, 1, 1], [], []>} : vector<8x32xf32>, vector<32x128xf32>, vector<8x128xf32> -> vector<8x128xf32>
    %345 = arith.addf %343, %344 : vector<8x128xf32>
    %346 = math.tanh %345 : vector<8x128xf32>
    %347 = vector.extract_strided_slice %346 {offsets = [0, 0], sizes = [8, 32], strides = [1, 1]} : vector<8x128xf32> to vector<8x32xf32>
    %cst_136 = arith.constant 5.000000e-01 : f32
    %348 = vector.broadcast %cst_136 : f32 to vector<8x32xf32>
    %349 = arith.mulf %348, %347 : vector<8x32xf32>
    %cst_137 = arith.constant 5.000000e-01 : f32
    %350 = vector.broadcast %cst_137 : f32 to vector<8x32xf32>
    %351 = arith.addf %349, %350 : vector<8x32xf32>
    %352 = vector.extract_strided_slice %346 {offsets = [0, 32], sizes = [8, 32], strides = [1, 1]} : vector<8x128xf32> to vector<8x32xf32>
    %cst_138 = arith.constant 5.000000e-01 : f32
    %353 = vector.broadcast %cst_138 : f32 to vector<8x32xf32>
    %354 = arith.mulf %353, %352 : vector<8x32xf32>
    %cst_139 = arith.constant 5.000000e-01 : f32
    %355 = vector.broadcast %cst_139 : f32 to vector<8x32xf32>
    %356 = arith.addf %354, %355 : vector<8x32xf32>
    %357 = vector.extract_strided_slice %346 {offsets = [0, 64], sizes = [8, 32], strides = [1, 1]} : vector<8x128xf32> to vector<8x32xf32>
    %358 = vector.extract_strided_slice %346 {offsets = [0, 96], sizes = [8, 32], strides = [1, 1]} : vector<8x128xf32> to vector<8x32xf32>
    %cst_140 = arith.constant 5.000000e-01 : f32
    %359 = vector.broadcast %cst_140 : f32 to vector<8x32xf32>
    %360 = arith.mulf %359, %358 : vector<8x32xf32>
    %cst_141 = arith.constant 5.000000e-01 : f32
    %361 = vector.broadcast %cst_141 : f32 to vector<8x32xf32>
    %362 = arith.addf %360, %361 : vector<8x32xf32>
    %363 = arith.mulf %356, %283 : vector<8x32xf32>
    %364 = arith.mulf %351, %357 : vector<8x32xf32>
    %365 = arith.addf %363, %364 : vector<8x32xf32>
    %366 = math.tanh %365 : vector<8x32xf32>
    %367 = arith.mulf %362, %366 : vector<8x32xf32>
    %cst_142 = arith.constant dense<0.000000e+00> : vector<8x128xf32>
    %368 = tpu.matmul %312, %3, %cst_142 {dimension_numbers = #tpu.dot_dimension_numbers<[1], [0], [0], [1], [0, 0, 1, 1], [], []>} : vector<8x32xf32>, vector<32x128xf32>, vector<8x128xf32> -> vector<8x128xf32>
    %cst_143 = arith.constant dense<0.000000e+00> : vector<8x128xf32>
    %369 = tpu.matmul %367, %2, %cst_143 {dimension_numbers = #tpu.dot_dimension_numbers<[1], [0], [0], [1], [0, 0, 1, 1], [], []>} : vector<8x32xf32>, vector<32x128xf32>, vector<8x128xf32> -> vector<8x128xf32>
    %370 = arith.addf %368, %369 : vector<8x128xf32>
    %371 = vector.broadcast %4 : vector<1x128xf32> to vector<8x128xf32>
    %372 = arith.addf %370, %371 : vector<8x128xf32>
    %373 = math.tanh %372 : vector<8x128xf32>
    %374 = vector.extract_strided_slice %373 {offsets = [0, 0], sizes = [8, 32], strides = [1, 1]} : vector<8x128xf32> to vector<8x32xf32>
    %cst_144 = arith.constant 5.000000e-01 : f32
    %375 = vector.broadcast %cst_144 : f32 to vector<8x32xf32>
    %376 = arith.mulf %375, %374 : vector<8x32xf32>
    %cst_145 = arith.constant 5.000000e-01 : f32
    %377 = vector.broadcast %cst_145 : f32 to vector<8x32xf32>
    %378 = arith.addf %376, %377 : vector<8x32xf32>
    %379 = vector.extract_strided_slice %373 {offsets = [0, 32], sizes = [8, 32], strides = [1, 1]} : vector<8x128xf32> to vector<8x32xf32>
    %cst_146 = arith.constant 5.000000e-01 : f32
    %380 = vector.broadcast %cst_146 : f32 to vector<8x32xf32>
    %381 = arith.mulf %380, %379 : vector<8x32xf32>
    %cst_147 = arith.constant 5.000000e-01 : f32
    %382 = vector.broadcast %cst_147 : f32 to vector<8x32xf32>
    %383 = arith.addf %381, %382 : vector<8x32xf32>
    %384 = vector.extract_strided_slice %373 {offsets = [0, 64], sizes = [8, 32], strides = [1, 1]} : vector<8x128xf32> to vector<8x32xf32>
    %385 = vector.extract_strided_slice %373 {offsets = [0, 96], sizes = [8, 32], strides = [1, 1]} : vector<8x128xf32> to vector<8x32xf32>
    %cst_148 = arith.constant 5.000000e-01 : f32
    %386 = vector.broadcast %cst_148 : f32 to vector<8x32xf32>
    %387 = arith.mulf %386, %385 : vector<8x32xf32>
    %cst_149 = arith.constant 5.000000e-01 : f32
    %388 = vector.broadcast %cst_149 : f32 to vector<8x32xf32>
    %389 = arith.addf %387, %388 : vector<8x32xf32>
    %390 = arith.mulf %383, %310 : vector<8x32xf32>
    %391 = arith.mulf %378, %384 : vector<8x32xf32>
    %392 = arith.addf %390, %391 : vector<8x32xf32>
    %393 = math.tanh %392 : vector<8x32xf32>
    %394 = arith.mulf %389, %393 : vector<8x32xf32>
    %cst_150 = arith.constant 0.000000e+00 : f32
    %395 = vector.broadcast %cst_150 : f32 to vector<8x32xf32>
    %396 = arith.maximumf %394, %395 : vector<8x32xf32>
    %cst_151 = arith.constant dense<0.000000e+00> : vector<8x2xf32>
    %397 = tpu.matmul %396, %5, %cst_151 {dimension_numbers = #tpu.dot_dimension_numbers<[1], [0], [0], [1], [0, 0, 1, 1], [], []>} : vector<8x32xf32>, vector<32x2xf32>, vector<8x2xf32> -> vector<8x2xf32>
    %398 = vector.broadcast %6 : vector<1x2xf32> to vector<8x2xf32>
    %399 = arith.addf %397, %398 : vector<8x2xf32>
    %400 = vector.extract_strided_slice %399 {offsets = [0, 0], sizes = [8, 1], strides = [1, 1]} : vector<8x2xf32> to vector<8x1xf32>
    %401 = vector.extract_strided_slice %399 {offsets = [0, 1], sizes = [8, 1], strides = [1, 1]} : vector<8x2xf32> to vector<8x1xf32>
    %cst_152 = arith.constant 0.000000e+00 : f32
    %402 = vector.broadcast %cst_152 : f32 to vector<8x1xf32>
    %403 = arith.maximumf %401, %402 : vector<8x1xf32>
    %404 = math.absf %401 : vector<8x1xf32>
    %cst_153 = arith.constant 0.000000e+00 : f32
    %405 = vector.broadcast %cst_153 : f32 to vector<8x1xf32>
    %406 = arith.subf %405, %404 : vector<8x1xf32>
    %407 = math.exp %406 : vector<8x1xf32>
    %cst_154 = arith.constant 1.000000e+00 : f32
    %408 = vector.broadcast %cst_154 : f32 to vector<8x1xf32>
    %409 = arith.addf %408, %407 : vector<8x1xf32>
    %410 = math.log %409 : vector<8x1xf32>
    %411 = arith.addf %403, %410 : vector<8x1xf32>
    %cst_155 = arith.constant 9.99999997E-7 : f32
    %412 = vector.broadcast %cst_155 : f32 to vector<8x1xf32>
    %413 = arith.addf %411, %412 : vector<8x1xf32>
    %c4_156 = arith.constant 4 : index
    %c0_157 = arith.constant 0 : index
    %c0_158 = arith.constant 0 : index
    %414 = vector.load %arg2[%c4_156, %c0_157, %c0_158] : memref<12x8x1xf32, #tpu.memory_space<vmem>>, vector<1x8x1xf32>
    %415 = vector.shape_cast %414 : vector<1x8x1xf32> to vector<8x1xf32>
    %416 = arith.mulf %413, %415 : vector<8x1xf32>
    %417 = arith.addf %400, %416 : vector<8x1xf32>
    %c5 = arith.constant 5 : index
    %c0_159 = arith.constant 0 : index
    %c0_160 = arith.constant 0 : index
    %418 = vector.load %arg1[%c5, %c0_159, %c0_160] : memref<8x8x1xf32, #tpu.memory_space<vmem>>, vector<1x8x1xf32>
    %419 = vector.shape_cast %418 : vector<1x8x1xf32> to vector<8x1xf32>
    %c5_161 = arith.constant 5 : index
    %c0_162 = arith.constant 0 : index
    %c0_163 = arith.constant 0 : index
    %420 = vector.load %arg0[%c5_161, %c0_162, %c0_163] : memref<12x8x128xf32, #tpu.memory_space<vmem>>, vector<1x8x128xf32>
    %421 = vector.shape_cast %420 : vector<1x8x128xf32> to vector<8x128xf32>
    %422 = vector.broadcast %419 : vector<8x1xf32> to vector<8x128xf32>
    %423 = vector.broadcast %0 : vector<1x128xf32> to vector<8x128xf32>
    %424 = arith.mulf %422, %423 : vector<8x128xf32>
    %425 = arith.addf %421, %424 : vector<8x128xf32>
    %cst_164 = arith.constant dense<0.000000e+00> : vector<8x128xf32>
    %426 = tpu.matmul %367, %1, %cst_164 {dimension_numbers = #tpu.dot_dimension_numbers<[1], [0], [0], [1], [0, 0, 1, 1], [], []>} : vector<8x32xf32>, vector<32x128xf32>, vector<8x128xf32> -> vector<8x128xf32>
    %427 = arith.addf %425, %426 : vector<8x128xf32>
    %428 = math.tanh %427 : vector<8x128xf32>
    %429 = vector.extract_strided_slice %428 {offsets = [0, 0], sizes = [8, 32], strides = [1, 1]} : vector<8x128xf32> to vector<8x32xf32>
    %cst_165 = arith.constant 5.000000e-01 : f32
    %430 = vector.broadcast %cst_165 : f32 to vector<8x32xf32>
    %431 = arith.mulf %430, %429 : vector<8x32xf32>
    %cst_166 = arith.constant 5.000000e-01 : f32
    %432 = vector.broadcast %cst_166 : f32 to vector<8x32xf32>
    %433 = arith.addf %431, %432 : vector<8x32xf32>
    %434 = vector.extract_strided_slice %428 {offsets = [0, 32], sizes = [8, 32], strides = [1, 1]} : vector<8x128xf32> to vector<8x32xf32>
    %cst_167 = arith.constant 5.000000e-01 : f32
    %435 = vector.broadcast %cst_167 : f32 to vector<8x32xf32>
    %436 = arith.mulf %435, %434 : vector<8x32xf32>
    %cst_168 = arith.constant 5.000000e-01 : f32
    %437 = vector.broadcast %cst_168 : f32 to vector<8x32xf32>
    %438 = arith.addf %436, %437 : vector<8x32xf32>
    %439 = vector.extract_strided_slice %428 {offsets = [0, 64], sizes = [8, 32], strides = [1, 1]} : vector<8x128xf32> to vector<8x32xf32>
    %440 = vector.extract_strided_slice %428 {offsets = [0, 96], sizes = [8, 32], strides = [1, 1]} : vector<8x128xf32> to vector<8x32xf32>
    %cst_169 = arith.constant 5.000000e-01 : f32
    %441 = vector.broadcast %cst_169 : f32 to vector<8x32xf32>
    %442 = arith.mulf %441, %440 : vector<8x32xf32>
    %cst_170 = arith.constant 5.000000e-01 : f32
    %443 = vector.broadcast %cst_170 : f32 to vector<8x32xf32>
    %444 = arith.addf %442, %443 : vector<8x32xf32>
    %445 = arith.mulf %438, %365 : vector<8x32xf32>
    %446 = arith.mulf %433, %439 : vector<8x32xf32>
    %447 = arith.addf %445, %446 : vector<8x32xf32>
    %448 = math.tanh %447 : vector<8x32xf32>
    %449 = arith.mulf %444, %448 : vector<8x32xf32>
    %cst_171 = arith.constant dense<0.000000e+00> : vector<8x128xf32>
    %450 = tpu.matmul %394, %3, %cst_171 {dimension_numbers = #tpu.dot_dimension_numbers<[1], [0], [0], [1], [0, 0, 1, 1], [], []>} : vector<8x32xf32>, vector<32x128xf32>, vector<8x128xf32> -> vector<8x128xf32>
    %cst_172 = arith.constant dense<0.000000e+00> : vector<8x128xf32>
    %451 = tpu.matmul %449, %2, %cst_172 {dimension_numbers = #tpu.dot_dimension_numbers<[1], [0], [0], [1], [0, 0, 1, 1], [], []>} : vector<8x32xf32>, vector<32x128xf32>, vector<8x128xf32> -> vector<8x128xf32>
    %452 = arith.addf %450, %451 : vector<8x128xf32>
    %453 = vector.broadcast %4 : vector<1x128xf32> to vector<8x128xf32>
    %454 = arith.addf %452, %453 : vector<8x128xf32>
    %455 = math.tanh %454 : vector<8x128xf32>
    %456 = vector.extract_strided_slice %455 {offsets = [0, 0], sizes = [8, 32], strides = [1, 1]} : vector<8x128xf32> to vector<8x32xf32>
    %cst_173 = arith.constant 5.000000e-01 : f32
    %457 = vector.broadcast %cst_173 : f32 to vector<8x32xf32>
    %458 = arith.mulf %457, %456 : vector<8x32xf32>
    %cst_174 = arith.constant 5.000000e-01 : f32
    %459 = vector.broadcast %cst_174 : f32 to vector<8x32xf32>
    %460 = arith.addf %458, %459 : vector<8x32xf32>
    %461 = vector.extract_strided_slice %455 {offsets = [0, 32], sizes = [8, 32], strides = [1, 1]} : vector<8x128xf32> to vector<8x32xf32>
    %cst_175 = arith.constant 5.000000e-01 : f32
    %462 = vector.broadcast %cst_175 : f32 to vector<8x32xf32>
    %463 = arith.mulf %462, %461 : vector<8x32xf32>
    %cst_176 = arith.constant 5.000000e-01 : f32
    %464 = vector.broadcast %cst_176 : f32 to vector<8x32xf32>
    %465 = arith.addf %463, %464 : vector<8x32xf32>
    %466 = vector.extract_strided_slice %455 {offsets = [0, 64], sizes = [8, 32], strides = [1, 1]} : vector<8x128xf32> to vector<8x32xf32>
    %467 = vector.extract_strided_slice %455 {offsets = [0, 96], sizes = [8, 32], strides = [1, 1]} : vector<8x128xf32> to vector<8x32xf32>
    %cst_177 = arith.constant 5.000000e-01 : f32
    %468 = vector.broadcast %cst_177 : f32 to vector<8x32xf32>
    %469 = arith.mulf %468, %467 : vector<8x32xf32>
    %cst_178 = arith.constant 5.000000e-01 : f32
    %470 = vector.broadcast %cst_178 : f32 to vector<8x32xf32>
    %471 = arith.addf %469, %470 : vector<8x32xf32>
    %472 = arith.mulf %465, %392 : vector<8x32xf32>
    %473 = arith.mulf %460, %466 : vector<8x32xf32>
    %474 = arith.addf %472, %473 : vector<8x32xf32>
    %475 = math.tanh %474 : vector<8x32xf32>
    %476 = arith.mulf %471, %475 : vector<8x32xf32>
    %cst_179 = arith.constant 0.000000e+00 : f32
    %477 = vector.broadcast %cst_179 : f32 to vector<8x32xf32>
    %478 = arith.maximumf %476, %477 : vector<8x32xf32>
    %cst_180 = arith.constant dense<0.000000e+00> : vector<8x2xf32>
    %479 = tpu.matmul %478, %5, %cst_180 {dimension_numbers = #tpu.dot_dimension_numbers<[1], [0], [0], [1], [0, 0, 1, 1], [], []>} : vector<8x32xf32>, vector<32x2xf32>, vector<8x2xf32> -> vector<8x2xf32>
    %480 = vector.broadcast %6 : vector<1x2xf32> to vector<8x2xf32>
    %481 = arith.addf %479, %480 : vector<8x2xf32>
    %482 = vector.extract_strided_slice %481 {offsets = [0, 0], sizes = [8, 1], strides = [1, 1]} : vector<8x2xf32> to vector<8x1xf32>
    %483 = vector.extract_strided_slice %481 {offsets = [0, 1], sizes = [8, 1], strides = [1, 1]} : vector<8x2xf32> to vector<8x1xf32>
    %cst_181 = arith.constant 0.000000e+00 : f32
    %484 = vector.broadcast %cst_181 : f32 to vector<8x1xf32>
    %485 = arith.maximumf %483, %484 : vector<8x1xf32>
    %486 = math.absf %483 : vector<8x1xf32>
    %cst_182 = arith.constant 0.000000e+00 : f32
    %487 = vector.broadcast %cst_182 : f32 to vector<8x1xf32>
    %488 = arith.subf %487, %486 : vector<8x1xf32>
    %489 = math.exp %488 : vector<8x1xf32>
    %cst_183 = arith.constant 1.000000e+00 : f32
    %490 = vector.broadcast %cst_183 : f32 to vector<8x1xf32>
    %491 = arith.addf %490, %489 : vector<8x1xf32>
    %492 = math.log %491 : vector<8x1xf32>
    %493 = arith.addf %485, %492 : vector<8x1xf32>
    %cst_184 = arith.constant 9.99999997E-7 : f32
    %494 = vector.broadcast %cst_184 : f32 to vector<8x1xf32>
    %495 = arith.addf %493, %494 : vector<8x1xf32>
    %c5_185 = arith.constant 5 : index
    %c0_186 = arith.constant 0 : index
    %c0_187 = arith.constant 0 : index
    %496 = vector.load %arg2[%c5_185, %c0_186, %c0_187] : memref<12x8x1xf32, #tpu.memory_space<vmem>>, vector<1x8x1xf32>
    %497 = vector.shape_cast %496 : vector<1x8x1xf32> to vector<8x1xf32>
    %498 = arith.mulf %495, %497 : vector<8x1xf32>
    %499 = arith.addf %482, %498 : vector<8x1xf32>
    %c6 = arith.constant 6 : index
    %c0_188 = arith.constant 0 : index
    %c0_189 = arith.constant 0 : index
    %500 = vector.load %arg1[%c6, %c0_188, %c0_189] : memref<8x8x1xf32, #tpu.memory_space<vmem>>, vector<1x8x1xf32>
    %501 = vector.shape_cast %500 : vector<1x8x1xf32> to vector<8x1xf32>
    %c6_190 = arith.constant 6 : index
    %c0_191 = arith.constant 0 : index
    %c0_192 = arith.constant 0 : index
    %502 = vector.load %arg0[%c6_190, %c0_191, %c0_192] : memref<12x8x128xf32, #tpu.memory_space<vmem>>, vector<1x8x128xf32>
    %503 = vector.shape_cast %502 : vector<1x8x128xf32> to vector<8x128xf32>
    %504 = vector.broadcast %501 : vector<8x1xf32> to vector<8x128xf32>
    %505 = vector.broadcast %0 : vector<1x128xf32> to vector<8x128xf32>
    %506 = arith.mulf %504, %505 : vector<8x128xf32>
    %507 = arith.addf %503, %506 : vector<8x128xf32>
    %cst_193 = arith.constant dense<0.000000e+00> : vector<8x128xf32>
    %508 = tpu.matmul %449, %1, %cst_193 {dimension_numbers = #tpu.dot_dimension_numbers<[1], [0], [0], [1], [0, 0, 1, 1], [], []>} : vector<8x32xf32>, vector<32x128xf32>, vector<8x128xf32> -> vector<8x128xf32>
    %509 = arith.addf %507, %508 : vector<8x128xf32>
    %510 = math.tanh %509 : vector<8x128xf32>
    %511 = vector.extract_strided_slice %510 {offsets = [0, 0], sizes = [8, 32], strides = [1, 1]} : vector<8x128xf32> to vector<8x32xf32>
    %cst_194 = arith.constant 5.000000e-01 : f32
    %512 = vector.broadcast %cst_194 : f32 to vector<8x32xf32>
    %513 = arith.mulf %512, %511 : vector<8x32xf32>
    %cst_195 = arith.constant 5.000000e-01 : f32
    %514 = vector.broadcast %cst_195 : f32 to vector<8x32xf32>
    %515 = arith.addf %513, %514 : vector<8x32xf32>
    %516 = vector.extract_strided_slice %510 {offsets = [0, 32], sizes = [8, 32], strides = [1, 1]} : vector<8x128xf32> to vector<8x32xf32>
    %cst_196 = arith.constant 5.000000e-01 : f32
    %517 = vector.broadcast %cst_196 : f32 to vector<8x32xf32>
    %518 = arith.mulf %517, %516 : vector<8x32xf32>
    %cst_197 = arith.constant 5.000000e-01 : f32
    %519 = vector.broadcast %cst_197 : f32 to vector<8x32xf32>
    %520 = arith.addf %518, %519 : vector<8x32xf32>
    %521 = vector.extract_strided_slice %510 {offsets = [0, 64], sizes = [8, 32], strides = [1, 1]} : vector<8x128xf32> to vector<8x32xf32>
    %522 = vector.extract_strided_slice %510 {offsets = [0, 96], sizes = [8, 32], strides = [1, 1]} : vector<8x128xf32> to vector<8x32xf32>
    %cst_198 = arith.constant 5.000000e-01 : f32
    %523 = vector.broadcast %cst_198 : f32 to vector<8x32xf32>
    %524 = arith.mulf %523, %522 : vector<8x32xf32>
    %cst_199 = arith.constant 5.000000e-01 : f32
    %525 = vector.broadcast %cst_199 : f32 to vector<8x32xf32>
    %526 = arith.addf %524, %525 : vector<8x32xf32>
    %527 = arith.mulf %520, %447 : vector<8x32xf32>
    %528 = arith.mulf %515, %521 : vector<8x32xf32>
    %529 = arith.addf %527, %528 : vector<8x32xf32>
    %530 = math.tanh %529 : vector<8x32xf32>
    %531 = arith.mulf %526, %530 : vector<8x32xf32>
    %cst_200 = arith.constant dense<0.000000e+00> : vector<8x128xf32>
    %532 = tpu.matmul %476, %3, %cst_200 {dimension_numbers = #tpu.dot_dimension_numbers<[1], [0], [0], [1], [0, 0, 1, 1], [], []>} : vector<8x32xf32>, vector<32x128xf32>, vector<8x128xf32> -> vector<8x128xf32>
    %cst_201 = arith.constant dense<0.000000e+00> : vector<8x128xf32>
    %533 = tpu.matmul %531, %2, %cst_201 {dimension_numbers = #tpu.dot_dimension_numbers<[1], [0], [0], [1], [0, 0, 1, 1], [], []>} : vector<8x32xf32>, vector<32x128xf32>, vector<8x128xf32> -> vector<8x128xf32>
    %534 = arith.addf %532, %533 : vector<8x128xf32>
    %535 = vector.broadcast %4 : vector<1x128xf32> to vector<8x128xf32>
    %536 = arith.addf %534, %535 : vector<8x128xf32>
    %537 = math.tanh %536 : vector<8x128xf32>
    %538 = vector.extract_strided_slice %537 {offsets = [0, 0], sizes = [8, 32], strides = [1, 1]} : vector<8x128xf32> to vector<8x32xf32>
    %cst_202 = arith.constant 5.000000e-01 : f32
    %539 = vector.broadcast %cst_202 : f32 to vector<8x32xf32>
    %540 = arith.mulf %539, %538 : vector<8x32xf32>
    %cst_203 = arith.constant 5.000000e-01 : f32
    %541 = vector.broadcast %cst_203 : f32 to vector<8x32xf32>
    %542 = arith.addf %540, %541 : vector<8x32xf32>
    %543 = vector.extract_strided_slice %537 {offsets = [0, 32], sizes = [8, 32], strides = [1, 1]} : vector<8x128xf32> to vector<8x32xf32>
    %cst_204 = arith.constant 5.000000e-01 : f32
    %544 = vector.broadcast %cst_204 : f32 to vector<8x32xf32>
    %545 = arith.mulf %544, %543 : vector<8x32xf32>
    %cst_205 = arith.constant 5.000000e-01 : f32
    %546 = vector.broadcast %cst_205 : f32 to vector<8x32xf32>
    %547 = arith.addf %545, %546 : vector<8x32xf32>
    %548 = vector.extract_strided_slice %537 {offsets = [0, 64], sizes = [8, 32], strides = [1, 1]} : vector<8x128xf32> to vector<8x32xf32>
    %549 = vector.extract_strided_slice %537 {offsets = [0, 96], sizes = [8, 32], strides = [1, 1]} : vector<8x128xf32> to vector<8x32xf32>
    %cst_206 = arith.constant 5.000000e-01 : f32
    %550 = vector.broadcast %cst_206 : f32 to vector<8x32xf32>
    %551 = arith.mulf %550, %549 : vector<8x32xf32>
    %cst_207 = arith.constant 5.000000e-01 : f32
    %552 = vector.broadcast %cst_207 : f32 to vector<8x32xf32>
    %553 = arith.addf %551, %552 : vector<8x32xf32>
    %554 = arith.mulf %547, %474 : vector<8x32xf32>
    %555 = arith.mulf %542, %548 : vector<8x32xf32>
    %556 = arith.addf %554, %555 : vector<8x32xf32>
    %557 = math.tanh %556 : vector<8x32xf32>
    %558 = arith.mulf %553, %557 : vector<8x32xf32>
    %cst_208 = arith.constant 0.000000e+00 : f32
    %559 = vector.broadcast %cst_208 : f32 to vector<8x32xf32>
    %560 = arith.maximumf %558, %559 : vector<8x32xf32>
    %cst_209 = arith.constant dense<0.000000e+00> : vector<8x2xf32>
    %561 = tpu.matmul %560, %5, %cst_209 {dimension_numbers = #tpu.dot_dimension_numbers<[1], [0], [0], [1], [0, 0, 1, 1], [], []>} : vector<8x32xf32>, vector<32x2xf32>, vector<8x2xf32> -> vector<8x2xf32>
    %562 = vector.broadcast %6 : vector<1x2xf32> to vector<8x2xf32>
    %563 = arith.addf %561, %562 : vector<8x2xf32>
    %564 = vector.extract_strided_slice %563 {offsets = [0, 0], sizes = [8, 1], strides = [1, 1]} : vector<8x2xf32> to vector<8x1xf32>
    %565 = vector.extract_strided_slice %563 {offsets = [0, 1], sizes = [8, 1], strides = [1, 1]} : vector<8x2xf32> to vector<8x1xf32>
    %cst_210 = arith.constant 0.000000e+00 : f32
    %566 = vector.broadcast %cst_210 : f32 to vector<8x1xf32>
    %567 = arith.maximumf %565, %566 : vector<8x1xf32>
    %568 = math.absf %565 : vector<8x1xf32>
    %cst_211 = arith.constant 0.000000e+00 : f32
    %569 = vector.broadcast %cst_211 : f32 to vector<8x1xf32>
    %570 = arith.subf %569, %568 : vector<8x1xf32>
    %571 = math.exp %570 : vector<8x1xf32>
    %cst_212 = arith.constant 1.000000e+00 : f32
    %572 = vector.broadcast %cst_212 : f32 to vector<8x1xf32>
    %573 = arith.addf %572, %571 : vector<8x1xf32>
    %574 = math.log %573 : vector<8x1xf32>
    %575 = arith.addf %567, %574 : vector<8x1xf32>
    %cst_213 = arith.constant 9.99999997E-7 : f32
    %576 = vector.broadcast %cst_213 : f32 to vector<8x1xf32>
    %577 = arith.addf %575, %576 : vector<8x1xf32>
    %c6_214 = arith.constant 6 : index
    %c0_215 = arith.constant 0 : index
    %c0_216 = arith.constant 0 : index
    %578 = vector.load %arg2[%c6_214, %c0_215, %c0_216] : memref<12x8x1xf32, #tpu.memory_space<vmem>>, vector<1x8x1xf32>
    %579 = vector.shape_cast %578 : vector<1x8x1xf32> to vector<8x1xf32>
    %580 = arith.mulf %577, %579 : vector<8x1xf32>
    %581 = arith.addf %564, %580 : vector<8x1xf32>
    %c7 = arith.constant 7 : index
    %c0_217 = arith.constant 0 : index
    %c0_218 = arith.constant 0 : index
    %582 = vector.load %arg1[%c7, %c0_217, %c0_218] : memref<8x8x1xf32, #tpu.memory_space<vmem>>, vector<1x8x1xf32>
    %583 = vector.shape_cast %582 : vector<1x8x1xf32> to vector<8x1xf32>
    %c7_219 = arith.constant 7 : index
    %c0_220 = arith.constant 0 : index
    %c0_221 = arith.constant 0 : index
    %584 = vector.load %arg0[%c7_219, %c0_220, %c0_221] : memref<12x8x128xf32, #tpu.memory_space<vmem>>, vector<1x8x128xf32>
    %585 = vector.shape_cast %584 : vector<1x8x128xf32> to vector<8x128xf32>
    %586 = vector.broadcast %583 : vector<8x1xf32> to vector<8x128xf32>
    %587 = vector.broadcast %0 : vector<1x128xf32> to vector<8x128xf32>
    %588 = arith.mulf %586, %587 : vector<8x128xf32>
    %589 = arith.addf %585, %588 : vector<8x128xf32>
    %cst_222 = arith.constant dense<0.000000e+00> : vector<8x128xf32>
    %590 = tpu.matmul %531, %1, %cst_222 {dimension_numbers = #tpu.dot_dimension_numbers<[1], [0], [0], [1], [0, 0, 1, 1], [], []>} : vector<8x32xf32>, vector<32x128xf32>, vector<8x128xf32> -> vector<8x128xf32>
    %591 = arith.addf %589, %590 : vector<8x128xf32>
    %592 = math.tanh %591 : vector<8x128xf32>
    %593 = vector.extract_strided_slice %592 {offsets = [0, 0], sizes = [8, 32], strides = [1, 1]} : vector<8x128xf32> to vector<8x32xf32>
    %cst_223 = arith.constant 5.000000e-01 : f32
    %594 = vector.broadcast %cst_223 : f32 to vector<8x32xf32>
    %595 = arith.mulf %594, %593 : vector<8x32xf32>
    %cst_224 = arith.constant 5.000000e-01 : f32
    %596 = vector.broadcast %cst_224 : f32 to vector<8x32xf32>
    %597 = arith.addf %595, %596 : vector<8x32xf32>
    %598 = vector.extract_strided_slice %592 {offsets = [0, 32], sizes = [8, 32], strides = [1, 1]} : vector<8x128xf32> to vector<8x32xf32>
    %cst_225 = arith.constant 5.000000e-01 : f32
    %599 = vector.broadcast %cst_225 : f32 to vector<8x32xf32>
    %600 = arith.mulf %599, %598 : vector<8x32xf32>
    %cst_226 = arith.constant 5.000000e-01 : f32
    %601 = vector.broadcast %cst_226 : f32 to vector<8x32xf32>
    %602 = arith.addf %600, %601 : vector<8x32xf32>
    %603 = vector.extract_strided_slice %592 {offsets = [0, 64], sizes = [8, 32], strides = [1, 1]} : vector<8x128xf32> to vector<8x32xf32>
    %604 = vector.extract_strided_slice %592 {offsets = [0, 96], sizes = [8, 32], strides = [1, 1]} : vector<8x128xf32> to vector<8x32xf32>
    %cst_227 = arith.constant 5.000000e-01 : f32
    %605 = vector.broadcast %cst_227 : f32 to vector<8x32xf32>
    %606 = arith.mulf %605, %604 : vector<8x32xf32>
    %cst_228 = arith.constant 5.000000e-01 : f32
    %607 = vector.broadcast %cst_228 : f32 to vector<8x32xf32>
    %608 = arith.addf %606, %607 : vector<8x32xf32>
    %609 = arith.mulf %602, %529 : vector<8x32xf32>
    %610 = arith.mulf %597, %603 : vector<8x32xf32>
    %611 = arith.addf %609, %610 : vector<8x32xf32>
    %612 = math.tanh %611 : vector<8x32xf32>
    %613 = arith.mulf %608, %612 : vector<8x32xf32>
    %cst_229 = arith.constant dense<0.000000e+00> : vector<8x128xf32>
    %614 = tpu.matmul %558, %3, %cst_229 {dimension_numbers = #tpu.dot_dimension_numbers<[1], [0], [0], [1], [0, 0, 1, 1], [], []>} : vector<8x32xf32>, vector<32x128xf32>, vector<8x128xf32> -> vector<8x128xf32>
    %cst_230 = arith.constant dense<0.000000e+00> : vector<8x128xf32>
    %615 = tpu.matmul %613, %2, %cst_230 {dimension_numbers = #tpu.dot_dimension_numbers<[1], [0], [0], [1], [0, 0, 1, 1], [], []>} : vector<8x32xf32>, vector<32x128xf32>, vector<8x128xf32> -> vector<8x128xf32>
    %616 = arith.addf %614, %615 : vector<8x128xf32>
    %617 = vector.broadcast %4 : vector<1x128xf32> to vector<8x128xf32>
    %618 = arith.addf %616, %617 : vector<8x128xf32>
    %619 = math.tanh %618 : vector<8x128xf32>
    %620 = vector.extract_strided_slice %619 {offsets = [0, 0], sizes = [8, 32], strides = [1, 1]} : vector<8x128xf32> to vector<8x32xf32>
    %cst_231 = arith.constant 5.000000e-01 : f32
    %621 = vector.broadcast %cst_231 : f32 to vector<8x32xf32>
    %622 = arith.mulf %621, %620 : vector<8x32xf32>
    %cst_232 = arith.constant 5.000000e-01 : f32
    %623 = vector.broadcast %cst_232 : f32 to vector<8x32xf32>
    %624 = arith.addf %622, %623 : vector<8x32xf32>
    %625 = vector.extract_strided_slice %619 {offsets = [0, 32], sizes = [8, 32], strides = [1, 1]} : vector<8x128xf32> to vector<8x32xf32>
    %cst_233 = arith.constant 5.000000e-01 : f32
    %626 = vector.broadcast %cst_233 : f32 to vector<8x32xf32>
    %627 = arith.mulf %626, %625 : vector<8x32xf32>
    %cst_234 = arith.constant 5.000000e-01 : f32
    %628 = vector.broadcast %cst_234 : f32 to vector<8x32xf32>
    %629 = arith.addf %627, %628 : vector<8x32xf32>
    %630 = vector.extract_strided_slice %619 {offsets = [0, 64], sizes = [8, 32], strides = [1, 1]} : vector<8x128xf32> to vector<8x32xf32>
    %631 = vector.extract_strided_slice %619 {offsets = [0, 96], sizes = [8, 32], strides = [1, 1]} : vector<8x128xf32> to vector<8x32xf32>
    %cst_235 = arith.constant 5.000000e-01 : f32
    %632 = vector.broadcast %cst_235 : f32 to vector<8x32xf32>
    %633 = arith.mulf %632, %631 : vector<8x32xf32>
    %cst_236 = arith.constant 5.000000e-01 : f32
    %634 = vector.broadcast %cst_236 : f32 to vector<8x32xf32>
    %635 = arith.addf %633, %634 : vector<8x32xf32>
    %636 = arith.mulf %629, %556 : vector<8x32xf32>
    %637 = arith.mulf %624, %630 : vector<8x32xf32>
    %638 = arith.addf %636, %637 : vector<8x32xf32>
    %639 = math.tanh %638 : vector<8x32xf32>
    %640 = arith.mulf %635, %639 : vector<8x32xf32>
    %cst_237 = arith.constant 0.000000e+00 : f32
    %641 = vector.broadcast %cst_237 : f32 to vector<8x32xf32>
    %642 = arith.maximumf %640, %641 : vector<8x32xf32>
    %cst_238 = arith.constant dense<0.000000e+00> : vector<8x2xf32>
    %643 = tpu.matmul %642, %5, %cst_238 {dimension_numbers = #tpu.dot_dimension_numbers<[1], [0], [0], [1], [0, 0, 1, 1], [], []>} : vector<8x32xf32>, vector<32x2xf32>, vector<8x2xf32> -> vector<8x2xf32>
    %644 = vector.broadcast %6 : vector<1x2xf32> to vector<8x2xf32>
    %645 = arith.addf %643, %644 : vector<8x2xf32>
    %646 = vector.extract_strided_slice %645 {offsets = [0, 0], sizes = [8, 1], strides = [1, 1]} : vector<8x2xf32> to vector<8x1xf32>
    %647 = vector.extract_strided_slice %645 {offsets = [0, 1], sizes = [8, 1], strides = [1, 1]} : vector<8x2xf32> to vector<8x1xf32>
    %cst_239 = arith.constant 0.000000e+00 : f32
    %648 = vector.broadcast %cst_239 : f32 to vector<8x1xf32>
    %649 = arith.maximumf %647, %648 : vector<8x1xf32>
    %650 = math.absf %647 : vector<8x1xf32>
    %cst_240 = arith.constant 0.000000e+00 : f32
    %651 = vector.broadcast %cst_240 : f32 to vector<8x1xf32>
    %652 = arith.subf %651, %650 : vector<8x1xf32>
    %653 = math.exp %652 : vector<8x1xf32>
    %cst_241 = arith.constant 1.000000e+00 : f32
    %654 = vector.broadcast %cst_241 : f32 to vector<8x1xf32>
    %655 = arith.addf %654, %653 : vector<8x1xf32>
    %656 = math.log %655 : vector<8x1xf32>
    %657 = arith.addf %649, %656 : vector<8x1xf32>
    %cst_242 = arith.constant 9.99999997E-7 : f32
    %658 = vector.broadcast %cst_242 : f32 to vector<8x1xf32>
    %659 = arith.addf %657, %658 : vector<8x1xf32>
    %c7_243 = arith.constant 7 : index
    %c0_244 = arith.constant 0 : index
    %c0_245 = arith.constant 0 : index
    %660 = vector.load %arg2[%c7_243, %c0_244, %c0_245] : memref<12x8x1xf32, #tpu.memory_space<vmem>>, vector<1x8x1xf32>
    %661 = vector.shape_cast %660 : vector<1x8x1xf32> to vector<8x1xf32>
    %662 = arith.mulf %659, %661 : vector<8x1xf32>
    %663 = arith.addf %646, %662 : vector<8x1xf32>
    %c8 = arith.constant 8 : index
    %c0_246 = arith.constant 0 : index
    %c0_247 = arith.constant 0 : index
    %664 = vector.load %arg0[%c8, %c0_246, %c0_247] : memref<12x8x128xf32, #tpu.memory_space<vmem>>, vector<1x8x128xf32>
    %665 = vector.shape_cast %664 : vector<1x8x128xf32> to vector<8x128xf32>
    %666 = vector.broadcast %663 : vector<8x1xf32> to vector<8x128xf32>
    %667 = vector.broadcast %0 : vector<1x128xf32> to vector<8x128xf32>
    %668 = arith.mulf %666, %667 : vector<8x128xf32>
    %669 = arith.addf %665, %668 : vector<8x128xf32>
    %cst_248 = arith.constant dense<0.000000e+00> : vector<8x128xf32>
    %670 = tpu.matmul %613, %1, %cst_248 {dimension_numbers = #tpu.dot_dimension_numbers<[1], [0], [0], [1], [0, 0, 1, 1], [], []>} : vector<8x32xf32>, vector<32x128xf32>, vector<8x128xf32> -> vector<8x128xf32>
    %671 = arith.addf %669, %670 : vector<8x128xf32>
    %672 = math.tanh %671 : vector<8x128xf32>
    %673 = vector.extract_strided_slice %672 {offsets = [0, 0], sizes = [8, 32], strides = [1, 1]} : vector<8x128xf32> to vector<8x32xf32>
    %cst_249 = arith.constant 5.000000e-01 : f32
    %674 = vector.broadcast %cst_249 : f32 to vector<8x32xf32>
    %675 = arith.mulf %674, %673 : vector<8x32xf32>
    %cst_250 = arith.constant 5.000000e-01 : f32
    %676 = vector.broadcast %cst_250 : f32 to vector<8x32xf32>
    %677 = arith.addf %675, %676 : vector<8x32xf32>
    %678 = vector.extract_strided_slice %672 {offsets = [0, 32], sizes = [8, 32], strides = [1, 1]} : vector<8x128xf32> to vector<8x32xf32>
    %cst_251 = arith.constant 5.000000e-01 : f32
    %679 = vector.broadcast %cst_251 : f32 to vector<8x32xf32>
    %680 = arith.mulf %679, %678 : vector<8x32xf32>
    %cst_252 = arith.constant 5.000000e-01 : f32
    %681 = vector.broadcast %cst_252 : f32 to vector<8x32xf32>
    %682 = arith.addf %680, %681 : vector<8x32xf32>
    %683 = vector.extract_strided_slice %672 {offsets = [0, 64], sizes = [8, 32], strides = [1, 1]} : vector<8x128xf32> to vector<8x32xf32>
    %684 = vector.extract_strided_slice %672 {offsets = [0, 96], sizes = [8, 32], strides = [1, 1]} : vector<8x128xf32> to vector<8x32xf32>
    %cst_253 = arith.constant 5.000000e-01 : f32
    %685 = vector.broadcast %cst_253 : f32 to vector<8x32xf32>
    %686 = arith.mulf %685, %684 : vector<8x32xf32>
    %cst_254 = arith.constant 5.000000e-01 : f32
    %687 = vector.broadcast %cst_254 : f32 to vector<8x32xf32>
    %688 = arith.addf %686, %687 : vector<8x32xf32>
    %689 = arith.mulf %682, %611 : vector<8x32xf32>
    %690 = arith.mulf %677, %683 : vector<8x32xf32>
    %691 = arith.addf %689, %690 : vector<8x32xf32>
    %692 = math.tanh %691 : vector<8x32xf32>
    %693 = arith.mulf %688, %692 : vector<8x32xf32>
    %cst_255 = arith.constant dense<0.000000e+00> : vector<8x128xf32>
    %694 = tpu.matmul %640, %3, %cst_255 {dimension_numbers = #tpu.dot_dimension_numbers<[1], [0], [0], [1], [0, 0, 1, 1], [], []>} : vector<8x32xf32>, vector<32x128xf32>, vector<8x128xf32> -> vector<8x128xf32>
    %cst_256 = arith.constant dense<0.000000e+00> : vector<8x128xf32>
    %695 = tpu.matmul %693, %2, %cst_256 {dimension_numbers = #tpu.dot_dimension_numbers<[1], [0], [0], [1], [0, 0, 1, 1], [], []>} : vector<8x32xf32>, vector<32x128xf32>, vector<8x128xf32> -> vector<8x128xf32>
    %696 = arith.addf %694, %695 : vector<8x128xf32>
    %697 = vector.broadcast %4 : vector<1x128xf32> to vector<8x128xf32>
    %698 = arith.addf %696, %697 : vector<8x128xf32>
    %699 = math.tanh %698 : vector<8x128xf32>
    %700 = vector.extract_strided_slice %699 {offsets = [0, 0], sizes = [8, 32], strides = [1, 1]} : vector<8x128xf32> to vector<8x32xf32>
    %cst_257 = arith.constant 5.000000e-01 : f32
    %701 = vector.broadcast %cst_257 : f32 to vector<8x32xf32>
    %702 = arith.mulf %701, %700 : vector<8x32xf32>
    %cst_258 = arith.constant 5.000000e-01 : f32
    %703 = vector.broadcast %cst_258 : f32 to vector<8x32xf32>
    %704 = arith.addf %702, %703 : vector<8x32xf32>
    %705 = vector.extract_strided_slice %699 {offsets = [0, 32], sizes = [8, 32], strides = [1, 1]} : vector<8x128xf32> to vector<8x32xf32>
    %cst_259 = arith.constant 5.000000e-01 : f32
    %706 = vector.broadcast %cst_259 : f32 to vector<8x32xf32>
    %707 = arith.mulf %706, %705 : vector<8x32xf32>
    %cst_260 = arith.constant 5.000000e-01 : f32
    %708 = vector.broadcast %cst_260 : f32 to vector<8x32xf32>
    %709 = arith.addf %707, %708 : vector<8x32xf32>
    %710 = vector.extract_strided_slice %699 {offsets = [0, 64], sizes = [8, 32], strides = [1, 1]} : vector<8x128xf32> to vector<8x32xf32>
    %711 = vector.extract_strided_slice %699 {offsets = [0, 96], sizes = [8, 32], strides = [1, 1]} : vector<8x128xf32> to vector<8x32xf32>
    %cst_261 = arith.constant 5.000000e-01 : f32
    %712 = vector.broadcast %cst_261 : f32 to vector<8x32xf32>
    %713 = arith.mulf %712, %711 : vector<8x32xf32>
    %cst_262 = arith.constant 5.000000e-01 : f32
    %714 = vector.broadcast %cst_262 : f32 to vector<8x32xf32>
    %715 = arith.addf %713, %714 : vector<8x32xf32>
    %716 = arith.mulf %709, %638 : vector<8x32xf32>
    %717 = arith.mulf %704, %710 : vector<8x32xf32>
    %718 = arith.addf %716, %717 : vector<8x32xf32>
    %719 = math.tanh %718 : vector<8x32xf32>
    %720 = arith.mulf %715, %719 : vector<8x32xf32>
    %cst_263 = arith.constant 0.000000e+00 : f32
    %721 = vector.broadcast %cst_263 : f32 to vector<8x32xf32>
    %722 = arith.maximumf %720, %721 : vector<8x32xf32>
    %cst_264 = arith.constant dense<0.000000e+00> : vector<8x2xf32>
    %723 = tpu.matmul %722, %5, %cst_264 {dimension_numbers = #tpu.dot_dimension_numbers<[1], [0], [0], [1], [0, 0, 1, 1], [], []>} : vector<8x32xf32>, vector<32x2xf32>, vector<8x2xf32> -> vector<8x2xf32>
    %724 = vector.broadcast %6 : vector<1x2xf32> to vector<8x2xf32>
    %725 = arith.addf %723, %724 : vector<8x2xf32>
    %726 = vector.extract_strided_slice %725 {offsets = [0, 0], sizes = [8, 1], strides = [1, 1]} : vector<8x2xf32> to vector<8x1xf32>
    %727 = vector.extract_strided_slice %725 {offsets = [0, 1], sizes = [8, 1], strides = [1, 1]} : vector<8x2xf32> to vector<8x1xf32>
    %cst_265 = arith.constant 0.000000e+00 : f32
    %728 = vector.broadcast %cst_265 : f32 to vector<8x1xf32>
    %729 = arith.maximumf %727, %728 : vector<8x1xf32>
    %730 = math.absf %727 : vector<8x1xf32>
    %cst_266 = arith.constant 0.000000e+00 : f32
    %731 = vector.broadcast %cst_266 : f32 to vector<8x1xf32>
    %732 = arith.subf %731, %730 : vector<8x1xf32>
    %733 = math.exp %732 : vector<8x1xf32>
    %cst_267 = arith.constant 1.000000e+00 : f32
    %734 = vector.broadcast %cst_267 : f32 to vector<8x1xf32>
    %735 = arith.addf %734, %733 : vector<8x1xf32>
    %736 = math.log %735 : vector<8x1xf32>
    %737 = arith.addf %729, %736 : vector<8x1xf32>
    %cst_268 = arith.constant 9.99999997E-7 : f32
    %738 = vector.broadcast %cst_268 : f32 to vector<8x1xf32>
    %739 = arith.addf %737, %738 : vector<8x1xf32>
    %c8_269 = arith.constant 8 : index
    %c0_270 = arith.constant 0 : index
    %c0_271 = arith.constant 0 : index
    %740 = vector.load %arg2[%c8_269, %c0_270, %c0_271] : memref<12x8x1xf32, #tpu.memory_space<vmem>>, vector<1x8x1xf32>
    %741 = vector.shape_cast %740 : vector<1x8x1xf32> to vector<8x1xf32>
    %742 = arith.mulf %739, %741 : vector<8x1xf32>
    %743 = arith.addf %726, %742 : vector<8x1xf32>
    %c9 = arith.constant 9 : index
    %c0_272 = arith.constant 0 : index
    %c0_273 = arith.constant 0 : index
    %744 = vector.load %arg0[%c9, %c0_272, %c0_273] : memref<12x8x128xf32, #tpu.memory_space<vmem>>, vector<1x8x128xf32>
    %745 = vector.shape_cast %744 : vector<1x8x128xf32> to vector<8x128xf32>
    %746 = vector.broadcast %743 : vector<8x1xf32> to vector<8x128xf32>
    %747 = vector.broadcast %0 : vector<1x128xf32> to vector<8x128xf32>
    %748 = arith.mulf %746, %747 : vector<8x128xf32>
    %749 = arith.addf %745, %748 : vector<8x128xf32>
    %cst_274 = arith.constant dense<0.000000e+00> : vector<8x128xf32>
    %750 = tpu.matmul %693, %1, %cst_274 {dimension_numbers = #tpu.dot_dimension_numbers<[1], [0], [0], [1], [0, 0, 1, 1], [], []>} : vector<8x32xf32>, vector<32x128xf32>, vector<8x128xf32> -> vector<8x128xf32>
    %751 = arith.addf %749, %750 : vector<8x128xf32>
    %752 = math.tanh %751 : vector<8x128xf32>
    %753 = vector.extract_strided_slice %752 {offsets = [0, 0], sizes = [8, 32], strides = [1, 1]} : vector<8x128xf32> to vector<8x32xf32>
    %cst_275 = arith.constant 5.000000e-01 : f32
    %754 = vector.broadcast %cst_275 : f32 to vector<8x32xf32>
    %755 = arith.mulf %754, %753 : vector<8x32xf32>
    %cst_276 = arith.constant 5.000000e-01 : f32
    %756 = vector.broadcast %cst_276 : f32 to vector<8x32xf32>
    %757 = arith.addf %755, %756 : vector<8x32xf32>
    %758 = vector.extract_strided_slice %752 {offsets = [0, 32], sizes = [8, 32], strides = [1, 1]} : vector<8x128xf32> to vector<8x32xf32>
    %cst_277 = arith.constant 5.000000e-01 : f32
    %759 = vector.broadcast %cst_277 : f32 to vector<8x32xf32>
    %760 = arith.mulf %759, %758 : vector<8x32xf32>
    %cst_278 = arith.constant 5.000000e-01 : f32
    %761 = vector.broadcast %cst_278 : f32 to vector<8x32xf32>
    %762 = arith.addf %760, %761 : vector<8x32xf32>
    %763 = vector.extract_strided_slice %752 {offsets = [0, 64], sizes = [8, 32], strides = [1, 1]} : vector<8x128xf32> to vector<8x32xf32>
    %764 = vector.extract_strided_slice %752 {offsets = [0, 96], sizes = [8, 32], strides = [1, 1]} : vector<8x128xf32> to vector<8x32xf32>
    %cst_279 = arith.constant 5.000000e-01 : f32
    %765 = vector.broadcast %cst_279 : f32 to vector<8x32xf32>
    %766 = arith.mulf %765, %764 : vector<8x32xf32>
    %cst_280 = arith.constant 5.000000e-01 : f32
    %767 = vector.broadcast %cst_280 : f32 to vector<8x32xf32>
    %768 = arith.addf %766, %767 : vector<8x32xf32>
    %769 = arith.mulf %762, %691 : vector<8x32xf32>
    %770 = arith.mulf %757, %763 : vector<8x32xf32>
    %771 = arith.addf %769, %770 : vector<8x32xf32>
    %772 = math.tanh %771 : vector<8x32xf32>
    %773 = arith.mulf %768, %772 : vector<8x32xf32>
    %cst_281 = arith.constant dense<0.000000e+00> : vector<8x128xf32>
    %774 = tpu.matmul %720, %3, %cst_281 {dimension_numbers = #tpu.dot_dimension_numbers<[1], [0], [0], [1], [0, 0, 1, 1], [], []>} : vector<8x32xf32>, vector<32x128xf32>, vector<8x128xf32> -> vector<8x128xf32>
    %cst_282 = arith.constant dense<0.000000e+00> : vector<8x128xf32>
    %775 = tpu.matmul %773, %2, %cst_282 {dimension_numbers = #tpu.dot_dimension_numbers<[1], [0], [0], [1], [0, 0, 1, 1], [], []>} : vector<8x32xf32>, vector<32x128xf32>, vector<8x128xf32> -> vector<8x128xf32>
    %776 = arith.addf %774, %775 : vector<8x128xf32>
    %777 = vector.broadcast %4 : vector<1x128xf32> to vector<8x128xf32>
    %778 = arith.addf %776, %777 : vector<8x128xf32>
    %779 = math.tanh %778 : vector<8x128xf32>
    %780 = vector.extract_strided_slice %779 {offsets = [0, 0], sizes = [8, 32], strides = [1, 1]} : vector<8x128xf32> to vector<8x32xf32>
    %cst_283 = arith.constant 5.000000e-01 : f32
    %781 = vector.broadcast %cst_283 : f32 to vector<8x32xf32>
    %782 = arith.mulf %781, %780 : vector<8x32xf32>
    %cst_284 = arith.constant 5.000000e-01 : f32
    %783 = vector.broadcast %cst_284 : f32 to vector<8x32xf32>
    %784 = arith.addf %782, %783 : vector<8x32xf32>
    %785 = vector.extract_strided_slice %779 {offsets = [0, 32], sizes = [8, 32], strides = [1, 1]} : vector<8x128xf32> to vector<8x32xf32>
    %cst_285 = arith.constant 5.000000e-01 : f32
    %786 = vector.broadcast %cst_285 : f32 to vector<8x32xf32>
    %787 = arith.mulf %786, %785 : vector<8x32xf32>
    %cst_286 = arith.constant 5.000000e-01 : f32
    %788 = vector.broadcast %cst_286 : f32 to vector<8x32xf32>
    %789 = arith.addf %787, %788 : vector<8x32xf32>
    %790 = vector.extract_strided_slice %779 {offsets = [0, 64], sizes = [8, 32], strides = [1, 1]} : vector<8x128xf32> to vector<8x32xf32>
    %791 = vector.extract_strided_slice %779 {offsets = [0, 96], sizes = [8, 32], strides = [1, 1]} : vector<8x128xf32> to vector<8x32xf32>
    %cst_287 = arith.constant 5.000000e-01 : f32
    %792 = vector.broadcast %cst_287 : f32 to vector<8x32xf32>
    %793 = arith.mulf %792, %791 : vector<8x32xf32>
    %cst_288 = arith.constant 5.000000e-01 : f32
    %794 = vector.broadcast %cst_288 : f32 to vector<8x32xf32>
    %795 = arith.addf %793, %794 : vector<8x32xf32>
    %796 = arith.mulf %789, %718 : vector<8x32xf32>
    %797 = arith.mulf %784, %790 : vector<8x32xf32>
    %798 = arith.addf %796, %797 : vector<8x32xf32>
    %799 = math.tanh %798 : vector<8x32xf32>
    %800 = arith.mulf %795, %799 : vector<8x32xf32>
    %cst_289 = arith.constant 0.000000e+00 : f32
    %801 = vector.broadcast %cst_289 : f32 to vector<8x32xf32>
    %802 = arith.maximumf %800, %801 : vector<8x32xf32>
    %cst_290 = arith.constant dense<0.000000e+00> : vector<8x2xf32>
    %803 = tpu.matmul %802, %5, %cst_290 {dimension_numbers = #tpu.dot_dimension_numbers<[1], [0], [0], [1], [0, 0, 1, 1], [], []>} : vector<8x32xf32>, vector<32x2xf32>, vector<8x2xf32> -> vector<8x2xf32>
    %804 = vector.broadcast %6 : vector<1x2xf32> to vector<8x2xf32>
    %805 = arith.addf %803, %804 : vector<8x2xf32>
    %806 = vector.extract_strided_slice %805 {offsets = [0, 0], sizes = [8, 1], strides = [1, 1]} : vector<8x2xf32> to vector<8x1xf32>
    %807 = vector.extract_strided_slice %805 {offsets = [0, 1], sizes = [8, 1], strides = [1, 1]} : vector<8x2xf32> to vector<8x1xf32>
    %cst_291 = arith.constant 0.000000e+00 : f32
    %808 = vector.broadcast %cst_291 : f32 to vector<8x1xf32>
    %809 = arith.maximumf %807, %808 : vector<8x1xf32>
    %810 = math.absf %807 : vector<8x1xf32>
    %cst_292 = arith.constant 0.000000e+00 : f32
    %811 = vector.broadcast %cst_292 : f32 to vector<8x1xf32>
    %812 = arith.subf %811, %810 : vector<8x1xf32>
    %813 = math.exp %812 : vector<8x1xf32>
    %cst_293 = arith.constant 1.000000e+00 : f32
    %814 = vector.broadcast %cst_293 : f32 to vector<8x1xf32>
    %815 = arith.addf %814, %813 : vector<8x1xf32>
    %816 = math.log %815 : vector<8x1xf32>
    %817 = arith.addf %809, %816 : vector<8x1xf32>
    %cst_294 = arith.constant 9.99999997E-7 : f32
    %818 = vector.broadcast %cst_294 : f32 to vector<8x1xf32>
    %819 = arith.addf %817, %818 : vector<8x1xf32>
    %c9_295 = arith.constant 9 : index
    %c0_296 = arith.constant 0 : index
    %c0_297 = arith.constant 0 : index
    %820 = vector.load %arg2[%c9_295, %c0_296, %c0_297] : memref<12x8x1xf32, #tpu.memory_space<vmem>>, vector<1x8x1xf32>
    %821 = vector.shape_cast %820 : vector<1x8x1xf32> to vector<8x1xf32>
    %822 = arith.mulf %819, %821 : vector<8x1xf32>
    %823 = arith.addf %806, %822 : vector<8x1xf32>
    %c10 = arith.constant 10 : index
    %c0_298 = arith.constant 0 : index
    %c0_299 = arith.constant 0 : index
    %824 = vector.load %arg0[%c10, %c0_298, %c0_299] : memref<12x8x128xf32, #tpu.memory_space<vmem>>, vector<1x8x128xf32>
    %825 = vector.shape_cast %824 : vector<1x8x128xf32> to vector<8x128xf32>
    %826 = vector.broadcast %823 : vector<8x1xf32> to vector<8x128xf32>
    %827 = vector.broadcast %0 : vector<1x128xf32> to vector<8x128xf32>
    %828 = arith.mulf %826, %827 : vector<8x128xf32>
    %829 = arith.addf %825, %828 : vector<8x128xf32>
    %cst_300 = arith.constant dense<0.000000e+00> : vector<8x128xf32>
    %830 = tpu.matmul %773, %1, %cst_300 {dimension_numbers = #tpu.dot_dimension_numbers<[1], [0], [0], [1], [0, 0, 1, 1], [], []>} : vector<8x32xf32>, vector<32x128xf32>, vector<8x128xf32> -> vector<8x128xf32>
    %831 = arith.addf %829, %830 : vector<8x128xf32>
    %832 = math.tanh %831 : vector<8x128xf32>
    %833 = vector.extract_strided_slice %832 {offsets = [0, 0], sizes = [8, 32], strides = [1, 1]} : vector<8x128xf32> to vector<8x32xf32>
    %cst_301 = arith.constant 5.000000e-01 : f32
    %834 = vector.broadcast %cst_301 : f32 to vector<8x32xf32>
    %835 = arith.mulf %834, %833 : vector<8x32xf32>
    %cst_302 = arith.constant 5.000000e-01 : f32
    %836 = vector.broadcast %cst_302 : f32 to vector<8x32xf32>
    %837 = arith.addf %835, %836 : vector<8x32xf32>
    %838 = vector.extract_strided_slice %832 {offsets = [0, 32], sizes = [8, 32], strides = [1, 1]} : vector<8x128xf32> to vector<8x32xf32>
    %cst_303 = arith.constant 5.000000e-01 : f32
    %839 = vector.broadcast %cst_303 : f32 to vector<8x32xf32>
    %840 = arith.mulf %839, %838 : vector<8x32xf32>
    %cst_304 = arith.constant 5.000000e-01 : f32
    %841 = vector.broadcast %cst_304 : f32 to vector<8x32xf32>
    %842 = arith.addf %840, %841 : vector<8x32xf32>
    %843 = vector.extract_strided_slice %832 {offsets = [0, 64], sizes = [8, 32], strides = [1, 1]} : vector<8x128xf32> to vector<8x32xf32>
    %844 = vector.extract_strided_slice %832 {offsets = [0, 96], sizes = [8, 32], strides = [1, 1]} : vector<8x128xf32> to vector<8x32xf32>
    %cst_305 = arith.constant 5.000000e-01 : f32
    %845 = vector.broadcast %cst_305 : f32 to vector<8x32xf32>
    %846 = arith.mulf %845, %844 : vector<8x32xf32>
    %cst_306 = arith.constant 5.000000e-01 : f32
    %847 = vector.broadcast %cst_306 : f32 to vector<8x32xf32>
    %848 = arith.addf %846, %847 : vector<8x32xf32>
    %849 = arith.mulf %842, %771 : vector<8x32xf32>
    %850 = arith.mulf %837, %843 : vector<8x32xf32>
    %851 = arith.addf %849, %850 : vector<8x32xf32>
    %852 = math.tanh %851 : vector<8x32xf32>
    %853 = arith.mulf %848, %852 : vector<8x32xf32>
    %cst_307 = arith.constant dense<0.000000e+00> : vector<8x128xf32>
    %854 = tpu.matmul %800, %3, %cst_307 {dimension_numbers = #tpu.dot_dimension_numbers<[1], [0], [0], [1], [0, 0, 1, 1], [], []>} : vector<8x32xf32>, vector<32x128xf32>, vector<8x128xf32> -> vector<8x128xf32>
    %cst_308 = arith.constant dense<0.000000e+00> : vector<8x128xf32>
    %855 = tpu.matmul %853, %2, %cst_308 {dimension_numbers = #tpu.dot_dimension_numbers<[1], [0], [0], [1], [0, 0, 1, 1], [], []>} : vector<8x32xf32>, vector<32x128xf32>, vector<8x128xf32> -> vector<8x128xf32>
    %856 = arith.addf %854, %855 : vector<8x128xf32>
    %857 = vector.broadcast %4 : vector<1x128xf32> to vector<8x128xf32>
    %858 = arith.addf %856, %857 : vector<8x128xf32>
    %859 = math.tanh %858 : vector<8x128xf32>
    %860 = vector.extract_strided_slice %859 {offsets = [0, 0], sizes = [8, 32], strides = [1, 1]} : vector<8x128xf32> to vector<8x32xf32>
    %cst_309 = arith.constant 5.000000e-01 : f32
    %861 = vector.broadcast %cst_309 : f32 to vector<8x32xf32>
    %862 = arith.mulf %861, %860 : vector<8x32xf32>
    %cst_310 = arith.constant 5.000000e-01 : f32
    %863 = vector.broadcast %cst_310 : f32 to vector<8x32xf32>
    %864 = arith.addf %862, %863 : vector<8x32xf32>
    %865 = vector.extract_strided_slice %859 {offsets = [0, 32], sizes = [8, 32], strides = [1, 1]} : vector<8x128xf32> to vector<8x32xf32>
    %cst_311 = arith.constant 5.000000e-01 : f32
    %866 = vector.broadcast %cst_311 : f32 to vector<8x32xf32>
    %867 = arith.mulf %866, %865 : vector<8x32xf32>
    %cst_312 = arith.constant 5.000000e-01 : f32
    %868 = vector.broadcast %cst_312 : f32 to vector<8x32xf32>
    %869 = arith.addf %867, %868 : vector<8x32xf32>
    %870 = vector.extract_strided_slice %859 {offsets = [0, 64], sizes = [8, 32], strides = [1, 1]} : vector<8x128xf32> to vector<8x32xf32>
    %871 = vector.extract_strided_slice %859 {offsets = [0, 96], sizes = [8, 32], strides = [1, 1]} : vector<8x128xf32> to vector<8x32xf32>
    %cst_313 = arith.constant 5.000000e-01 : f32
    %872 = vector.broadcast %cst_313 : f32 to vector<8x32xf32>
    %873 = arith.mulf %872, %871 : vector<8x32xf32>
    %cst_314 = arith.constant 5.000000e-01 : f32
    %874 = vector.broadcast %cst_314 : f32 to vector<8x32xf32>
    %875 = arith.addf %873, %874 : vector<8x32xf32>
    %876 = arith.mulf %869, %798 : vector<8x32xf32>
    %877 = arith.mulf %864, %870 : vector<8x32xf32>
    %878 = arith.addf %876, %877 : vector<8x32xf32>
    %879 = math.tanh %878 : vector<8x32xf32>
    %880 = arith.mulf %875, %879 : vector<8x32xf32>
    %cst_315 = arith.constant 0.000000e+00 : f32
    %881 = vector.broadcast %cst_315 : f32 to vector<8x32xf32>
    %882 = arith.maximumf %880, %881 : vector<8x32xf32>
    %cst_316 = arith.constant dense<0.000000e+00> : vector<8x2xf32>
    %883 = tpu.matmul %882, %5, %cst_316 {dimension_numbers = #tpu.dot_dimension_numbers<[1], [0], [0], [1], [0, 0, 1, 1], [], []>} : vector<8x32xf32>, vector<32x2xf32>, vector<8x2xf32> -> vector<8x2xf32>
    %884 = vector.broadcast %6 : vector<1x2xf32> to vector<8x2xf32>
    %885 = arith.addf %883, %884 : vector<8x2xf32>
    %886 = vector.extract_strided_slice %885 {offsets = [0, 0], sizes = [8, 1], strides = [1, 1]} : vector<8x2xf32> to vector<8x1xf32>
    %887 = vector.extract_strided_slice %885 {offsets = [0, 1], sizes = [8, 1], strides = [1, 1]} : vector<8x2xf32> to vector<8x1xf32>
    %cst_317 = arith.constant 0.000000e+00 : f32
    %888 = vector.broadcast %cst_317 : f32 to vector<8x1xf32>
    %889 = arith.maximumf %887, %888 : vector<8x1xf32>
    %890 = math.absf %887 : vector<8x1xf32>
    %cst_318 = arith.constant 0.000000e+00 : f32
    %891 = vector.broadcast %cst_318 : f32 to vector<8x1xf32>
    %892 = arith.subf %891, %890 : vector<8x1xf32>
    %893 = math.exp %892 : vector<8x1xf32>
    %cst_319 = arith.constant 1.000000e+00 : f32
    %894 = vector.broadcast %cst_319 : f32 to vector<8x1xf32>
    %895 = arith.addf %894, %893 : vector<8x1xf32>
    %896 = math.log %895 : vector<8x1xf32>
    %897 = arith.addf %889, %896 : vector<8x1xf32>
    %cst_320 = arith.constant 9.99999997E-7 : f32
    %898 = vector.broadcast %cst_320 : f32 to vector<8x1xf32>
    %899 = arith.addf %897, %898 : vector<8x1xf32>
    %c10_321 = arith.constant 10 : index
    %c0_322 = arith.constant 0 : index
    %c0_323 = arith.constant 0 : index
    %900 = vector.load %arg2[%c10_321, %c0_322, %c0_323] : memref<12x8x1xf32, #tpu.memory_space<vmem>>, vector<1x8x1xf32>
    %901 = vector.shape_cast %900 : vector<1x8x1xf32> to vector<8x1xf32>
    %902 = arith.mulf %899, %901 : vector<8x1xf32>
    %903 = arith.addf %886, %902 : vector<8x1xf32>
    %c11 = arith.constant 11 : index
    %c0_324 = arith.constant 0 : index
    %c0_325 = arith.constant 0 : index
    %904 = vector.load %arg0[%c11, %c0_324, %c0_325] : memref<12x8x128xf32, #tpu.memory_space<vmem>>, vector<1x8x128xf32>
    %905 = vector.shape_cast %904 : vector<1x8x128xf32> to vector<8x128xf32>
    %906 = vector.broadcast %903 : vector<8x1xf32> to vector<8x128xf32>
    %907 = vector.broadcast %0 : vector<1x128xf32> to vector<8x128xf32>
    %908 = arith.mulf %906, %907 : vector<8x128xf32>
    %909 = arith.addf %905, %908 : vector<8x128xf32>
    %cst_326 = arith.constant dense<0.000000e+00> : vector<8x128xf32>
    %910 = tpu.matmul %853, %1, %cst_326 {dimension_numbers = #tpu.dot_dimension_numbers<[1], [0], [0], [1], [0, 0, 1, 1], [], []>} : vector<8x32xf32>, vector<32x128xf32>, vector<8x128xf32> -> vector<8x128xf32>
    %911 = arith.addf %909, %910 : vector<8x128xf32>
    %912 = math.tanh %911 : vector<8x128xf32>
    %913 = vector.extract_strided_slice %912 {offsets = [0, 0], sizes = [8, 32], strides = [1, 1]} : vector<8x128xf32> to vector<8x32xf32>
    %cst_327 = arith.constant 5.000000e-01 : f32
    %914 = vector.broadcast %cst_327 : f32 to vector<8x32xf32>
    %915 = arith.mulf %914, %913 : vector<8x32xf32>
    %cst_328 = arith.constant 5.000000e-01 : f32
    %916 = vector.broadcast %cst_328 : f32 to vector<8x32xf32>
    %917 = arith.addf %915, %916 : vector<8x32xf32>
    %918 = vector.extract_strided_slice %912 {offsets = [0, 32], sizes = [8, 32], strides = [1, 1]} : vector<8x128xf32> to vector<8x32xf32>
    %cst_329 = arith.constant 5.000000e-01 : f32
    %919 = vector.broadcast %cst_329 : f32 to vector<8x32xf32>
    %920 = arith.mulf %919, %918 : vector<8x32xf32>
    %cst_330 = arith.constant 5.000000e-01 : f32
    %921 = vector.broadcast %cst_330 : f32 to vector<8x32xf32>
    %922 = arith.addf %920, %921 : vector<8x32xf32>
    %923 = vector.extract_strided_slice %912 {offsets = [0, 64], sizes = [8, 32], strides = [1, 1]} : vector<8x128xf32> to vector<8x32xf32>
    %924 = vector.extract_strided_slice %912 {offsets = [0, 96], sizes = [8, 32], strides = [1, 1]} : vector<8x128xf32> to vector<8x32xf32>
    %cst_331 = arith.constant 5.000000e-01 : f32
    %925 = vector.broadcast %cst_331 : f32 to vector<8x32xf32>
    %926 = arith.mulf %925, %924 : vector<8x32xf32>
    %cst_332 = arith.constant 5.000000e-01 : f32
    %927 = vector.broadcast %cst_332 : f32 to vector<8x32xf32>
    %928 = arith.addf %926, %927 : vector<8x32xf32>
    %929 = arith.mulf %922, %851 : vector<8x32xf32>
    %930 = arith.mulf %917, %923 : vector<8x32xf32>
    %931 = arith.addf %929, %930 : vector<8x32xf32>
    %932 = math.tanh %931 : vector<8x32xf32>
    %933 = arith.mulf %928, %932 : vector<8x32xf32>
    %cst_333 = arith.constant dense<0.000000e+00> : vector<8x128xf32>
    %934 = tpu.matmul %880, %3, %cst_333 {dimension_numbers = #tpu.dot_dimension_numbers<[1], [0], [0], [1], [0, 0, 1, 1], [], []>} : vector<8x32xf32>, vector<32x128xf32>, vector<8x128xf32> -> vector<8x128xf32>
    %cst_334 = arith.constant dense<0.000000e+00> : vector<8x128xf32>
    %935 = tpu.matmul %933, %2, %cst_334 {dimension_numbers = #tpu.dot_dimension_numbers<[1], [0], [0], [1], [0, 0, 1, 1], [], []>} : vector<8x32xf32>, vector<32x128xf32>, vector<8x128xf32> -> vector<8x128xf32>
    %936 = arith.addf %934, %935 : vector<8x128xf32>
    %937 = vector.broadcast %4 : vector<1x128xf32> to vector<8x128xf32>
    %938 = arith.addf %936, %937 : vector<8x128xf32>
    %939 = math.tanh %938 : vector<8x128xf32>
    %940 = vector.extract_strided_slice %939 {offsets = [0, 0], sizes = [8, 32], strides = [1, 1]} : vector<8x128xf32> to vector<8x32xf32>
    %cst_335 = arith.constant 5.000000e-01 : f32
    %941 = vector.broadcast %cst_335 : f32 to vector<8x32xf32>
    %942 = arith.mulf %941, %940 : vector<8x32xf32>
    %cst_336 = arith.constant 5.000000e-01 : f32
    %943 = vector.broadcast %cst_336 : f32 to vector<8x32xf32>
    %944 = arith.addf %942, %943 : vector<8x32xf32>
    %945 = vector.extract_strided_slice %939 {offsets = [0, 32], sizes = [8, 32], strides = [1, 1]} : vector<8x128xf32> to vector<8x32xf32>
    %cst_337 = arith.constant 5.000000e-01 : f32
    %946 = vector.broadcast %cst_337 : f32 to vector<8x32xf32>
    %947 = arith.mulf %946, %945 : vector<8x32xf32>
    %cst_338 = arith.constant 5.000000e-01 : f32
    %948 = vector.broadcast %cst_338 : f32 to vector<8x32xf32>
    %949 = arith.addf %947, %948 : vector<8x32xf32>
    %950 = vector.extract_strided_slice %939 {offsets = [0, 64], sizes = [8, 32], strides = [1, 1]} : vector<8x128xf32> to vector<8x32xf32>
    %951 = vector.extract_strided_slice %939 {offsets = [0, 96], sizes = [8, 32], strides = [1, 1]} : vector<8x128xf32> to vector<8x32xf32>
    %cst_339 = arith.constant 5.000000e-01 : f32
    %952 = vector.broadcast %cst_339 : f32 to vector<8x32xf32>
    %953 = arith.mulf %952, %951 : vector<8x32xf32>
    %cst_340 = arith.constant 5.000000e-01 : f32
    %954 = vector.broadcast %cst_340 : f32 to vector<8x32xf32>
    %955 = arith.addf %953, %954 : vector<8x32xf32>
    %956 = arith.mulf %949, %878 : vector<8x32xf32>
    %957 = arith.mulf %944, %950 : vector<8x32xf32>
    %958 = arith.addf %956, %957 : vector<8x32xf32>
    %959 = math.tanh %958 : vector<8x32xf32>
    %960 = arith.mulf %955, %959 : vector<8x32xf32>
    %cst_341 = arith.constant 0.000000e+00 : f32
    %961 = vector.broadcast %cst_341 : f32 to vector<8x32xf32>
    %962 = arith.maximumf %960, %961 : vector<8x32xf32>
    %cst_342 = arith.constant dense<0.000000e+00> : vector<8x2xf32>
    %963 = tpu.matmul %962, %5, %cst_342 {dimension_numbers = #tpu.dot_dimension_numbers<[1], [0], [0], [1], [0, 0, 1, 1], [], []>} : vector<8x32xf32>, vector<32x2xf32>, vector<8x2xf32> -> vector<8x2xf32>
    %964 = vector.broadcast %6 : vector<1x2xf32> to vector<8x2xf32>
    %965 = arith.addf %963, %964 : vector<8x2xf32>
    %966 = vector.extract_strided_slice %965 {offsets = [0, 0], sizes = [8, 1], strides = [1, 1]} : vector<8x2xf32> to vector<8x1xf32>
    %967 = vector.extract_strided_slice %965 {offsets = [0, 1], sizes = [8, 1], strides = [1, 1]} : vector<8x2xf32> to vector<8x1xf32>
    %cst_343 = arith.constant 0.000000e+00 : f32
    %968 = vector.broadcast %cst_343 : f32 to vector<8x1xf32>
    %969 = arith.maximumf %967, %968 : vector<8x1xf32>
    %970 = math.absf %967 : vector<8x1xf32>
    %cst_344 = arith.constant 0.000000e+00 : f32
    %971 = vector.broadcast %cst_344 : f32 to vector<8x1xf32>
    %972 = arith.subf %971, %970 : vector<8x1xf32>
    %973 = math.exp %972 : vector<8x1xf32>
    %cst_345 = arith.constant 1.000000e+00 : f32
    %974 = vector.broadcast %cst_345 : f32 to vector<8x1xf32>
    %975 = arith.addf %974, %973 : vector<8x1xf32>
    %976 = math.log %975 : vector<8x1xf32>
    %977 = arith.addf %969, %976 : vector<8x1xf32>
    %cst_346 = arith.constant 9.99999997E-7 : f32
    %978 = vector.broadcast %cst_346 : f32 to vector<8x1xf32>
    %979 = arith.addf %977, %978 : vector<8x1xf32>
    %c11_347 = arith.constant 11 : index
    %c0_348 = arith.constant 0 : index
    %c0_349 = arith.constant 0 : index
    %980 = vector.load %arg2[%c11_347, %c0_348, %c0_349] : memref<12x8x1xf32, #tpu.memory_space<vmem>>, vector<1x8x1xf32>
    %981 = vector.shape_cast %980 : vector<1x8x1xf32> to vector<8x1xf32>
    %982 = arith.mulf %979, %981 : vector<8x1xf32>
    %983 = arith.addf %966, %982 : vector<8x1xf32>
    %984 = tpu.concatenate %72, %154, %236, %318, %400, %482, %564, %646, %726, %806, %886, %966, %85, %167, %249, %331 in 1 : vector<8x1xf32>, vector<8x1xf32>, vector<8x1xf32>, vector<8x1xf32>, vector<8x1xf32>, vector<8x1xf32>, vector<8x1xf32>, vector<8x1xf32>, vector<8x1xf32>, vector<8x1xf32>, vector<8x1xf32>, vector<8x1xf32>, vector<8x1xf32>, vector<8x1xf32>, vector<8x1xf32>, vector<8x1xf32> -> vector<8x16xf32>
    %985 = tpu.concatenate %413, %495, %577, %659, %739, %819, %899, %979, %89, %171, %253, %335, %417, %499, %581, %663 in 1 : vector<8x1xf32>, vector<8x1xf32>, vector<8x1xf32>, vector<8x1xf32>, vector<8x1xf32>, vector<8x1xf32>, vector<8x1xf32>, vector<8x1xf32>, vector<8x1xf32>, vector<8x1xf32>, vector<8x1xf32>, vector<8x1xf32>, vector<8x1xf32>, vector<8x1xf32>, vector<8x1xf32>, vector<8x1xf32> -> vector<8x16xf32>
    %986 = tpu.concatenate %743, %823, %903, %983 in 1 : vector<8x1xf32>, vector<8x1xf32>, vector<8x1xf32>, vector<8x1xf32> -> vector<8x4xf32>
    %987 = tpu.concatenate %984, %985, %986 in 1 : vector<8x16xf32>, vector<8x16xf32>, vector<8x4xf32> -> vector<8x36xf32>
    %c0_350 = arith.constant 0 : index
    %c0_351 = arith.constant 0 : index
    %988 = vector.load %arg10[%c0_350, %c0_351] : memref<8x36xf32, #tpu.memory_space<vmem>>, vector<8x36xf32>
    tpu.vector_store %arg10[%c0_350, %c0_351], %987 {strides = array<i32>} : memref<8x36xf32, #tpu.memory_space<vmem>>, vector<8x36xf32>,
    return
  }
}

</mosaic_0001>

<llo_original>
// kernel: deepar_forward.1
$region0: #{deepar_forward.1}
  #allocation0 [shape = 'u32[]', space=smem, size = 0x4, offset = 0x4, fixed_abs, tag = 'smem constant byte address 0x4 - core index']
  #allocation1 [shape = 'u32[144,128]{1,0:T(1,128)}', space=vmem, size = 0x12000, scoped, tag = 'internal scratch']
  %s0 = inlined_call_operand.vmem [shape: f32[12,8,128], index: 0, kind: input, shape index: {}]
  %s1 = inlined_call_operand.vmem [shape: f32[8,8,1], index: 1, kind: input, shape index: {}]
  %s2 = inlined_call_operand.vmem [shape: f32[12,8,1], index: 2, kind: input, shape index: {}]
  %s3 = inlined_call_operand.vmem [shape: f32[1,128], index: 3, kind: input, shape index: {}]
  %s4 = inlined_call_operand.vmem [shape: f32[32,128], index: 4, kind: input, shape index: {}]
  %s5 = inlined_call_operand.vmem [shape: f32[32,128], index: 5, kind: input, shape index: {}]
  %s6 = inlined_call_operand.vmem [shape: f32[32,128], index: 6, kind: input, shape index: {}]
  %s7 = inlined_call_operand.vmem [shape: f32[1,128], index: 7, kind: input, shape index: {}]
  %s8 = inlined_call_operand.vmem [shape: f32[32,2], index: 8, kind: input, shape index: {}]
  %s9 = inlined_call_operand.vmem [shape: f32[1,2], index: 9, kind: input, shape index: {}]
  %s10 = inlined_call_operand.vmem [shape: f32[8,36], index: 10, kind: output, shape index: {}]
  %s11 = sld [smem:[#allocation0]]
  $region50: #{deepar_forward.1} parent=0
    _
  %s13 = ssub.s32 1, %s11
  %s14 = scalar_select 0, %s13, %s11
  // Predicated region
  $region2: #{deepar_forward.1} parent=0 // pred_check
    _
  $region3: #{deepar_forward.1} parent=0 // pred_check_branch
    %16 = sbr.rel (0) target = $region5
  $region4: #{deepar_forward.1} parent=0 // pred_region
    _
  $region5: #{deepar_forward.1} parent=0 // pred_fallthru
    _
  // Predicated region
  $region6: #{deepar_forward.1} parent=0 // pred_check
    _
  $region7: #{deepar_forward.1} parent=0 // pred_check_branch
    %18 = sbr.rel (0) target = $region9
  $region8: #{deepar_forward.1} parent=0 // pred_region
    _
  $region9: #{deepar_forward.1} parent=0 // pred_fallthru
    _
  // Predicated region
  $region10: #{deepar_forward.1} parent=0 // pred_check
    _
  $region11: #{deepar_forward.1} parent=0 // pred_check_branch
    %20 = sbr.rel (0) target = $region13
  $region12: #{deepar_forward.1} parent=0 // pred_region
    _
  $region13: #{deepar_forward.1} parent=0 // pred_fallthru
    _
  // Predicated region
  $region14: #{deepar_forward.1} parent=0 // pred_check
    _
  $region15: #{deepar_forward.1} parent=0 // pred_check_branch
    %22 = sbr.rel (0) target = $region17
  $region16: #{deepar_forward.1} parent=0 // pred_region
    _
  $region17: #{deepar_forward.1} parent=0 // pred_fallthru
    _
  // Predicated region
  $region18: #{deepar_forward.1} parent=0 // pred_check
    _
  $region19: #{deepar_forward.1} parent=0 // pred_check_branch
    %24 = sbr.rel (0) target = $region21
  $region20: #{deepar_forward.1} parent=0 // pred_region
    _
  $region21: #{deepar_forward.1} parent=0 // pred_fallthru
    _
  // Predicated region
  $region22: #{deepar_forward.1} parent=0 // pred_check
    _
  $region23: #{deepar_forward.1} parent=0 // pred_check_branch
    %26 = sbr.rel (0) target = $region25
  $region24: #{deepar_forward.1} parent=0 // pred_region
    _
  $region25: #{deepar_forward.1} parent=0 // pred_fallthru
    _
  // Predicated region
  $region26: #{deepar_forward.1} parent=0 // pred_check
    _
  $region27: #{deepar_forward.1} parent=0 // pred_check_branch
    %28 = sbr.rel (0) target = $region29
  $region28: #{deepar_forward.1} parent=0 // pred_region
    _
  $region29: #{deepar_forward.1} parent=0 // pred_fallthru
    _
  // Predicated region
  $region30: #{deepar_forward.1} parent=0 // pred_check
    _
  $region31: #{deepar_forward.1} parent=0 // pred_check_branch
    %30 = sbr.rel (0) target = $region33
  $region32: #{deepar_forward.1} parent=0 // pred_region
    _
  $region33: #{deepar_forward.1} parent=0 // pred_fallthru
    _
  // Predicated region
  $region34: #{deepar_forward.1} parent=0 // pred_check
    _
  $region35: #{deepar_forward.1} parent=0 // pred_check_branch
    %32 = sbr.rel (0) target = $region37
  $region36: #{deepar_forward.1} parent=0 // pred_region
    _
  $region37: #{deepar_forward.1} parent=0 // pred_fallthru
    _
  // Predicated region
  $region38: #{deepar_forward.1} parent=0 // pred_check
    _
  $region39: #{deepar_forward.1} parent=0 // pred_check_branch
    %34 = sbr.rel (0) target = $region41
  $region40: #{deepar_forward.1} parent=0 // pred_region
    _
  $region41: #{deepar_forward.1} parent=0 // pred_fallthru
    _
  %v35 = vld [vmem:[%s3] sm:$0x1]
  %v36 = vld [vmem:[%s4] sm:$0xff]
  %v37 = vld [vmem:[%s4 + $0x8] sm:$0xff]
  %v38 = vld [vmem:[%s4 + $0x10] sm:$0xff]
  %v39 = vld [vmem:[%s4 + $0x18] sm:$0xff]
  %v40 = vld [vmem:[%s5] sm:$0xff]
  %v41 = vld [vmem:[%s5 + $0x8] sm:$0xff]
  %v42 = vld [vmem:[%s5 + $0x10] sm:$0xff]
  %v43 = vld [vmem:[%s5 + $0x18] sm:$0xff]
  %v44 = vld [vmem:[%s6] sm:$0xff]
  %v45 = vld [vmem:[%s6 + $0x8] sm:$0xff]
  %v46 = vld [vmem:[%s6 + $0x10] sm:$0xff]
  %v47 = vld [vmem:[%s6 + $0x18] sm:$0xff]
  %v48 = vld [vmem:[%s7] sm:$0x1]
  %v49 = vld [vmem:[%s8] sm:$0xff]
  %v50 = vld [vmem:[%s8 + $0x8] sm:$0xff]
  %v51 = vld [vmem:[%s8 + $0x10] sm:$0xff]
  %v52 = vld [vmem:[%s8 + $0x18] sm:$0xff]
  %v53 = vld [vmem:[%s9] sm:$0x1]
  %v54 = vld [vmem:[%s1] sm:$0xff]
  %v55 = vld [vmem:[%s0] sm:$0xff]
  %57 = vset.pattern.permute.xlu0 0
  %58 = vperm.xlu0 %57, %v54
  %v59 = vpop.permute.xlu0 %58
  %v62 = vlaneseq
  %v63 = vshrl.u32 %v62, 7
  %v64 = vsub.s32 0, %v63
  %v65 = vrot.slane %v35, %v64
  %v67 = vmul.f32 %v59, %v65
  %v68 = vadd.f32 %v55, %v67
  %vm69 = vcmask 261120
  %v71 = vsel %vm69, 0.0, 0
  %73 = vmatprep.subr.mxu0 0.0
  %74 = vmatpush1.msra.mxu0 %v36
  %75 = vmatprep.subr.mxu0 0.0
  %76 = vmatpush1.msra.mxu0 %v37
  %77 = vmatprep.subr.mxu0 0.0
  %78 = vmatpush1.msra.mxu0 %v38
  %79 = vmatprep.subr.mxu0 0.0
  %80 = vmatpush1.msra.mxu0 %v39
  %81 = vmatprep.subr.mxu0 0.0
  %82 = vmatpush1.msra.mxu0 0.0
  %83 = vmatprep.subr.mxu0 0.0
  %84 = vmatpush1.msra.mxu0 0.0
  %85 = vmatprep.subr.mxu0 0.0
  %86 = vmatpush1.msra.mxu0 0.0
  %87 = vmatprep.subr.mxu0 0.0
  %88 = vmatpush1.msra.mxu0 0.0
  %89 = vmatprep.subr.mxu0 0.0
  %90 = vmatpush1.msra.mxu0 0.0
  %91 = vmatprep.subr.mxu0 0.0
  %92 = vmatpush1.msra.mxu0 0.0
  %93 = vmatprep.subr.mxu0 0.0
  %94 = vmatpush1.msra.mxu0 0.0
  %95 = vmatprep.subr.mxu0 0.0
  %96 = vmatpush1.msra.mxu0 0.0
  %97 = vmatprep.subr.mxu0 0.0
  %98 = vmatpush1.msra.mxu0 0.0
  %99 = vmatprep.subr.mxu0 0.0
  %100 = vmatpush1.msra.mxu0 0.0
  %101 = vmatprep.subr.mxu0 0.0
  %102 = vmatpush1.msra.mxu0 0.0
  %103 = vmatprep.subr.mxu0 0.0
  %104 = vmatpush1.msra.mxu0 0.0
  %105 = vmatprep.subr.mxu0 0.0
  %106 = vmatpush1.msra.mxu0 0.0
  %107 = vmatprep.subr.mxu0 0.0
  %108 = vmatpush1.msra.mxu0 0.0
  %109 = vmatprep.subr.mxu0 0.0
  %110 = vmatpush1.msra.mxu0 0.0
  %111 = vmatprep.subr.mxu0 0.0
  %112 = vmatpush1.msra.mxu0 0.0
  %113 = vmatprep.subr.mxu0 0.0
  %114 = vmatpush1.msra.mxu0 0.0
  %115 = vmatprep.subr.mxu0 0.0
  %116 = vmatpush1.msra.mxu0 0.0
  %117 = vmatprep.subr.mxu0 0.0
  %118 = vmatpush1.msra.mxu0 0.0
  %119 = vmatprep.subr.mxu0 0.0
  %120 = vmatpush1.msra.mxu0 0.0
  %121 = vmatprep.subr.mxu0 0.0
  %122 = vmatpush1.msra.mxu0 0.0
  %123 = vmatprep.subr.mxu0 0.0
  %124 = vmatpush1.msra.mxu0 0.0
  %125 = vmatprep.subr.mxu0 0.0
  %126 = vmatpush1.msra.mxu0 0.0
  %127 = vmatprep.subr.mxu0 0.0
  %128 = vmatpush1.msra.mxu0 0.0
  %129 = vmatprep.subr.mxu0 0.0
  %130 = vmatpush1.msra.mxu0 0.0
  %131 = vmatprep.subr.mxu0 0.0
  %132 = vmatpush1.msra.mxu0 0.0
  %133 = vmatprep.subr.mxu0 0.0
  %134 = vmatpush1.msra.mxu0 0.0
  %135 = vmatprep.subr.mxu0 0.0
  %136 = vmatpush1.msra.mxu0 0.0
  %137 = vmatprep.mubr.f32.mxu0 0.0
  %138 = vmatmul.mubr.f32.gmra.mrb[0].mxu0 %v71
  %v139 = vpop.f32.mrb[0].mxu0
  %v140 = vadd.f32 0.0, %v139
  %v141 = vpop.f32.mrb[0].mxu0
  %142 = vdwg.mxu0
  %v143 = vadd.f32 %v68, %v140
  %v144 = vtanh.pop %v143
  %v145 = vmul.f32 %v144, 0.5
  %v146 = vadd.f32 %v145, 0.5
  %v147 = vmul.f32 %v146, 0.0
  %149 = vrot.lane.b32.xlu0 %v144, 64
  %v150 = vpop.permute.xlu0 %149
  %v152 = vmul.f32 %v146, %v150
  %154 = vrot.lane.b32.xlu0 %v152, 32
  %v155 = vpop.permute.xlu0 %154
  %v157 = vadd.f32 %v147, %v155
  %v158 = vtanh.pop %v157
  %160 = vrot.lane.b32.xlu0 %v158, 64
  %v161 = vpop.permute.xlu0 %160
  %v163 = vmul.f32 %v146, %v161
  %165 = vrot.lane.b32.xlu0 %v163, 32
  %v166 = vpop.permute.xlu0 %165
  %v167 = vsel %vm69, %v166, 0
  %169 = vmatprep.subr.mxu0 0.0
  %170 = vmatpush1.msra.mxu0 %v40
  %171 = vmatprep.subr.mxu0 0.0
  %172 = vmatpush1.msra.mxu0 %v41
  %173 = vmatprep.subr.mxu0 0.0
  %174 = vmatpush1.msra.mxu0 %v42
  %175 = vmatprep.subr.mxu0 0.0
  %176 = vmatpush1.msra.mxu0 %v43
  %177 = vmatprep.subr.mxu0 0.0
  %178 = vmatpush1.msra.mxu0 0.0
  %179 = vmatprep.subr.mxu0 0.0
  %180 = vmatpush1.msra.mxu0 0.0
  %181 = vmatprep.subr.mxu0 0.0
  %182 = vmatpush1.msra.mxu0 0.0
  %183 = vmatprep.subr.mxu0 0.0
  %184 = vmatpush1.msra.mxu0 0.0
  %185 = vmatprep.subr.mxu0 0.0
  %186 = vmatpush1.msra.mxu0 0.0
  %187 = vmatprep.subr.mxu0 0.0
  %188 = vmatpush1.msra.mxu0 0.0
  %189 = vmatprep.subr.mxu0 0.0
  %190 = vmatpush1.msra.mxu0 0.0
  %191 = vmatprep.subr.mxu0 0.0
  %192 = vmatpush1.msra.mxu0 0.0
  %193 = vmatprep.subr.mxu0 0.0
  %194 = vmatpush1.msra.mxu0 0.0
  %195 = vmatprep.subr.mxu0 0.0
  %196 = vmatpush1.msra.mxu0 0.0
  %197 = vmatprep.subr.mxu0 0.0
  %198 = vmatpush1.msra.mxu0 0.0
  %199 = vmatprep.subr.mxu0 0.0
  %200 = vmatpush1.msra.mxu0 0.0
  %201 = vmatprep.subr.mxu0 0.0
  %202 = vmatpush1.msra.mxu0 0.0
  %203 = vmatprep.subr.mxu0 0.0
  %204 = vmatpush1.msra.mxu0 0.0
  %205 = vmatprep.subr.mxu0 0.0
  %206 = vmatpush1.msra.mxu0 0.0
  %207 = vmatprep.subr.mxu0 0.0
  %208 = vmatpush1.msra.mxu0 0.0
  %209 = vmatprep.subr.mxu0 0.0
  %210 = vmatpush1.msra.mxu0 0.0
  %211 = vmatprep.subr.mxu0 0.0
  %212 = vmatpush1.msra.mxu0 0.0
  %213 = vmatprep.subr.mxu0 0.0
  %214 = vmatpush1.msra.mxu0 0.0
  %215 = vmatprep.subr.mxu0 0.0
  %216 = vmatpush1.msra.mxu0 0.0
  %217 = vmatprep.subr.mxu0 0.0
  %218 = vmatpush1.msra.mxu0 0.0
  %219 = vmatprep.subr.mxu0 0.0
  %220 = vmatpush1.msra.mxu0 0.0
  %221 = vmatprep.subr.mxu0 0.0
  %222 = vmatpush1.msra.mxu0 0.0
  %223 = vmatprep.subr.mxu0 0.0
  %224 = vmatpush1.msra.mxu0 0.0
  %225 = vmatprep.subr.mxu0 0.0
  %226 = vmatpush1.msra.mxu0 0.0
  %227 = vmatprep.subr.mxu0 0.0
  %228 = vmatpush1.msra.mxu0 0.0
  %229 = vmatprep.subr.mxu0 0.0
  %230 = vmatpush1.msra.mxu0 0.0
  %231 = vmatprep.subr.mxu0 0.0
  %232 = vmatpush1.msra.mxu0 0.0
  %233 = vmatprep.mubr.f32.mxu0 0.0
  %234 = vmatmul.mubr.f32.gmra.mrb[0].mxu0 %v167
  %v235 = vpop.f32.mrb[0].mxu0
  %v236 = vadd.f32 0.0, %v235
  %v237 = vpop.f32.mrb[0].mxu0
  %238 = vdwg.mxu0
  %239 = vmatprep.subr.mxu0 0.0
  %240 = vmatpush1.msra.mxu0 %v44
  %241 = vmatprep.subr.mxu0 0.0
  %242 = vmatpush1.msra.mxu0 %v45
  %243 = vmatprep.subr.mxu0 0.0
  %244 = vmatpush1.msra.mxu0 %v46
  %245 = vmatprep.subr.mxu0 0.0
  %246 = vmatpush1.msra.mxu0 %v47
  %247 = vmatprep.subr.mxu0 0.0
  %248 = vmatpush1.msra.mxu0 0.0
  %249 = vmatprep.subr.mxu0 0.0
  %250 = vmatpush1.msra.mxu0 0.0
  %251 = vmatprep.subr.mxu0 0.0
  %252 = vmatpush1.msra.mxu0 0.0
  %253 = vmatprep.subr.mxu0 0.0
  %254 = vmatpush1.msra.mxu0 0.0
  %255 = vmatprep.subr.mxu0 0.0
  %256 = vmatpush1.msra.mxu0 0.0
  %257 = vmatprep.subr.mxu0 0.0
  %258 = vmatpush1.msra.mxu0 0.0
  %259 = vmatprep.subr.mxu0 0.0
  %260 = vmatpush1.msra.mxu0 0.0
  %261 = vmatprep.subr.mxu0 0.0
  %262 = vmatpush1.msra.mxu0 0.0
  %263 = vmatprep.subr.mxu0 0.0
  %264 = vmatpush1.msra.mxu0 0.0
  %265 = vmatprep.subr.mxu0 0.0
  %266 = vmatpush1.msra.mxu0 0.0
  %267 = vmatprep.subr.mxu0 0.0
  %268 = vmatpush1.msra.mxu0 0.0
  %269 = vmatprep.subr.mxu0 0.0
  %270 = vmatpush1.msra.mxu0 0.0
  %271 = vmatprep.subr.mxu0 0.0
  %272 = vmatpush1.msra.mxu0 0.0
  %273 = vmatprep.subr.mxu0 0.0
  %274 = vmatpush1.msra.mxu0 0.0
  %275 = vmatprep.subr.mxu0 0.0
  %276 = vmatpush1.msra.mxu0 0.0
  %277 = vmatprep.subr.mxu0 0.0
  %278 = vmatpush1.msra.mxu0 0.0
  %279 = vmatprep.subr.mxu0 0.0
  %280 = vmatpush1.msra.mxu0 0.0
  %281 = vmatprep.subr.mxu0 0.0
  %282 = vmatpush1.msra.mxu0 0.0
  %283 = vmatprep.subr.mxu0 0.0
  %284 = vmatpush1.msra.mxu0 0.0
  %285 = vmatprep.subr.mxu0 0.0
  %286 = vmatpush1.msra.mxu0 0.0
  %287 = vmatprep.subr.mxu0 0.0
  %288 = vmatpush1.msra.mxu0 0.0
  %289 = vmatprep.subr.mxu0 0.0
  %290 = vmatpush1.msra.mxu0 0.0
  %291 = vmatprep.subr.mxu0 0.0
  %292 = vmatpush1.msra.mxu0 0.0
  %293 = vmatprep.subr.mxu0 0.0
  %294 = vmatpush1.msra.mxu0 0.0
  %295 = vmatprep.subr.mxu0 0.0
  %296 = vmatpush1.msra.mxu0 0.0
  %297 = vmatprep.subr.mxu0 0.0
  %298 = vmatpush1.msra.mxu0 0.0
  %299 = vmatprep.subr.mxu0 0.0
  %300 = vmatpush1.msra.mxu0 0.0
  %301 = vmatprep.subr.mxu0 0.0
  %302 = vmatpush1.msra.mxu0 0.0
  %303 = vmatprep.mubr.f32.mxu0 0.0
  %304 = vmatmul.mubr.f32.gmra.mrb[0].mxu0 %v71
  %v305 = vpop.f32.mrb[0].mxu0
  %v306 = vadd.f32 %v236, %v305
  %v307 = vpop.f32.mrb[0].mxu0
  %308 = vdwg.mxu0
  %v310 = vlaneseq
  %v311 = vshrl.u32 %v310, 7
  %v312 = vsub.s32 0, %v311
  %v313 = vrot.slane %v48, %v312
  %v315 = vadd.f32 %v306, %v313
  %v316 = vtanh.pop %v315
  %v317 = vmul.f32 %v316, 0.5
  %v318 = vadd.f32 %v317, 0.5
  %v319 = vmul.f32 %v318, 0.0
  %321 = vrot.lane.b32.xlu0 %v316, 64
  %v322 = vpop.permute.xlu0 %321
  %v324 = vmul.f32 %v318, %v322
  %326 = vrot.lane.b32.xlu0 %v324, 32
  %v327 = vpop.permute.xlu0 %326
  %v329 = vadd.f32 %v319, %v327
  %v330 = vtanh.pop %v329
  %332 = vrot.lane.b32.xlu0 %v330, 64
  %v333 = vpop.permute.xlu0 %332
  %v335 = vmul.f32 %v318, %v333
  %v336 = vmax.f32 %v335, 0.0
  %v338 = vlaneseq
  %v339 = vshrl.u32 %v338, 7
  %v340 = vsub.s32 0, %v339
  %v341 = vrot.slane %v53, %v340
  %344 = vrot.lane.b32.xlu0 %v336, 32
  %v345 = vpop.permute.xlu0 %344
  %v346 = vsel %vm69, %v345, 0
  %348 = vmatprep.subr.mxu0 0.0
  %349 = vmatpush1.msra.mxu0 %v49
  %350 = vmatprep.subr.mxu0 0.0
  %351 = vmatpush1.msra.mxu0 %v50
  %352 = vmatprep.subr.mxu0 0.0
  %353 = vmatpush1.msra.mxu0 %v51
  %354 = vmatprep.subr.mxu0 0.0
  %355 = vmatpush1.msra.mxu0 %v52
  %356 = vmatprep.subr.mxu0 0.0
  %357 = vmatpush1.msra.mxu0 0.0
  %358 = vmatprep.subr.mxu0 0.0
  %359 = vmatpush1.msra.mxu0 0.0
  %360 = vmatprep.subr.mxu0 0.0
  %361 = vmatpush1.msra.mxu0 0.0
  %362 = vmatprep.subr.mxu0 0.0
  %363 = vmatpush1.msra.mxu0 0.0
  %364 = vmatprep.subr.mxu0 0.0
  %365 = vmatpush1.msra.mxu0 0.0
  %366 = vmatprep.subr.mxu0 0.0
  %367 = vmatpush1.msra.mxu0 0.0
  %368 = vmatprep.subr.mxu0 0.0
  %369 = vmatpush1.msra.mxu0 0.0
  %370 = vmatprep.subr.mxu0 0.0
  %371 = vmatpush1.msra.mxu0 0.0
  %372 = vmatprep.subr.mxu0 0.0
  %373 = vmatpush1.msra.mxu0 0.0
  %374 = vmatprep.subr.mxu0 0.0
  %375 = vmatpush1.msra.mxu0 0.0
  %376 = vmatprep.subr.mxu0 0.0
  %377 = vmatpush1.msra.mxu0 0.0
  %378 = vmatprep.subr.mxu0 0.0
  %379 = vmatpush1.msra.mxu0 0.0
  %380 = vmatprep.subr.mxu0 0.0
  %381 = vmatpush1.msra.mxu0 0.0
  %382 = vmatprep.subr.mxu0 0.0
  %383 = vmatpush1.msra.mxu0 0.0
  %384 = vmatprep.subr.mxu0 0.0
  %385 = vmatpush1.msra.mxu0 0.0
  %386 = vmatprep.subr.mxu0 0.0
  %387 = vmatpush1.msra.mxu0 0.0
  %388 = vmatprep.subr.mxu0 0.0
  %389 = vmatpush1.msra.mxu0 0.0
  %390 = vmatprep.subr.mxu0 0.0
  %391 = vmatpush1.msra.mxu0 0.0
  %392 = vmatprep.subr.mxu0 0.0
  %393 = vmatpush1.msra.mxu0 0.0
  %394 = vmatprep.subr.mxu0 0.0
  %395 = vmatpush1.msra.mxu0 0.0
  %396 = vmatprep.subr.mxu0 0.0
  %397 = vmatpush1.msra.mxu0 0.0
  %398 = vmatprep.subr.mxu0 0.0
  %399 = vmatpush1.msra.mxu0 0.0
  %400 = vmatprep.subr.mxu0 0.0
  %401 = vmatpush1.msra.mxu0 0.0
  %402 = vmatprep.subr.mxu0 0.0
  %403 = vmatpush1.msra.mxu0 0.0
  %404 = vmatprep.subr.mxu0 0.0
  %405 = vmatpush1.msra.mxu0 0.0
  %406 = vmatprep.subr.mxu0 0.0
  %407 = vmatpush1.msra.mxu0 0.0
  %408 = vmatprep.subr.mxu0 0.0
  %409 = vmatpush1.msra.mxu0 0.0
  %410 = vmatprep.subr.mxu0 0.0
  %411 = vmatpush1.msra.mxu0 0.0
  %412 = vmatprep.mubr.f32.mxu0 0.0
  %413 = vmatmul.mubr.f32.gmra.mrb[0].mxu0 %v346
  %v414 = vpop.f32.mrb[0].mxu0
  %v415 = vadd.f32 %v341, %v414
  %v416 = vpop.f32.mrb[0].mxu0
  %417 = vdwg.mxu0
  %v418 = vmax.f32 %v415, 0.0
  %v419 = vand.u32 2147483647, %v415
  %v420 = vsub.f32 0.0, %v419
  %v421 = vmul.f32 %v420, 1.442695
  %v422 = vpow.pop %v421
  %v423 = vadd.f32 %v422, 1.0
  %v424 = vlog2.pop %v423
  %v425 = vmul.f32 %v424, 0.6931472
  %v426 = vadd.f32 %v418, %v425
  %v427 = vadd.f32 %v426, 1e-06
  %v428 = vld [vmem:[%s2] sm:$0xff]
  %430 = vrot.lane.b32.xlu0 %v428, 1
  %v431 = vpop.permute.xlu0 %430
  %v433 = vmul.f32 %v427, %v431
  %435 = vrot.lane.b32.xlu0 %v433, 127
  %v436 = vpop.permute.xlu0 %435
  %v438 = vadd.f32 %v415, %v436
  %s439 = scalar_lea.vmem %s1, 8
  %v440 = vld [vmem:[%s439] sm:$0xff]
  %s441 = scalar_lea.vmem %s0, 8
  %v442 = vld [vmem:[%s441] sm:$0xff]
  %444 = vset.pattern.permute.xlu0 0
  %445 = vperm.xlu0 %444, %v440
  %v446 = vpop.permute.xlu0 %445
  %v448 = vmul.f32 %v446, %v65
  %v449 = vadd.f32 %v442, %v448
  %450 = vmatprep.subr.mxu0 0.0
  %451 = vmatpush1.msra.mxu0 %v36
  %452 = vmatprep.subr.mxu0 0.0
  %453 = vmatpush1.msra.mxu0 %v37
  %454 = vmatprep.subr.mxu0 0.0
  %455 = vmatpush1.msra.mxu0 %v38
  %456 = vmatprep.subr.mxu0 0.0
  %457 = vmatpush1.msra.mxu0 %v39
  %458 = vmatprep.subr.mxu0 0.0
  %459 = vmatpush1.msra.mxu0 0.0
  %460 = vmatprep.subr.mxu0 0.0
  %461 = vmatpush1.msra.mxu0 0.0
  %462 = vmatprep.subr.mxu0 0.0
  %463 = vmatpush1.msra.mxu0 0.0
  %464 = vmatprep.subr.mxu0 0.0
  %465 = vmatpush1.msra.mxu0 0.0
  %466 = vmatprep.subr.mxu0 0.0
  %467 = vmatpush1.msra.mxu0 0.0
  %468 = vmatprep.subr.mxu0 0.0
  %469 = vmatpush1.msra.mxu0 0.0
  %470 = vmatprep.subr.mxu0 0.0
  %471 = vmatpush1.msra.mxu0 0.0
  %472 = vmatprep.subr.mxu0 0.0
  %473 = vmatpush1.msra.mxu0 0.0
  %474 = vmatprep.subr.mxu0 0.0
  %475 = vmatpush1.msra.mxu0 0.0
  %476 = vmatprep.subr.mxu0 0.0
  %477 = vmatpush1.msra.mxu0 0.0
  %478 = vmatprep.subr.mxu0 0.0
  %479 = vmatpush1.msra.mxu0 0.0
  %480 = vmatprep.subr.mxu0 0.0
  %481 = vmatpush1.msra.mxu0 0.0
  %482 = vmatprep.subr.mxu0 0.0
  %483 = vmatpush1.msra.mxu0 0.0
  %484 = vmatprep.subr.mxu0 0.0
  %485 = vmatpush1.msra.mxu0 0.0
  %486 = vmatprep.subr.mxu0 0.0
  %487 = vmatpush1.msra.mxu0 0.0
  %488 = vmatprep.subr.mxu0 0.0
  %489 = vmatpush1.msra.mxu0 0.0
  %490 = vmatprep.subr.mxu0 0.0
  %491 = vmatpush1.msra.mxu0 0.0
  %492 = vmatprep.subr.mxu0 0.0
  %493 = vmatpush1.msra.mxu0 0.0
  %494 = vmatprep.subr.mxu0 0.0
  %495 = vmatpush1.msra.mxu0 0.0
  %496 = vmatprep.subr.mxu0 0.0
  %497 = vmatpush1.msra.mxu0 0.0
  %498 = vmatprep.subr.mxu0 0.0
  %499 = vmatpush1.msra.mxu0 0.0
  %500 = vmatprep.subr.mxu0 0.0
  %501 = vmatpush1.msra.mxu0 0.0
  %502 = vmatprep.subr.mxu0 0.0
  %503 = vmatpush1.msra.mxu0 0.0
  %504 = vmatprep.subr.mxu0 0.0
  %505 = vmatpush1.msra.mxu0 0.0
  %506 = vmatprep.subr.mxu0 0.0
  %507 = vmatpush1.msra.mxu0 0.0
  %508 = vmatprep.subr.mxu0 0.0
  %509 = vmatpush1.msra.mxu0 0.0
  %510 = vmatprep.subr.mxu0 0.0
  %511 = vmatpush1.msra.mxu0 0.0
  %512 = vmatprep.subr.mxu0 0.0
  %513 = vmatpush1.msra.mxu0 0.0
  %514 = vmatprep.mubr.f32.mxu0 0.0
  %515 = vmatmul.mubr.f32.gmra.mrb[0].mxu0 %v167
  %v516 = vpop.f32.mrb[0].mxu0
  %v517 = vadd.f32 0.0, %v516
  %v518 = vpop.f32.mrb[0].mxu0
  %519 = vdwg.mxu0
  %v520 = vadd.f32 %v449, %v517
  %v521 = vtanh.pop %v520
  %v522 = vmul.f32 %v521, 0.5
  %v523 = vadd.f32 %v522, 0.5
  %v524 = vmul.f32 %v523, %v157
  %526 = vrot.lane.b32.xlu0 %v521, 64
  %v527 = vpop.permute.xlu0 %526
  %v529 = vmul.f32 %v523, %v527
  %531 = vrot.lane.b32.xlu0 %v529, 32
  %v532 = vpop.permute.xlu0 %531
  %v534 = vadd.f32 %v524, %v532
  %v535 = vtanh.pop %v534
  %537 = vrot.lane.b32.xlu0 %v535, 64
  %v538 = vpop.permute.xlu0 %537
  %v540 = vmul.f32 %v523, %v538
  %542 = vrot.lane.b32.xlu0 %v540, 32
  %v543 = vpop.permute.xlu0 %542
  %v544 = vsel %vm69, %v543, 0
  %546 = vmatprep.subr.mxu0 0.0
  %547 = vmatpush1.msra.mxu0 %v40
  %548 = vmatprep.subr.mxu0 0.0
  %549 = vmatpush1.msra.mxu0 %v41
  %550 = vmatprep.subr.mxu0 0.0
  %551 = vmatpush1.msra.mxu0 %v42
  %552 = vmatprep.subr.mxu0 0.0
  %553 = vmatpush1.msra.mxu0 %v43
  %554 = vmatprep.subr.mxu0 0.0
  %555 = vmatpush1.msra.mxu0 0.0
  %556 = vmatprep.subr.mxu0 0.0
  %557 = vmatpush1.msra.mxu0 0.0
  %558 = vmatprep.subr.mxu0 0.0
  %559 = vmatpush1.msra.mxu0 0.0
  %560 = vmatprep.subr.mxu0 0.0
  %561 = vmatpush1.msra.mxu0 0.0
  %562 = vmatprep.subr.mxu0 0.0
  %563 = vmatpush1.msra.mxu0 0.0
  %564 = vmatprep.subr.mxu0 0.0
  %565 = vmatpush1.msra.mxu0 0.0
  %566 = vmatprep.subr.mxu0 0.0
  %567 = vmatpush1.msra.mxu0 0.0
  %568 = vmatprep.subr.mxu0 0.0
  %569 = vmatpush1.msra.mxu0 0.0
  %570 = vmatprep.subr.mxu0 0.0
  %571 = vmatpush1.msra.mxu0 0.0
  %572 = vmatprep.subr.mxu0 0.0
  %573 = vmatpush1.msra.mxu0 0.0
  %574 = vmatprep.subr.mxu0 0.0
  %575 = vmatpush1.msra.mxu0 0.0
  %576 = vmatprep.subr.mxu0 0.0
  %577 = vmatpush1.msra.mxu0 0.0
  %578 = vmatprep.subr.mxu0 0.0
  %579 = vmatpush1.msra.mxu0 0.0
  %580 = vmatprep.subr.mxu0 0.0
  %581 = vmatpush1.msra.mxu0 0.0
  %582 = vmatprep.subr.mxu0 0.0
  %583 = vmatpush1.msra.mxu0 0.0
  %584 = vmatprep.subr.mxu0 0.0
  %585 = vmatpush1.msra.mxu0 0.0
  %586 = vmatprep.subr.mxu0 0.0
  %587 = vmatpush1.msra.mxu0 0.0
  %588 = vmatprep.subr.mxu0 0.0
  %589 = vmatpush1.msra.mxu0 0.0
  %590 = vmatprep.subr.mxu0 0.0
  %591 = vmatpush1.msra.mxu0 0.0
  %592 = vmatprep.subr.mxu0 0.0
  %593 = vmatpush1.msra.mxu0 0.0
  %594 = vmatprep.subr.mxu0 0.0
  %595 = vmatpush1.msra.mxu0 0.0
  %596 = vmatprep.subr.mxu0 0.0
  %597 = vmatpush1.msra.mxu0 0.0
  %598 = vmatprep.subr.mxu0 0.0
  %599 = vmatpush1.msra.mxu0 0.0
  %600 = vmatprep.subr.mxu0 0.0
  %601 = vmatpush1.msra.mxu0 0.0
  %602 = vmatprep.subr.mxu0 0.0
  %603 = vmatpush1.msra.mxu0 0.0
  %604 = vmatprep.subr.mxu0 0.0
  %605 = vmatpush1.msra.mxu0 0.0
  %606 = vmatprep.subr.mxu0 0.0
  %607 = vmatpush1.msra.mxu0 0.0
  %608 = vmatprep.subr.mxu0 0.0
  %609 = vmatpush1.msra.mxu0 0.0
  %610 = vmatprep.mubr.f32.mxu0 0.0
  %611 = vmatmul.mubr.f32.gmra.mrb[0].mxu0 %v544
  %v612 = vpop.f32.mrb[0].mxu0
  %v613 = vadd.f32 0.0, %v612
  %v614 = vpop.f32.mrb[0].mxu0
  %615 = vdwg.mxu0
  %617 = vrot.lane.b32.xlu0 %v335, 32
  %v618 = vpop.permute.xlu0 %617
  %v619 = vsel %vm69, %v618, 0
  %621 = vmatprep.subr.mxu0 0.0
  %622 = vmatpush1.msra.mxu0 %v44
  %623 = vmatprep.subr.mxu0 0.0
  %624 = vmatpush1.msra.mxu0 %v45
  %625 = vmatprep.subr.mxu0 0.0
  %626 = vmatpush1.msra.mxu0 %v46
  %627 = vmatprep.subr.mxu0 0.0
  %628 = vmatpush1.msra.mxu0 %v47
  %629 = vmatprep.subr.mxu0 0.0
  %630 = vmatpush1.msra.mxu0 0.0
  %631 = vmatprep.subr.mxu0 0.0
  %632 = vmatpush1.msra.mxu0 0.0
  %633 = vmatprep.subr.mxu0 0.0
  %634 = vmatpush1.msra.mxu0 0.0
  %635 = vmatprep.subr.mxu0 0.0
  %636 = vmatpush1.msra.mxu0 0.0
  %637 = vmatprep.subr.mxu0 0.0
  %638 = vmatpush1.msra.mxu0 0.0
  %639 = vmatprep.subr.mxu0 0.0
  %640 = vmatpush1.msra.mxu0 0.0
  %641 = vmatprep.subr.mxu0 0.0
  %642 = vmatpush1.msra.mxu0 0.0
  %643 = vmatprep.subr.mxu0 0.0
  %644 = vmatpush1.msra.mxu0 0.0
  %645 = vmatprep.subr.mxu0 0.0
  %646 = vmatpush1.msra.mxu0 0.0
  %647 = vmatprep.subr.mxu0 0.0
  %648 = vmatpush1.msra.mxu0 0.0
  %649 = vmatprep.subr.mxu0 0.0
  %650 = vmatpush1.msra.mxu0 0.0
  %651 = vmatprep.subr.mxu0 0.0
  %652 = vmatpush1.msra.mxu0 0.0
  %653 = vmatprep.subr.mxu0 0.0
  %654 = vmatpush1.msra.mxu0 0.0
  %655 = vmatprep.subr.mxu0 0.0
  %656 = vmatpush1.msra.mxu0 0.0
  %657 = vmatprep.subr.mxu0 0.0
  %658 = vmatpush1.msra.mxu0 0.0
  %659 = vmatprep.subr.mxu0 0.0
  %660 = vmatpush1.msra.mxu0 0.0
  %661 = vmatprep.subr.mxu0 0.0
  %662 = vmatpush1.msra.mxu0 0.0
  %663 = vmatprep.subr.mxu0 0.0
  %664 = vmatpush1.msra.mxu0 0.0
  %665 = vmatprep.subr.mxu0 0.0
  %666 = vmatpush1.msra.mxu0 0.0
  %667 = vmatprep.subr.mxu0 0.0
  %668 = vmatpush1.msra.mxu0 0.0
  %669 = vmatprep.subr.mxu0 0.0
  %670 = vmatpush1.msra.mxu0 0.0
  %671 = vmatprep.subr.mxu0 0.0
  %672 = vmatpush1.msra.mxu0 0.0
  %673 = vmatprep.subr.mxu0 0.0
  %674 = vmatpush1.msra.mxu0 0.0
  %675 = vmatprep.subr.mxu0 0.0
  %676 = vmatpush1.msra.mxu0 0.0
  %677 = vmatprep.subr.mxu0 0.0
  %678 = vmatpush1.msra.mxu0 0.0
  %679 = vmatprep.subr.mxu0 0.0
  %680 = vmatpush1.msra.mxu0 0.0
  %681 = vmatprep.subr.mxu0 0.0
  %682 = vmatpush1.msra.mxu0 0.0
  %683 = vmatprep.subr.mxu0 0.0
  %684 = vmatpush1.msra.mxu0 0.0
  %685 = vmatprep.mubr.f32.mxu0 0.0
  %686 = vmatmul.mubr.f32.gmra.mrb[0].mxu0 %v619
  %v687 = vpop.f32.mrb[0].mxu0
  %v688 = vadd.f32 %v613, %v687
  %v689 = vpop.f32.mrb[0].mxu0
  %690 = vdwg.mxu0
  %v691 = vadd.f32 %v688, %v313
  %v692 = vtanh.pop %v691
  %v693 = vmul.f32 %v692, 0.5
  %v694 = vadd.f32 %v693, 0.5
  %v695 = vmul.f32 %v694, %v329
  %697 = vrot.lane.b32.xlu0 %v692, 64
  %v698 = vpop.permute.xlu0 %697
  %v700 = vmul.f32 %v694, %v698
  %702 = vrot.lane.b32.xlu0 %v700, 32
  %v703 = vpop.permute.xlu0 %702
  %v705 = vadd.f32 %v695, %v703
  %v706 = vtanh.pop %v705
  %708 = vrot.lane.b32.xlu0 %v706, 64
  %v709 = vpop.permute.xlu0 %708
  %v711 = vmul.f32 %v694, %v709
  %v712 = vmax.f32 %v711, 0.0
  %714 = vrot.lane.b32.xlu0 %v712, 32
  %v715 = vpop.permute.xlu0 %714
  %v716 = vsel %vm69, %v715, 0
  %718 = vmatprep.subr.mxu0 0.0
  %719 = vmatpush1.msra.mxu0 %v49
  %720 = vmatprep.subr.mxu0 0.0
  %721 = vmatpush1.msra.mxu0 %v50
  %722 = vmatprep.subr.mxu0 0.0
  %723 = vmatpush1.msra.mxu0 %v51
  %724 = vmatprep.subr.mxu0 0.0
  %725 = vmatpush1.msra.mxu0 %v52
  %726 = vmatprep.subr.mxu0 0.0
  %727 = vmatpush1.msra.mxu0 0.0
  %728 = vmatprep.subr.mxu0 0.0
  %729 = vmatpush1.msra.mxu0 0.0
  %730 = vmatprep.subr.mxu0 0.0
  %731 = vmatpush1.msra.mxu0 0.0
  %732 = vmatprep.subr.mxu0 0.0
  %733 = vmatpush1.msra.mxu0 0.0
  %734 = vmatprep.subr.mxu0 0.0
  %735 = vmatpush1.msra.mxu0 0.0
  %736 = vmatprep.subr.mxu0 0.0
  %737 = vmatpush1.msra.mxu0 0.0
  %738 = vmatprep.subr.mxu0 0.0
  %739 = vmatpush1.msra.mxu0 0.0
  %740 = vmatprep.subr.mxu0 0.0
  %741 = vmatpush1.msra.mxu0 0.0
  %742 = vmatprep.subr.mxu0 0.0
  %743 = vmatpush1.msra.mxu0 0.0
  %744 = vmatprep.subr.mxu0 0.0
  %745 = vmatpush1.msra.mxu0 0.0
  %746 = vmatprep.subr.mxu0 0.0
  %747 = vmatpush1.msra.mxu0 0.0
  %748 = vmatprep.subr.mxu0 0.0
  %749 = vmatpush1.msra.mxu0 0.0
  %750 = vmatprep.subr.mxu0 0.0
  %751 = vmatpush1.msra.mxu0 0.0
  %752 = vmatprep.subr.mxu0 0.0
  %753 = vmatpush1.msra.mxu0 0.0
  %754 = vmatprep.subr.mxu0 0.0
  %755 = vmatpush1.msra.mxu0 0.0
  %756 = vmatprep.subr.mxu0 0.0
  %757 = vmatpush1.msra.mxu0 0.0
  %758 = vmatprep.subr.mxu0 0.0
  %759 = vmatpush1.msra.mxu0 0.0
  %760 = vmatprep.subr.mxu0 0.0
  %761 = vmatpush1.msra.mxu0 0.0
  %762 = vmatprep.subr.mxu0 0.0
  %763 = vmatpush1.msra.mxu0 0.0
  %764 = vmatprep.subr.mxu0 0.0
  %765 = vmatpush1.msra.mxu0 0.0
  %766 = vmatprep.subr.mxu0 0.0
  %767 = vmatpush1.msra.mxu0 0.0
  %768 = vmatprep.subr.mxu0 0.0
  %769 = vmatpush1.msra.mxu0 0.0
  %770 = vmatprep.subr.mxu0 0.0
  %771 = vmatpush1.msra.mxu0 0.0
  %772 = vmatprep.subr.mxu0 0.0
  %773 = vmatpush1.msra.mxu0 0.0
  %774 = vmatprep.subr.mxu0 0.0
  %775 = vmatpush1.msra.mxu0 0.0
  %776 = vmatprep.subr.mxu0 0.0
  %777 = vmatpush1.msra.mxu0 0.0
  %778 = vmatprep.subr.mxu0 0.0
  %779 = vmatpush1.msra.mxu0 0.0
  %780 = vmatprep.subr.mxu0 0.0
  %781 = vmatpush1.msra.mxu0 0.0
  %782 = vmatprep.mubr.f32.mxu0 0.0
  %783 = vmatmul.mubr.f32.gmra.mrb[0].mxu0 %v716
  %v784 = vpop.f32.mrb[0].mxu0
  %v785 = vadd.f32 %v341, %v784
  %v786 = vpop.f32.mrb[0].mxu0
  %787 = vdwg.mxu0
  %v788 = vmax.f32 %v785, 0.0
  %v789 = vand.u32 2147483647, %v785
  %v790 = vsub.f32 0.0, %v789
  %v791 = vmul.f32 %v790, 1.442695
  %v792 = vpow.pop %v791
  %v793 = vadd.f32 %v792, 1.0
  %v794 = vlog2.pop %v793
  %v795 = vmul.f32 %v794, 0.6931472
  %v796 = vadd.f32 %v788, %v795
  %v797 = vadd.f32 %v796, 1e-06
  %s798 = scalar_lea.vmem %s2, 8
  %v799 = vld [vmem:[%s798] sm:$0xff]
  %801 = vrot.lane.b32.xlu0 %v799, 1
  %v802 = vpop.permute.xlu0 %801
  %v804 = vmul.f32 %v797, %v802
  %806 = vrot.lane.b32.xlu0 %v804, 127
  %v807 = vpop.permute.xlu0 %806
  %v809 = vadd.f32 %v785, %v807
  %s810 = scalar_lea.vmem %s1, 16
  %v811 = vld [vmem:[%s810] sm:$0xff]
  %s812 = scalar_lea.vmem %s0, 16
  %v813 = vld [vmem:[%s812] sm:$0xff]
  %815 = vset.pattern.permute.xlu0 0
  %816 = vperm.xlu0 %815, %v811
  %v817 = vpop.permute.xlu0 %816
  %v819 = vmul.f32 %v817, %v65
  %v820 = vadd.f32 %v813, %v819
  %821 = vmatprep.subr.mxu0 0.0
  %822 = vmatpush1.msra.mxu0 %v36
  %823 = vmatprep.subr.mxu0 0.0
  %824 = vmatpush1.msra.mxu0 %v37
  %825 = vmatprep.subr.mxu0 0.0
  %826 = vmatpush1.msra.mxu0 %v38
  %827 = vmatprep.subr.mxu0 0.0
  %828 = vmatpush1.msra.mxu0 %v39
  %829 = vmatprep.subr.mxu0 0.0
  %830 = vmatpush1.msra.mxu0 0.0
  %831 = vmatprep.subr.mxu0 0.0
  %832 = vmatpush1.msra.mxu0 0.0
  %833 = vmatprep.subr.mxu0 0.0
  %834 = vmatpush1.msra.mxu0 0.0
  %835 = vmatprep.subr.mxu0 0.0
  %836 = vmatpush1.msra.mxu0 0.0
  %837 = vmatprep.subr.mxu0 0.0
  %838 = vmatpush1.msra.mxu0 0.0
  %839 = vmatprep.subr.mxu0 0.0
  %840 = vmatpush1.msra.mxu0 0.0
  %841 = vmatprep.subr.mxu0 0.0
  %842 = vmatpush1.msra.mxu0 0.0
  %843 = vmatprep.subr.mxu0 0.0
  %844 = vmatpush1.msra.mxu0 0.0
  %845 = vmatprep.subr.mxu0 0.0
  %846 = vmatpush1.msra.mxu0 0.0
  %847 = vmatprep.subr.mxu0 0.0
  %848 = vmatpush1.msra.mxu0 0.0
  %849 = vmatprep.subr.mxu0 0.0
  %850 = vmatpush1.msra.mxu0 0.0
  %851 = vmatprep.subr.mxu0 0.0
  %852 = vmatpush1.msra.mxu0 0.0
  %853 = vmatprep.subr.mxu0 0.0
  %854 = vmatpush1.msra.mxu0 0.0
  %855 = vmatprep.subr.mxu0 0.0
  %856 = vmatpush1.msra.mxu0 0.0
  %857 = vmatprep.subr.mxu0 0.0
  %858 = vmatpush1.msra.mxu0 0.0
  %859 = vmatprep.subr.mxu0 0.0
  %860 = vmatpush1.msra.mxu0 0.0
  %861 = vmatprep.subr.mxu0 0.0
  %862 = vmatpush1.msra.mxu0 0.0
  %863 = vmatprep.subr.mxu0 0.0
  %864 = vmatpush1.msra.mxu0 0.0
  %865 = vmatprep.subr.mxu0 0.0
  %866 = vmatpush1.msra.mxu0 0.0
  %867 = vmatprep.subr.mxu0 0.0
  %868 = vmatpush1.msra.mxu0 0.0
  %869 = vmatprep.subr.mxu0 0.0
  %870 = vmatpush1.msra.mxu0 0.0
  %871 = vmatprep.subr.mxu0 0.0
  %872 = vmatpush1.msra.mxu0 0.0
  %873 = vmatprep.subr.mxu0 0.0
  %874 = vmatpush1.msra.mxu0 0.0
  %875 = vmatprep.subr.mxu0 0.0
  %876 = vmatpush1.msra.mxu0 0.0
  %877 = vmatprep.subr.mxu0 0.0
  %878 = vmatpush1.msra.mxu0 0.0
  %879 = vmatprep.subr.mxu0 0.0
  %880 = vmatpush1.msra.mxu0 0.0
  %881 = vmatprep.subr.mxu0 0.0
  %882 = vmatpush1.msra.mxu0 0.0
  %883 = vmatprep.subr.mxu0 0.0
  %884 = vmatpush1.msra.mxu0 0.0
  %885 = vmatprep.mubr.f32.mxu0 0.0
  %886 = vmatmul.mubr.f32.gmra.mrb[0].mxu0 %v544
  %v887 = vpop.f32.mrb[0].mxu0
  %v888 = vadd.f32 0.0, %v887
  %v889 = vpop.f32.mrb[0].mxu0
  %890 = vdwg.mxu0
  %v891 = vadd.f32 %v820, %v888
  %v892 = vtanh.pop %v891
  %v893 = vmul.f32 %v892, 0.5
  %v894 = vadd.f32 %v893, 0.5
  %v895 = vmul.f32 %v894, %v534
  %897 = vrot.lane.b32.xlu0 %v892, 64
  %v898 = vpop.permute.xlu0 %897
  %v900 = vmul.f32 %v894, %v898
  %902 = vrot.lane.b32.xlu0 %v900, 32
  %v903 = vpop.permute.xlu0 %902
  %v905 = vadd.f32 %v895, %v903
  %v906 = vtanh.pop %v905
  %908 = vrot.lane.b32.xlu0 %v906, 64
  %v909 = vpop.permute.xlu0 %908
  %v911 = vmul.f32 %v894, %v909
  %913 = vrot.lane.b32.xlu0 %v911, 32
  %v914 = vpop.permute.xlu0 %913
  %v915 = vsel %vm69, %v914, 0
  %917 = vmatprep.subr.mxu0 0.0
  %918 = vmatpush1.msra.mxu0 %v40
  %919 = vmatprep.subr.mxu0 0.0
  %920 = vmatpush1.msra.mxu0 %v41
  %921 = vmatprep.subr.mxu0 0.0
  %922 = vmatpush1.msra.mxu0 %v42
  %923 = vmatprep.subr.mxu0 0.0
  %924 = vmatpush1.msra.mxu0 %v43
  %925 = vmatprep.subr.mxu0 0.0
  %926 = vmatpush1.msra.mxu0 0.0
  %927 = vmatprep.subr.mxu0 0.0
  %928 = vmatpush1.msra.mxu0 0.0
  %929 = vmatprep.subr.mxu0 0.0
  %930 = vmatpush1.msra.mxu0 0.0
  %931 = vmatprep.subr.mxu0 0.0
  %932 = vmatpush1.msra.mxu0 0.0
  %933 = vmatprep.subr.mxu0 0.0
  %934 = vmatpush1.msra.mxu0 0.0
  %935 = vmatprep.subr.mxu0 0.0
  %936 = vmatpush1.msra.mxu0 0.0
  %937 = vmatprep.subr.mxu0 0.0
  %938 = vmatpush1.msra.mxu0 0.0
  %939 = vmatprep.subr.mxu0 0.0
  %940 = vmatpush1.msra.mxu0 0.0
  %941 = vmatprep.subr.mxu0 0.0
  %942 = vmatpush1.msra.mxu0 0.0
  %943 = vmatprep.subr.mxu0 0.0
  %944 = vmatpush1.msra.mxu0 0.0
  %945 = vmatprep.subr.mxu0 0.0
  %946 = vmatpush1.msra.mxu0 0.0
  %947 = vmatprep.subr.mxu0 0.0
  %948 = vmatpush1.msra.mxu0 0.0
  %949 = vmatprep.subr.mxu0 0.0
  %950 = vmatpush1.msra.mxu0 0.0
  %951 = vmatprep.subr.mxu0 0.0
  %952 = vmatpush1.msra.mxu0 0.0
  %953 = vmatprep.subr.mxu0 0.0
  %954 = vmatpush1.msra.mxu0 0.0
  %955 = vmatprep.subr.mxu0 0.0
  %956 = vmatpush1.msra.mxu0 0.0
  %957 = vmatprep.subr.mxu0 0.0
  %958 = vmatpush1.msra.mxu0 0.0
  %959 = vmatprep.subr.mxu0 0.0
  %960 = vmatpush1.msra.mxu0 0.0
  %961 = vmatprep.subr.mxu0 0.0
  %962 = vmatpush1.msra.mxu0 0.0
  %963 = vmatprep.subr.mxu0 0.0
  %964 = vmatpush1.msra.mxu0 0.0
  %965 = vmatprep.subr.mxu0 0.0
  %966 = vmatpush1.msra.mxu0 0.0
  %967 = vmatprep.subr.mxu0 0.0
  %968 = vmatpush1.msra.mxu0 0.0
  %969 = vmatprep.subr.mxu0 0.0
  %970 = vmatpush1.msra.mxu0 0.0
  %971 = vmatprep.subr.mxu0 0.0
  %972 = vmatpush1.msra.mxu0 0.0
  %973 = vmatprep.subr.mxu0 0.0
  %974 = vmatpush1.msra.mxu0 0.0
  %975 = vmatprep.subr.mxu0 0.0
  %976 = vmatpush1.msra.mxu0 0.0
  %977 = vmatprep.subr.mxu0 0.0
  %978 = vmatpush1.msra.mxu0 0.0
  %979 = vmatprep.subr.mxu0 0.0
  %980 = vmatpush1.msra.mxu0 0.0
  %981 = vmatprep.mubr.f32.mxu0 0.0
  %982 = vmatmul.mubr.f32.gmra.mrb[0].mxu0 %v915
  %v983 = vpop.f32.mrb[0].mxu0
  %v984 = vadd.f32 0.0, %v983
  %v985 = vpop.f32.mrb[0].mxu0
  %986 = vdwg.mxu0
  %988 = vrot.lane.b32.xlu0 %v711, 32
  %v989 = vpop.permute.xlu0 %988
  %v990 = vsel %vm69, %v989, 0
  %992 = vmatprep.subr.mxu0 0.0
  %993 = vmatpush1.msra.mxu0 %v44
  %994 = vmatprep.subr.mxu0 0.0
  %995 = vmatpush1.msra.mxu0 %v45
  %996 = vmatprep.subr.mxu0 0.0
  %997 = vmatpush1.msra.mxu0 %v46
  %998 = vmatprep.subr.mxu0 0.0
  %999 = vmatpush1.msra.mxu0 %v47
  %1000 = vmatprep.subr.mxu0 0.0
  %1001 = vmatpush1.msra.mxu0 0.0
  %1002 = vmatprep.subr.mxu0 0.0
  %1003 = vmatpush1.msra.mxu0 0.0
  %1004 = vmatprep.subr.mxu0 0.0
  %1005 = vmatpush1.msra.mxu0 0.0
  %1006 = vmatprep.subr.mxu0 0.0
  %1007 = vmatpush1.msra.mxu0 0.0
  %1008 = vmatprep.subr.mxu0 0.0
  %1009 = vmatpush1.msra.mxu0 0.0
  %1010 = vmatprep.subr.mxu0 0.0
  %1011 = vmatpush1.msra.mxu0 0.0
  %1012 = vmatprep.subr.mxu0 0.0
  %1013 = vmatpush1.msra.mxu0 0.0
  %1014 = vmatprep.subr.mxu0 0.0
  %1015 = vmatpush1.msra.mxu0 0.0
  %1016 = vmatprep.subr.mxu0 0.0
  %1017 = vmatpush1.msra.mxu0 0.0
  %1018 = vmatprep.subr.mxu0 0.0
  %1019 = vmatpush1.msra.mxu0 0.0
  %1020 = vmatprep.subr.mxu0 0.0
  %1021 = vmatpush1.msra.mxu0 0.0
  %1022 = vmatprep.subr.mxu0 0.0
  %1023 = vmatpush1.msra.mxu0 0.0
  %1024 = vmatprep.subr.mxu0 0.0
  %1025 = vmatpush1.msra.mxu0 0.0
  %1026 = vmatprep.subr.mxu0 0.0
  %1027 = vmatpush1.msra.mxu0 0.0
  %1028 = vmatprep.subr.mxu0 0.0
  %1029 = vmatpush1.msra.mxu0 0.0
  %1030 = vmatprep.subr.mxu0 0.0
  %1031 = vmatpush1.msra.mxu0 0.0
  %1032 = vmatprep.subr.mxu0 0.0
  %1033 = vmatpush1.msra.mxu0 0.0
  %1034 = vmatprep.subr.mxu0 0.0
  %1035 = vmatpush1.msra.mxu0 0.0
  %1036 = vmatprep.subr.mxu0 0.0
  %1037 = vmatpush1.msra.mxu0 0.0
  %1038 = vmatprep.subr.mxu0 0.0
  %1039 = vmatpush1.msra.mxu0 0.0
  %1040 = vmatprep.subr.mxu0 0.0
  %1041 = vmatpush1.msra.mxu0 0.0
  %1042 = vmatprep.subr.mxu0 0.0
  %1043 = vmatpush1.msra.mxu0 0.0
  %1044 = vmatprep.subr.mxu0 0.0
  %1045 = vmatpush1.msra.mxu0 0.0
  %1046 = vmatprep.subr.mxu0 0.0
  %1047 = vmatpush1.msra.mxu0 0.0
  %1048 = vmatprep.subr.mxu0 0.0
  %1049 = vmatpush1.msra.mxu0 0.0
  %1050 = vmatprep.subr.mxu0 0.0
  %1051 = vmatpush1.msra.mxu0 0.0
  %1052 = vmatprep.subr.mxu0 0.0
  %1053 = vmatpush1.msra.mxu0 0.0
  %1054 = vmatprep.subr.mxu0 0.0
  %1055 = vmatpush1.msra.mxu0 0.0
  %1056 = vmatprep.mubr.f32.mxu0 0.0
  %1057 = vmatmul.mubr.f32.gmra.mrb[0].mxu0 %v990
  %v1058 = vpop.f32.mrb[0].mxu0
  %v1059 = vadd.f32 %v984, %v1058
  %v1060 = vpop.f32.mrb[0].mxu0
  %1061 = vdwg.mxu0
  %v1062 = vadd.f32 %v1059, %v313
  %v1063 = vtanh.pop %v1062
  %v1064 = vmul.f32 %v1063, 0.5
  %v1065 = vadd.f32 %v1064, 0.5
  %v1066 = vmul.f32 %v1065, %v705
  %1068 = vrot.lane.b32.xlu0 %v1063, 64
  %v1069 = vpop.permute.xlu0 %1068
  %v1071 = vmul.f32 %v1065, %v1069
  %1073 = vrot.lane.b32.xlu0 %v1071, 32
  %v1074 = vpop.permute.xlu0 %1073
  %v1076 = vadd.f32 %v1066, %v1074
  %v1077 = vtanh.pop %v1076
  %1079 = vrot.lane.b32.xlu0 %v1077, 64
  %v1080 = vpop.permute.xlu0 %1079
  %v1082 = vmul.f32 %v1065, %v1080
  %v1083 = vmax.f32 %v1082, 0.0
  %1085 = vrot.lane.b32.xlu0 %v1083, 32
  %v1086 = vpop.permute.xlu0 %1085
  %v1087 = vsel %vm69, %v1086, 0
  %1089 = vmatprep.subr.mxu0 0.0
  %1090 = vmatpush1.msra.mxu0 %v49
  %1091 = vmatprep.subr.mxu0 0.0
  %1092 = vmatpush1.msra.mxu0 %v50
  %1093 = vmatprep.subr.mxu0 0.0
  %1094 = vmatpush1.msra.mxu0 %v51
  %1095 = vmatprep.subr.mxu0 0.0
  %1096 = vmatpush1.msra.mxu0 %v52
  %1097 = vmatprep.subr.mxu0 0.0
  %1098 = vmatpush1.msra.mxu0 0.0
  %1099 = vmatprep.subr.mxu0 0.0
  %1100 = vmatpush1.msra.mxu0 0.0
  %1101 = vmatprep.subr.mxu0 0.0
  %1102 = vmatpush1.msra.mxu0 0.0
  %1103 = vmatprep.subr.mxu0 0.0
  %1104 = vmatpush1.msra.mxu0 0.0
  %1105 = vmatprep.subr.mxu0 0.0
  %1106 = vmatpush1.msra.mxu0 0.0
  %1107 = vmatprep.subr.mxu0 0.0
  %1108 = vmatpush1.msra.mxu0 0.0
  %1109 = vmatprep.subr.mxu0 0.0
  %1110 = vmatpush1.msra.mxu0 0.0
  %1111 = vmatprep.subr.mxu0 0.0
  %1112 = vmatpush1.msra.mxu0 0.0
  %1113 = vmatprep.subr.mxu0 0.0
  %1114 = vmatpush1.msra.mxu0 0.0
  %1115 = vmatprep.subr.mxu0 0.0
  %1116 = vmatpush1.msra.mxu0 0.0
  %1117 = vmatprep.subr.mxu0 0.0
  %1118 = vmatpush1.msra.mxu0 0.0
  %1119 = vmatprep.subr.mxu0 0.0
  %1120 = vmatpush1.msra.mxu0 0.0
  %1121 = vmatprep.subr.mxu0 0.0
  %1122 = vmatpush1.msra.mxu0 0.0
  %1123 = vmatprep.subr.mxu0 0.0
  %1124 = vmatpush1.msra.mxu0 0.0
  %1125 = vmatprep.subr.mxu0 0.0
  %1126 = vmatpush1.msra.mxu0 0.0
  %1127 = vmatprep.subr.mxu0 0.0
  %1128 = vmatpush1.msra.mxu0 0.0
  %1129 = vmatprep.subr.mxu0 0.0
  %1130 = vmatpush1.msra.mxu0 0.0
  %1131 = vmatprep.subr.mxu0 0.0
  %1132 = vmatpush1.msra.mxu0 0.0
  %1133 = vmatprep.subr.mxu0 0.0
  %1134 = vmatpush1.msra.mxu0 0.0
  %1135 = vmatprep.subr.mxu0 0.0
  %1136 = vmatpush1.msra.mxu0 0.0
  %1137 = vmatprep.subr.mxu0 0.0
  %1138 = vmatpush1.msra.mxu0 0.0
  %1139 = vmatprep.subr.mxu0 0.0
  %1140 = vmatpush1.msra.mxu0 0.0
  %1141 = vmatprep.subr.mxu0 0.0
  %1142 = vmatpush1.msra.mxu0 0.0
  %1143 = vmatprep.subr.mxu0 0.0
  %1144 = vmatpush1.msra.mxu0 0.0
  %1145 = vmatprep.subr.mxu0 0.0
  %1146 = vmatpush1.msra.mxu0 0.0
  %1147 = vmatprep.subr.mxu0 0.0
  %1148 = vmatpush1.msra.mxu0 0.0
  %1149 = vmatprep.subr.mxu0 0.0
  %1150 = vmatpush1.msra.mxu0 0.0
  %1151 = vmatprep.subr.mxu0 0.0
  %1152 = vmatpush1.msra.mxu0 0.0
  %1153 = vmatprep.mubr.f32.mxu0 0.0
  %1154 = vmatmul.mubr.f32.gmra.mrb[0].mxu0 %v1087
  %v1155 = vpop.f32.mrb[0].mxu0
  %v1156 = vadd.f32 %v341, %v1155
  %v1157 = vpop.f32.mrb[0].mxu0
  %1158 = vdwg.mxu0
  %v1159 = vmax.f32 %v1156, 0.0
  %v1160 = vand.u32 2147483647, %v1156
  %v1161 = vsub.f32 0.0, %v1160
  %v1162 = vmul.f32 %v1161, 1.442695
  %v1163 = vpow.pop %v1162
  %v1164 = vadd.f32 %v1163, 1.0
  %v1165 = vlog2.pop %v1164
  %v1166 = vmul.f32 %v1165, 0.6931472
  %v1167 = vadd.f32 %v1159, %v1166
  %v1168 = vadd.f32 %v1167, 1e-06
  %s1169 = scalar_lea.vmem %s2, 16
  %v1170 = vld [vmem:[%s1169] sm:$0xff]
  %1172 = vrot.lane.b32.xlu0 %v1170, 1
  %v1173 = vpop.permute.xlu0 %1172
  %v1175 = vmul.f32 %v1168, %v1173
  %1177 = vrot.lane.b32.xlu0 %v1175, 127
  %v1178 = vpop.permute.xlu0 %1177
  %v1180 = vadd.f32 %v1156, %v1178
  %s1181 = scalar_lea.vmem %s1, 24
  %v1182 = vld [vmem:[%s1181] sm:$0xff]
  %s1183 = scalar_lea.vmem %s0, 24
  %v1184 = vld [vmem:[%s1183] sm:$0xff]
  %1186 = vset.pattern.permute.xlu0 0
  %1187 = vperm.xlu0 %1186, %v1182
  %v1188 = vpop.permute.xlu0 %1187
  %v1190 = vmul.f32 %v1188, %v65
  %v1191 = vadd.f32 %v1184, %v1190
  %1192 = vmatprep.subr.mxu0 0.0
  %1193 = vmatpush1.msra.mxu0 %v36
  %1194 = vmatprep.subr.mxu0 0.0
  %1195 = vmatpush1.msra.mxu0 %v37
  %1196 = vmatprep.subr.mxu0 0.0
  %1197 = vmatpush1.msra.mxu0 %v38
  %1198 = vmatprep.subr.mxu0 0.0
  %1199 = vmatpush1.msra.mxu0 %v39
  %1200 = vmatprep.subr.mxu0 0.0
  %1201 = vmatpush1.msra.mxu0 0.0
  %1202 = vmatprep.subr.mxu0 0.0
  %1203 = vmatpush1.msra.mxu0 0.0
  %1204 = vmatprep.subr.mxu0 0.0
  %1205 = vmatpush1.msra.mxu0 0.0
  %1206 = vmatprep.subr.mxu0 0.0
  %1207 = vmatpush1.msra.mxu0 0.0
  %1208 = vmatprep.subr.mxu0 0.0
  %1209 = vmatpush1.msra.mxu0 0.0
  %1210 = vmatprep.subr.mxu0 0.0
  %1211 = vmatpush1.msra.mxu0 0.0
  %1212 = vmatprep.subr.mxu0 0.0
  %1213 = vmatpush1.msra.mxu0 0.0
  %1214 = vmatprep.subr.mxu0 0.0
  %1215 = vmatpush1.msra.mxu0 0.0
  %1216 = vmatprep.subr.mxu0 0.0
  %1217 = vmatpush1.msra.mxu0 0.0
  %1218 = vmatprep.subr.mxu0 0.0
  %1219 = vmatpush1.msra.mxu0 0.0
  %1220 = vmatprep.subr.mxu0 0.0
  %1221 = vmatpush1.msra.mxu0 0.0
  %1222 = vmatprep.subr.mxu0 0.0
  %1223 = vmatpush1.msra.mxu0 0.0
  %1224 = vmatprep.subr.mxu0 0.0
  %1225 = vmatpush1.msra.mxu0 0.0
  %1226 = vmatprep.subr.mxu0 0.0
  %1227 = vmatpush1.msra.mxu0 0.0
  %1228 = vmatprep.subr.mxu0 0.0
  %1229 = vmatpush1.msra.mxu0 0.0
  %1230 = vmatprep.subr.mxu0 0.0
  %1231 = vmatpush1.msra.mxu0 0.0
  %1232 = vmatprep.subr.mxu0 0.0
  %1233 = vmatpush1.msra.mxu0 0.0
  %1234 = vmatprep.subr.mxu0 0.0
  %1235 = vmatpush1.msra.mxu0 0.0
  %1236 = vmatprep.subr.mxu0 0.0
  %1237 = vmatpush1.msra.mxu0 0.0
  %1238 = vmatprep.subr.mxu0 0.0
  %1239 = vmatpush1.msra.mxu0 0.0
  %1240 = vmatprep.subr.mxu0 0.0
  %1241 = vmatpush1.msra.mxu0 0.0
  %1242 = vmatprep.subr.mxu0 0.0
  %1243 = vmatpush1.msra.mxu0 0.0
  %1244 = vmatprep.subr.mxu0 0.0
  %1245 = vmatpush1.msra.mxu0 0.0
  %1246 = vmatprep.subr.mxu0 0.0
  %1247 = vmatpush1.msra.mxu0 0.0
  %1248 = vmatprep.subr.mxu0 0.0
  %1249 = vmatpush1.msra.mxu0 0.0
  %1250 = vmatprep.subr.mxu0 0.0
  %1251 = vmatpush1.msra.mxu0 0.0
  %1252 = vmatprep.subr.mxu0 0.0
  %1253 = vmatpush1.msra.mxu0 0.0
  %1254 = vmatprep.subr.mxu0 0.0
  %1255 = vmatpush1.msra.mxu0 0.0
  %1256 = vmatprep.mubr.f32.mxu0 0.0
  %1257 = vmatmul.mubr.f32.gmra.mrb[0].mxu0 %v915
  %v1258 = vpop.f32.mrb[0].mxu0
  %v1259 = vadd.f32 0.0, %v1258
  %v1260 = vpop.f32.mrb[0].mxu0
  %1261 = vdwg.mxu0
  %v1262 = vadd.f32 %v1191, %v1259
  %v1263 = vtanh.pop %v1262
  %v1264 = vmul.f32 %v1263, 0.5
  %v1265 = vadd.f32 %v1264, 0.5
  %v1266 = vmul.f32 %v1265, %v905
  %1268 = vrot.lane.b32.xlu0 %v1263, 64
  %v1269 = vpop.permute.xlu0 %1268
  %v1271 = vmul.f32 %v1265, %v1269
  %1273 = vrot.lane.b32.xlu0 %v1271, 32
  %v1274 = vpop.permute.xlu0 %1273
  %v1276 = vadd.f32 %v1266, %v1274
  %v1277 = vtanh.pop %v1276
  %1279 = vrot.lane.b32.xlu0 %v1277, 64
  %v1280 = vpop.permute.xlu0 %1279
  %v1282 = vmul.f32 %v1265, %v1280
  %1284 = vrot.lane.b32.xlu0 %v1282, 32
  %v1285 = vpop.permute.xlu0 %1284
  %v1286 = vsel %vm69, %v1285, 0
  %1288 = vmatprep.subr.mxu0 0.0
  %1289 = vmatpush1.msra.mxu0 %v40
  %1290 = vmatprep.subr.mxu0 0.0
  %1291 = vmatpush1.msra.mxu0 %v41
  %1292 = vmatprep.subr.mxu0 0.0
  %1293 = vmatpush1.msra.mxu0 %v42
  %1294 = vmatprep.subr.mxu0 0.0
  %1295 = vmatpush1.msra.mxu0 %v43
  %1296 = vmatprep.subr.mxu0 0.0
  %1297 = vmatpush1.msra.mxu0 0.0
  %1298 = vmatprep.subr.mxu0 0.0
  %1299 = vmatpush1.msra.mxu0 0.0
  %1300 = vmatprep.subr.mxu0 0.0
  %1301 = vmatpush1.msra.mxu0 0.0
  %1302 = vmatprep.subr.mxu0 0.0
  %1303 = vmatpush1.msra.mxu0 0.0
  %1304 = vmatprep.subr.mxu0 0.0
  %1305 = vmatpush1.msra.mxu0 0.0
  %1306 = vmatprep.subr.mxu0 0.0
  %1307 = vmatpush1.msra.mxu0 0.0
  %1308 = vmatprep.subr.mxu0 0.0
  %1309 = vmatpush1.msra.mxu0 0.0
  %1310 = vmatprep.subr.mxu0 0.0
  %1311 = vmatpush1.msra.mxu0 0.0
  %1312 = vmatprep.subr.mxu0 0.0
  %1313 = vmatpush1.msra.mxu0 0.0
  %1314 = vmatprep.subr.mxu0 0.0
  %1315 = vmatpush1.msra.mxu0 0.0
  %1316 = vmatprep.subr.mxu0 0.0
  %1317 = vmatpush1.msra.mxu0 0.0
  %1318 = vmatprep.subr.mxu0 0.0
  %1319 = vmatpush1.msra.mxu0 0.0
  %1320 = vmatprep.subr.mxu0 0.0
  %1321 = vmatpush1.msra.mxu0 0.0
  %1322 = vmatprep.subr.mxu0 0.0
  %1323 = vmatpush1.msra.mxu0 0.0
  %1324 = vmatprep.subr.mxu0 0.0
  %1325 = vmatpush1.msra.mxu0 0.0
  %1326 = vmatprep.subr.mxu0 0.0
  %1327 = vmatpush1.msra.mxu0 0.0
  %1328 = vmatprep.subr.mxu0 0.0
  %1329 = vmatpush1.msra.mxu0 0.0
  %1330 = vmatprep.subr.mxu0 0.0
  %1331 = vmatpush1.msra.mxu0 0.0
  %1332 = vmatprep.subr.mxu0 0.0
  %1333 = vmatpush1.msra.mxu0 0.0
  %1334 = vmatprep.subr.mxu0 0.0
  %1335 = vmatpush1.msra.mxu0 0.0
  %1336 = vmatprep.subr.mxu0 0.0
  %1337 = vmatpush1.msra.mxu0 0.0
  %1338 = vmatprep.subr.mxu0 0.0
  %1339 = vmatpush1.msra.mxu0 0.0
  %1340 = vmatprep.subr.mxu0 0.0
  %1341 = vmatpush1.msra.mxu0 0.0
  %1342 = vmatprep.subr.mxu0 0.0
  %1343 = vmatpush1.msra.mxu0 0.0
  %1344 = vmatprep.subr.mxu0 0.0
  %1345 = vmatpush1.msra.mxu0 0.0
  %1346 = vmatprep.subr.mxu0 0.0
  %1347 = vmatpush1.msra.mxu0 0.0
  %1348 = vmatprep.subr.mxu0 0.0
  %1349 = vmatpush1.msra.mxu0 0.0
  %1350 = vmatprep.subr.mxu0 0.0
  %1351 = vmatpush1.msra.mxu0 0.0
  %1352 = vmatprep.mubr.f32.mxu0 0.0
  %1353 = vmatmul.mubr.f32.gmra.mrb[0].mxu0 %v1286
  %v1354 = vpop.f32.mrb[0].mxu0
  %v1355 = vadd.f32 0.0, %v1354
  %v1356 = vpop.f32.mrb[0].mxu0
  %1357 = vdwg.mxu0
  %1359 = vrot.lane.b32.xlu0 %v1082, 32
  %v1360 = vpop.permute.xlu0 %1359
  %v1361 = vsel %vm69, %v1360, 0
  %1363 = vmatprep.subr.mxu0 0.0
  %1364 = vmatpush1.msra.mxu0 %v44
  %1365 = vmatprep.subr.mxu0 0.0
  %1366 = vmatpush1.msra.mxu0 %v45
  %1367 = vmatprep.subr.mxu0 0.0
  %1368 = vmatpush1.msra.mxu0 %v46
  %1369 = vmatprep.subr.mxu0 0.0
  %1370 = vmatpush1.msra.mxu0 %v47
  %1371 = vmatprep.subr.mxu0 0.0
  %1372 = vmatpush1.msra.mxu0 0.0
  %1373 = vmatprep.subr.mxu0 0.0
  %1374 = vmatpush1.msra.mxu0 0.0
  %1375 = vmatprep.subr.mxu0 0.0
  %1376 = vmatpush1.msra.mxu0 0.0
  %1377 = vmatprep.subr.mxu0 0.0
  %1378 = vmatpush1.msra.mxu0 0.0
  %1379 = vmatprep.subr.mxu0 0.0
  %1380 = vmatpush1.msra.mxu0 0.0
  %1381 = vmatprep.subr.mxu0 0.0
  %1382 = vmatpush1.msra.mxu0 0.0
  %1383 = vmatprep.subr.mxu0 0.0
  %1384 = vmatpush1.msra.mxu0 0.0
  %1385 = vmatprep.subr.mxu0 0.0
  %1386 = vmatpush1.msra.mxu0 0.0
  %1387 = vmatprep.subr.mxu0 0.0
  %1388 = vmatpush1.msra.mxu0 0.0
  %1389 = vmatprep.subr.mxu0 0.0
  %1390 = vmatpush1.msra.mxu0 0.0
  %1391 = vmatprep.subr.mxu0 0.0
  %1392 = vmatpush1.msra.mxu0 0.0
  %1393 = vmatprep.subr.mxu0 0.0
  %1394 = vmatpush1.msra.mxu0 0.0
  %1395 = vmatprep.subr.mxu0 0.0
  %1396 = vmatpush1.msra.mxu0 0.0
  %1397 = vmatprep.subr.mxu0 0.0
  %1398 = vmatpush1.msra.mxu0 0.0
  %1399 = vmatprep.subr.mxu0 0.0
  %1400 = vmatpush1.msra.mxu0 0.0
  %1401 = vmatprep.subr.mxu0 0.0
  %1402 = vmatpush1.msra.mxu0 0.0
  %1403 = vmatprep.subr.mxu0 0.0
  %1404 = vmatpush1.msra.mxu0 0.0
  %1405 = vmatprep.subr.mxu0 0.0
  %1406 = vmatpush1.msra.mxu0 0.0
  %1407 = vmatprep.subr.mxu0 0.0
  %1408 = vmatpush1.msra.mxu0 0.0
  %1409 = vmatprep.subr.mxu0 0.0
  %1410 = vmatpush1.msra.mxu0 0.0
  %1411 = vmatprep.subr.mxu0 0.0
  %1412 = vmatpush1.msra.mxu0 0.0
  %1413 = vmatprep.subr.mxu0 0.0
  %1414 = vmatpush1.msra.mxu0 0.0
  %1415 = vmatprep.subr.mxu0 0.0
  %1416 = vmatpush1.msra.mxu0 0.0
  %1417 = vmatprep.subr.mxu0 0.0
  %1418 = vmatpush1.msra.mxu0 0.0
  %1419 = vmatprep.subr.mxu0 0.0
  %1420 = vmatpush1.msra.mxu0 0.0
  %1421 = vmatprep.subr.mxu0 0.0
  %1422 = vmatpush1.msra.mxu0 0.0
  %1423 = vmatprep.subr.mxu0 0.0
  %1424 = vmatpush1.msra.mxu0 0.0
  %1425 = vmatprep.subr.mxu0 0.0
  %1426 = vmatpush1.msra.mxu0 0.0
  %1427 = vmatprep.mubr.f32.mxu0 0.0
  %1428 = vmatmul.mubr.f32.gmra.mrb[0].mxu0 %v1361
  %v1429 = vpop.f32.mrb[0].mxu0
  %v1430 = vadd.f32 %v1355, %v1429
  %v1431 = vpop.f32.mrb[0].mxu0
  %1432 = vdwg.mxu0
  %v1433 = vadd.f32 %v1430, %v313
  %v1434 = vtanh.pop %v1433
  %v1435 = vmul.f32 %v1434, 0.5
  %v1436 = vadd.f32 %v1435, 0.5
  %v1437 = vmul.f32 %v1436, %v1076
  %1439 = vrot.lane.b32.xlu0 %v1434, 64
  %v1440 = vpop.permute.xlu0 %1439
  %v1442 = vmul.f32 %v1436, %v1440
  %1444 = vrot.lane.b32.xlu0 %v1442, 32
  %v1445 = vpop.permute.xlu0 %1444
  %v1447 = vadd.f32 %v1437, %v1445
  %v1448 = vtanh.pop %v1447
  %1450 = vrot.lane.b32.xlu0 %v1448, 64
  %v1451 = vpop.permute.xlu0 %1450
  %v1453 = vmul.f32 %v1436, %v1451
  %v1454 = vmax.f32 %v1453, 0.0
  %1456 = vrot.lane.b32.xlu0 %v1454, 32
  %v1457 = vpop.permute.xlu0 %1456
  %v1458 = vsel %vm69, %v1457, 0
  %1460 = vmatprep.subr.mxu0 0.0
  %1461 = vmatpush1.msra.mxu0 %v49
  %1462 = vmatprep.subr.mxu0 0.0
  %1463 = vmatpush1.msra.mxu0 %v50
  %1464 = vmatprep.subr.mxu0 0.0
  %1465 = vmatpush1.msra.mxu0 %v51
  %1466 = vmatprep.subr.mxu0 0.0
  %1467 = vmatpush1.msra.mxu0 %v52
  %1468 = vmatprep.subr.mxu0 0.0
  %1469 = vmatpush1.msra.mxu0 0.0
  %1470 = vmatprep.subr.mxu0 0.0
  %1471 = vmatpush1.msra.mxu0 0.0
  %1472 = vmatprep.subr.mxu0 0.0
  %1473 = vmatpush1.msra.mxu0 0.0
  %1474 = vmatprep.subr.mxu0 0.0
  %1475 = vmatpush1.msra.mxu0 0.0
  %1476 = vmatprep.subr.mxu0 0.0
  %1477 = vmatpush1.msra.mxu0 0.0
  %1478 = vmatprep.subr.mxu0 0.0
  %1479 = vmatpush1.msra.mxu0 0.0
  %1480 = vmatprep.subr.mxu0 0.0
  %1481 = vmatpush1.msra.mxu0 0.0
  %1482 = vmatprep.subr.mxu0 0.0
  %1483 = vmatpush1.msra.mxu0 0.0
  %1484 = vmatprep.subr.mxu0 0.0
  %1485 = vmatpush1.msra.mxu0 0.0
  %1486 = vmatprep.subr.mxu0 0.0
  %1487 = vmatpush1.msra.mxu0 0.0
  %1488 = vmatprep.subr.mxu0 0.0
  %1489 = vmatpush1.msra.mxu0 0.0
  %1490 = vmatprep.subr.mxu0 0.0
  %1491 = vmatpush1.msra.mxu0 0.0
  %1492 = vmatprep.subr.mxu0 0.0
  %1493 = vmatpush1.msra.mxu0 0.0
  %1494 = vmatprep.subr.mxu0 0.0
  %1495 = vmatpush1.msra.mxu0 0.0
  %1496 = vmatprep.subr.mxu0 0.0
  %1497 = vmatpush1.msra.mxu0 0.0
  %1498 = vmatprep.subr.mxu0 0.0
  %1499 = vmatpush1.msra.mxu0 0.0
  %1500 = vmatprep.subr.mxu0 0.0
  %1501 = vmatpush1.msra.mxu0 0.0
  %1502 = vmatprep.subr.mxu0 0.0
  %1503 = vmatpush1.msra.mxu0 0.0
  %1504 = vmatprep.subr.mxu0 0.0
  %1505 = vmatpush1.msra.mxu0 0.0
  %1506 = vmatprep.subr.mxu0 0.0
  %1507 = vmatpush1.msra.mxu0 0.0
  %1508 = vmatprep.subr.mxu0 0.0
  %1509 = vmatpush1.msra.mxu0 0.0
  %1510 = vmatprep.subr.mxu0 0.0
  %1511 = vmatpush1.msra.mxu0 0.0
  %1512 = vmatprep.subr.mxu0 0.0
  %1513 = vmatpush1.msra.mxu0 0.0
  %1514 = vmatprep.subr.mxu0 0.0
  %1515 = vmatpush1.msra.mxu0 0.0
  %1516 = vmatprep.subr.mxu0 0.0
  %1517 = vmatpush1.msra.mxu0 0.0
  %1518 = vmatprep.subr.mxu0 0.0
  %1519 = vmatpush1.msra.mxu0 0.0
  %1520 = vmatprep.subr.mxu0 0.0
  %1521 = vmatpush1.msra.mxu0 0.0
  %1522 = vmatprep.subr.mxu0 0.0
  %1523 = vmatpush1.msra.mxu0 0.0
  %1524 = vmatprep.mubr.f32.mxu0 0.0
  %1525 = vmatmul.mubr.f32.gmra.mrb[0].mxu0 %v1458
  %v1526 = vpop.f32.mrb[0].mxu0
  %v1527 = vadd.f32 %v341, %v1526
  %v1528 = vpop.f32.mrb[0].mxu0
  %1529 = vdwg.mxu0
  %v1530 = vmax.f32 %v1527, 0.0
  %v1531 = vand.u32 2147483647, %v1527
  %v1532 = vsub.f32 0.0, %v1531
  %v1533 = vmul.f32 %v1532, 1.442695
  %v1534 = vpow.pop %v1533
  %v1535 = vadd.f32 %v1534, 1.0
  %v1536 = vlog2.pop %v1535
  %v1537 = vmul.f32 %v1536, 0.6931472
  %v1538 = vadd.f32 %v1530, %v1537
  %v1539 = vadd.f32 %v1538, 1e-06
  %s1540 = scalar_lea.vmem %s2, 24
  %v1541 = vld [vmem:[%s1540] sm:$0xff]
  %1543 = vrot.lane.b32.xlu0 %v1541, 1
  %v1544 = vpop.permute.xlu0 %1543
  %v1546 = vmul.f32 %v1539, %v1544
  %1548 = vrot.lane.b32.xlu0 %v1546, 127
  %v1549 = vpop.permute.xlu0 %1548
  %v1551 = vadd.f32 %v1527, %v1549
  %s1552 = scalar_lea.vmem %s1, 32
  %v1553 = vld [vmem:[%s1552] sm:$0xff]
  %s1554 = scalar_lea.vmem %s0, 32
  %v1555 = vld [vmem:[%s1554] sm:$0xff]
  %1557 = vset.pattern.permute.xlu0 0
  %1558 = vperm.xlu0 %1557, %v1553
  %v1559 = vpop.permute.xlu0 %1558
  %v1561 = vmul.f32 %v1559, %v65
  %v1562 = vadd.f32 %v1555, %v1561
  %1563 = vmatprep.subr.mxu0 0.0
  %1564 = vmatpush1.msra.mxu0 %v36
  %1565 = vmatprep.subr.mxu0 0.0
  %1566 = vmatpush1.msra.mxu0 %v37
  %1567 = vmatprep.subr.mxu0 0.0
  %1568 = vmatpush1.msra.mxu0 %v38
  %1569 = vmatprep.subr.mxu0 0.0
  %1570 = vmatpush1.msra.mxu0 %v39
  %1571 = vmatprep.subr.mxu0 0.0
  %1572 = vmatpush1.msra.mxu0 0.0
  %1573 = vmatprep.subr.mxu0 0.0
  %1574 = vmatpush1.msra.mxu0 0.0
  %1575 = vmatprep.subr.mxu0 0.0
  %1576 = vmatpush1.msra.mxu0 0.0
  %1577 = vmatprep.subr.mxu0 0.0
  %1578 = vmatpush1.msra.mxu0 0.0
  %1579 = vmatprep.subr.mxu0 0.0
  %1580 = vmatpush1.msra.mxu0 0.0
  %1581 = vmatprep.subr.mxu0 0.0
  %1582 = vmatpush1.msra.mxu0 0.0
  %1583 = vmatprep.subr.mxu0 0.0
  %1584 = vmatpush1.msra.mxu0 0.0
  %1585 = vmatprep.subr.mxu0 0.0
  %1586 = vmatpush1.msra.mxu0 0.0
  %1587 = vmatprep.subr.mxu0 0.0
  %1588 = vmatpush1.msra.mxu0 0.0
  %1589 = vmatprep.subr.mxu0 0.0
  %1590 = vmatpush1.msra.mxu0 0.0
  %1591 = vmatprep.subr.mxu0 0.0
  %1592 = vmatpush1.msra.mxu0 0.0
  %1593 = vmatprep.subr.mxu0 0.0
  %1594 = vmatpush1.msra.mxu0 0.0
  %1595 = vmatprep.subr.mxu0 0.0
  %1596 = vmatpush1.msra.mxu0 0.0
  %1597 = vmatprep.subr.mxu0 0.0
  %1598 = vmatpush1.msra.mxu0 0.0
  %1599 = vmatprep.subr.mxu0 0.0
  %1600 = vmatpush1.msra.mxu0 0.0
  %1601 = vmatprep.subr.mxu0 0.0
  %1602 = vmatpush1.msra.mxu0 0.0
  %1603 = vmatprep.subr.mxu0 0.0
  %1604 = vmatpush1.msra.mxu0 0.0
  %1605 = vmatprep.subr.mxu0 0.0
  %1606 = vmatpush1.msra.mxu0 0.0
  %1607 = vmatprep.subr.mxu0 0.0
  %1608 = vmatpush1.msra.mxu0 0.0
  %1609 = vmatprep.subr.mxu0 0.0
  %1610 = vmatpush1.msra.mxu0 0.0
  %1611 = vmatprep.subr.mxu0 0.0
  %1612 = vmatpush1.msra.mxu0 0.0
  %1613 = vmatprep.subr.mxu0 0.0
  %1614 = vmatpush1.msra.mxu0 0.0
  %1615 = vmatprep.subr.mxu0 0.0
  %1616 = vmatpush1.msra.mxu0 0.0
  %1617 = vmatprep.subr.mxu0 0.0
  %1618 = vmatpush1.msra.mxu0 0.0
  %1619 = vmatprep.subr.mxu0 0.0
  %1620 = vmatpush1.msra.mxu0 0.0
  %1621 = vmatprep.subr.mxu0 0.0
  %1622 = vmatpush1.msra.mxu0 0.0
  %1623 = vmatprep.subr.mxu0 0.0
  %1624 = vmatpush1.msra.mxu0 0.0
  %1625 = vmatprep.subr.mxu0 0.0
  %1626 = vmatpush1.msra.mxu0 0.0
  %1627 = vmatprep.mubr.f32.mxu0 0.0
  %1628 = vmatmul.mubr.f32.gmra.mrb[0].mxu0 %v1286
  %v1629 = vpop.f32.mrb[0].mxu0
  %v1630 = vadd.f32 0.0, %v1629
  %v1631 = vpop.f32.mrb[0].mxu0
  %1632 = vdwg.mxu0
  %v1633 = vadd.f32 %v1562, %v1630
  %v1634 = vtanh.pop %v1633
  %v1635 = vmul.f32 %v1634, 0.5
  %v1636 = vadd.f32 %v1635, 0.5
  %v1637 = vmul.f32 %v1636, %v1276
  %1639 = vrot.lane.b32.xlu0 %v1634, 64
  %v1640 = vpop.permute.xlu0 %1639
  %v1642 = vmul.f32 %v1636, %v1640
  %1644 = vrot.lane.b32.xlu0 %v1642, 32
  %v1645 = vpop.permute.xlu0 %1644
  %v1647 = vadd.f32 %v1637, %v1645
  %v1648 = vtanh.pop %v1647
  %1650 = vrot.lane.b32.xlu0 %v1648, 64
  %v1651 = vpop.permute.xlu0 %1650
  %v1653 = vmul.f32 %v1636, %v1651
  %1655 = vrot.lane.b32.xlu0 %v1653, 32
  %v1656 = vpop.permute.xlu0 %1655
  %v1657 = vsel %vm69, %v1656, 0
  %1659 = vmatprep.subr.mxu0 0.0
  %1660 = vmatpush1.msra.mxu0 %v40
  %1661 = vmatprep.subr.mxu0 0.0
  %1662 = vmatpush1.msra.mxu0 %v41
  %1663 = vmatprep.subr.mxu0 0.0
  %1664 = vmatpush1.msra.mxu0 %v42
  %1665 = vmatprep.subr.mxu0 0.0
  %1666 = vmatpush1.msra.mxu0 %v43
  %1667 = vmatprep.subr.mxu0 0.0
  %1668 = vmatpush1.msra.mxu0 0.0
  %1669 = vmatprep.subr.mxu0 0.0
  %1670 = vmatpush1.msra.mxu0 0.0
  %1671 = vmatprep.subr.mxu0 0.0
  %1672 = vmatpush1.msra.mxu0 0.0
  %1673 = vmatprep.subr.mxu0 0.0
  %1674 = vmatpush1.msra.mxu0 0.0
  %1675 = vmatprep.subr.mxu0 0.0
  %1676 = vmatpush1.msra.mxu0 0.0
  %1677 = vmatprep.subr.mxu0 0.0
  %1678 = vmatpush1.msra.mxu0 0.0
  %1679 = vmatprep.subr.mxu0 0.0
  %1680 = vmatpush1.msra.mxu0 0.0
  %1681 = vmatprep.subr.mxu0 0.0
  %1682 = vmatpush1.msra.mxu0 0.0
  %1683 = vmatprep.subr.mxu0 0.0
  %1684 = vmatpush1.msra.mxu0 0.0
  %1685 = vmatprep.subr.mxu0 0.0
  %1686 = vmatpush1.msra.mxu0 0.0
  %1687 = vmatprep.subr.mxu0 0.0
  %1688 = vmatpush1.msra.mxu0 0.0
  %1689 = vmatprep.subr.mxu0 0.0
  %1690 = vmatpush1.msra.mxu0 0.0
  %1691 = vmatprep.subr.mxu0 0.0
  %1692 = vmatpush1.msra.mxu0 0.0
  %1693 = vmatprep.subr.mxu0 0.0
  %1694 = vmatpush1.msra.mxu0 0.0
  %1695 = vmatprep.subr.mxu0 0.0
  %1696 = vmatpush1.msra.mxu0 0.0
  %1697 = vmatprep.subr.mxu0 0.0
  %1698 = vmatpush1.msra.mxu0 0.0
  %1699 = vmatprep.subr.mxu0 0.0
  %1700 = vmatpush1.msra.mxu0 0.0
  %1701 = vmatprep.subr.mxu0 0.0
  %1702 = vmatpush1.msra.mxu0 0.0
  %1703 = vmatprep.subr.mxu0 0.0
  %1704 = vmatpush1.msra.mxu0 0.0
  %1705 = vmatprep.subr.mxu0 0.0
  %1706 = vmatpush1.msra.mxu0 0.0
  %1707 = vmatprep.subr.mxu0 0.0
  %1708 = vmatpush1.msra.mxu0 0.0
  %1709 = vmatprep.subr.mxu0 0.0
  %1710 = vmatpush1.msra.mxu0 0.0
  %1711 = vmatprep.subr.mxu0 0.0
  %1712 = vmatpush1.msra.mxu0 0.0
  %1713 = vmatprep.subr.mxu0 0.0
  %1714 = vmatpush1.msra.mxu0 0.0
  %1715 = vmatprep.subr.mxu0 0.0
  %1716 = vmatpush1.msra.mxu0 0.0
  %1717 = vmatprep.subr.mxu0 0.0
  %1718 = vmatpush1.msra.mxu0 0.0
  %1719 = vmatprep.subr.mxu0 0.0
  %1720 = vmatpush1.msra.mxu0 0.0
  %1721 = vmatprep.subr.mxu0 0.0
  %1722 = vmatpush1.msra.mxu0 0.0
  %1723 = vmatprep.mubr.f32.mxu0 0.0
  %1724 = vmatmul.mubr.f32.gmra.mrb[0].mxu0 %v1657
  %v1725 = vpop.f32.mrb[0].mxu0
  %v1726 = vadd.f32 0.0, %v1725
  %v1727 = vpop.f32.mrb[0].mxu0
  %1728 = vdwg.mxu0
  %1730 = vrot.lane.b32.xlu0 %v1453, 32
  %v1731 = vpop.permute.xlu0 %1730
  %v1732 = vsel %vm69, %v1731, 0
  %1734 = vmatprep.subr.mxu0 0.0
  %1735 = vmatpush1.msra.mxu0 %v44
  %1736 = vmatprep.subr.mxu0 0.0
  %1737 = vmatpush1.msra.mxu0 %v45
  %1738 = vmatprep.subr.mxu0 0.0
  %1739 = vmatpush1.msra.mxu0 %v46
  %1740 = vmatprep.subr.mxu0 0.0
  %1741 = vmatpush1.msra.mxu0 %v47
  %1742 = vmatprep.subr.mxu0 0.0
  %1743 = vmatpush1.msra.mxu0 0.0
  %1744 = vmatprep.subr.mxu0 0.0
  %1745 = vmatpush1.msra.mxu0 0.0
  %1746 = vmatprep.subr.mxu0 0.0
  %1747 = vmatpush1.msra.mxu0 0.0
  %1748 = vmatprep.subr.mxu0 0.0
  %1749 = vmatpush1.msra.mxu0 0.0
  %1750 = vmatprep.subr.mxu0 0.0
  %1751 = vmatpush1.msra.mxu0 0.0
  %1752 = vmatprep.subr.mxu0 0.0
  %1753 = vmatpush1.msra.mxu0 0.0
  %1754 = vmatprep.subr.mxu0 0.0
  %1755 = vmatpush1.msra.mxu0 0.0
  %1756 = vmatprep.subr.mxu0 0.0
  %1757 = vmatpush1.msra.mxu0 0.0
  %1758 = vmatprep.subr.mxu0 0.0
  %1759 = vmatpush1.msra.mxu0 0.0
  %1760 = vmatprep.subr.mxu0 0.0
  %1761 = vmatpush1.msra.mxu0 0.0
  %1762 = vmatprep.subr.mxu0 0.0
  %1763 = vmatpush1.msra.mxu0 0.0
  %1764 = vmatprep.subr.mxu0 0.0
  %1765 = vmatpush1.msra.mxu0 0.0
  %1766 = vmatprep.subr.mxu0 0.0
  %1767 = vmatpush1.msra.mxu0 0.0
  %1768 = vmatprep.subr.mxu0 0.0
  %1769 = vmatpush1.msra.mxu0 0.0
  %1770 = vmatprep.subr.mxu0 0.0
  %1771 = vmatpush1.msra.mxu0 0.0
  %1772 = vmatprep.subr.mxu0 0.0
  %1773 = vmatpush1.msra.mxu0 0.0
  %1774 = vmatprep.subr.mxu0 0.0
  %1775 = vmatpush1.msra.mxu0 0.0
  %1776 = vmatprep.subr.mxu0 0.0
  %1777 = vmatpush1.msra.mxu0 0.0
  %1778 = vmatprep.subr.mxu0 0.0
  %1779 = vmatpush1.msra.mxu0 0.0
  %1780 = vmatprep.subr.mxu0 0.0
  %1781 = vmatpush1.msra.mxu0 0.0
  %1782 = vmatprep.subr.mxu0 0.0
  %1783 = vmatpush1.msra.mxu0 0.0
  %1784 = vmatprep.subr.mxu0 0.0
  %1785 = vmatpush1.msra.mxu0 0.0
  %1786 = vmatprep.subr.mxu0 0.0
  %1787 = vmatpush1.msra.mxu0 0.0
  %1788 = vmatprep.subr.mxu0 0.0
  %1789 = vmatpush1.msra.mxu0 0.0
  %1790 = vmatprep.subr.mxu0 0.0
  %1791 = vmatpush1.msra.mxu0 0.0
  %1792 = vmatprep.subr.mxu0 0.0
  %1793 = vmatpush1.msra.mxu0 0.0
  %1794 = vmatprep.subr.mxu0 0.0
  %1795 = vmatpush1.msra.mxu0 0.0
  %1796 = vmatprep.subr.mxu0 0.0
  %1797 = vmatpush1.msra.mxu0 0.0
  %1798 = vmatprep.mubr.f32.mxu0 0.0
  %1799 = vmatmul.mubr.f32.gmra.mrb[0].mxu0 %v1732
  %v1800 = vpop.f32.mrb[0].mxu0
  %v1801 = vadd.f32 %v1726, %v1800
  %v1802 = vpop.f32.mrb[0].mxu0
  %1803 = vdwg.mxu0
  %v1804 = vadd.f32 %v1801, %v313
  %v1805 = vtanh.pop %v1804
  %v1806 = vmul.f32 %v1805, 0.5
  %v1807 = vadd.f32 %v1806, 0.5
  %v1808 = vmul.f32 %v1807, %v1447
  %1810 = vrot.lane.b32.xlu0 %v1805, 64
  %v1811 = vpop.permute.xlu0 %1810
  %v1813 = vmul.f32 %v1807, %v1811
  %1815 = vrot.lane.b32.xlu0 %v1813, 32
  %v1816 = vpop.permute.xlu0 %1815
  %v1818 = vadd.f32 %v1808, %v1816
  %v1819 = vtanh.pop %v1818
  %1821 = vrot.lane.b32.xlu0 %v1819, 64
  %v1822 = vpop.permute.xlu0 %1821
  %v1824 = vmul.f32 %v1807, %v1822
  %v1825 = vmax.f32 %v1824, 0.0
  %1827 = vrot.lane.b32.xlu0 %v1825, 32
  %v1828 = vpop.permute.xlu0 %1827
  %v1829 = vsel %vm69, %v1828, 0
  %1831 = vmatprep.subr.mxu0 0.0
  %1832 = vmatpush1.msra.mxu0 %v49
  %1833 = vmatprep.subr.mxu0 0.0
  %1834 = vmatpush1.msra.mxu0 %v50
  %1835 = vmatprep.subr.mxu0 0.0
  %1836 = vmatpush1.msra.mxu0 %v51
  %1837 = vmatprep.subr.mxu0 0.0
  %1838 = vmatpush1.msra.mxu0 %v52
  %1839 = vmatprep.subr.mxu0 0.0
  %1840 = vmatpush1.msra.mxu0 0.0
  %1841 = vmatprep.subr.mxu0 0.0
  %1842 = vmatpush1.msra.mxu0 0.0
  %1843 = vmatprep.subr.mxu0 0.0
  %1844 = vmatpush1.msra.mxu0 0.0
  %1845 = vmatprep.subr.mxu0 0.0
  %1846 = vmatpush1.msra.mxu0 0.0
  %1847 = vmatprep.subr.mxu0 0.0
  %1848 = vmatpush1.msra.mxu0 0.0
  %1849 = vmatprep.subr.mxu0 0.0
  %1850 = vmatpush1.msra.mxu0 0.0
  %1851 = vmatprep.subr.mxu0 0.0
  %1852 = vmatpush1.msra.mxu0 0.0
  %1853 = vmatprep.subr.mxu0 0.0
  %1854 = vmatpush1.msra.mxu0 0.0
  %1855 = vmatprep.subr.mxu0 0.0
  %1856 = vmatpush1.msra.mxu0 0.0
  %1857 = vmatprep.subr.mxu0 0.0
  %1858 = vmatpush1.msra.mxu0 0.0
  %1859 = vmatprep.subr.mxu0 0.0
  %1860 = vmatpush1.msra.mxu0 0.0
  %1861 = vmatprep.subr.mxu0 0.0
  %1862 = vmatpush1.msra.mxu0 0.0
  %1863 = vmatprep.subr.mxu0 0.0
  %1864 = vmatpush1.msra.mxu0 0.0
  %1865 = vmatprep.subr.mxu0 0.0
  %1866 = vmatpush1.msra.mxu0 0.0
  %1867 = vmatprep.subr.mxu0 0.0
  %1868 = vmatpush1.msra.mxu0 0.0
  %1869 = vmatprep.subr.mxu0 0.0
  %1870 = vmatpush1.msra.mxu0 0.0
  %1871 = vmatprep.subr.mxu0 0.0
  %1872 = vmatpush1.msra.mxu0 0.0
  %1873 = vmatprep.subr.mxu0 0.0
  %1874 = vmatpush1.msra.mxu0 0.0
  %1875 = vmatprep.subr.mxu0 0.0
  %1876 = vmatpush1.msra.mxu0 0.0
  %1877 = vmatprep.subr.mxu0 0.0
  %1878 = vmatpush1.msra.mxu0 0.0
  %1879 = vmatprep.subr.mxu0 0.0
  %1880 = vmatpush1.msra.mxu0 0.0
  %1881 = vmatprep.subr.mxu0 0.0
  %1882 = vmatpush1.msra.mxu0 0.0
  %1883 = vmatprep.subr.mxu0 0.0
  %1884 = vmatpush1.msra.mxu0 0.0
  %1885 = vmatprep.subr.mxu0 0.0
  %1886 = vmatpush1.msra.mxu0 0.0
  %1887 = vmatprep.subr.mxu0 0.0
  %1888 = vmatpush1.msra.mxu0 0.0
  %1889 = vmatprep.subr.mxu0 0.0
  %1890 = vmatpush1.msra.mxu0 0.0
  %1891 = vmatprep.subr.mxu0 0.0
  %1892 = vmatpush1.msra.mxu0 0.0
  %1893 = vmatprep.subr.mxu0 0.0
  %1894 = vmatpush1.msra.mxu0 0.0
  %1895 = vmatprep.mubr.f32.mxu0 0.0
  %1896 = vmatmul.mubr.f32.gmra.mrb[0].mxu0 %v1829
  %v1897 = vpop.f32.mrb[0].mxu0
  %v1898 = vadd.f32 %v341, %v1897
  %v1899 = vpop.f32.mrb[0].mxu0
  %1900 = vdwg.mxu0
  %v1901 = vmax.f32 %v1898, 0.0
  %v1902 = vand.u32 2147483647, %v1898
  %v1903 = vsub.f32 0.0, %v1902
  %v1904 = vmul.f32 %v1903, 1.442695
  %v1905 = vpow.pop %v1904
  %v1906 = vadd.f32 %v1905, 1.0
  %v1907 = vlog2.pop %v1906
  %v1908 = vmul.f32 %v1907, 0.6931472
  %v1909 = vadd.f32 %v1901, %v1908
  %v1910 = vadd.f32 %v1909, 1e-06
  %s1911 = scalar_lea.vmem %s2, 32
  %v1912 = vld [vmem:[%s1911] sm:$0xff]
  %1914 = vrot.lane.b32.xlu0 %v1912, 1
  %v1915 = vpop.permute.xlu0 %1914
  %v1917 = vmul.f32 %v1910, %v1915
  %1919 = vrot.lane.b32.xlu0 %v1917, 127
  %v1920 = vpop.permute.xlu0 %1919
  %v1922 = vadd.f32 %v1898, %v1920
  %s1923 = scalar_lea.vmem %s1, 40
  %v1924 = vld [vmem:[%s1923] sm:$0xff]
  %s1925 = scalar_lea.vmem %s0, 40
  %v1926 = vld [vmem:[%s1925] sm:$0xff]
  %1928 = vset.pattern.permute.xlu0 0
  %1929 = vperm.xlu0 %1928, %v1924
  %v1930 = vpop.permute.xlu0 %1929
  %v1932 = vmul.f32 %v1930, %v65
  %v1933 = vadd.f32 %v1926, %v1932
  %1934 = vmatprep.subr.mxu0 0.0
  %1935 = vmatpush1.msra.mxu0 %v36
  %1936 = vmatprep.subr.mxu0 0.0
  %1937 = vmatpush1.msra.mxu0 %v37
  %1938 = vmatprep.subr.mxu0 0.0
  %1939 = vmatpush1.msra.mxu0 %v38
  %1940 = vmatprep.subr.mxu0 0.0
  %1941 = vmatpush1.msra.mxu0 %v39
  %1942 = vmatprep.subr.mxu0 0.0
  %1943 = vmatpush1.msra.mxu0 0.0
  %1944 = vmatprep.subr.mxu0 0.0
  %1945 = vmatpush1.msra.mxu0 0.0
  %1946 = vmatprep.subr.mxu0 0.0
  %1947 = vmatpush1.msra.mxu0 0.0
  %1948 = vmatprep.subr.mxu0 0.0
  %1949 = vmatpush1.msra.mxu0 0.0
  %1950 = vmatprep.subr.mxu0 0.0
  %1951 = vmatpush1.msra.mxu0 0.0
  %1952 = vmatprep.subr.mxu0 0.0
  %1953 = vmatpush1.msra.mxu0 0.0
  %1954 = vmatprep.subr.mxu0 0.0
  %1955 = vmatpush1.msra.mxu0 0.0
  %1956 = vmatprep.subr.mxu0 0.0
  %1957 = vmatpush1.msra.mxu0 0.0
  %1958 = vmatprep.subr.mxu0 0.0
  %1959 = vmatpush1.msra.mxu0 0.0
  %1960 = vmatprep.subr.mxu0 0.0
  %1961 = vmatpush1.msra.mxu0 0.0
  %1962 = vmatprep.subr.mxu0 0.0
  %1963 = vmatpush1.msra.mxu0 0.0
  %1964 = vmatprep.subr.mxu0 0.0
  %1965 = vmatpush1.msra.mxu0 0.0
  %1966 = vmatprep.subr.mxu0 0.0
  %1967 = vmatpush1.msra.mxu0 0.0
  %1968 = vmatprep.subr.mxu0 0.0
  %1969 = vmatpush1.msra.mxu0 0.0
  %1970 = vmatprep.subr.mxu0 0.0
  %1971 = vmatpush1.msra.mxu0 0.0
  %1972 = vmatprep.subr.mxu0 0.0
  %1973 = vmatpush1.msra.mxu0 0.0
  %1974 = vmatprep.subr.mxu0 0.0
  %1975 = vmatpush1.msra.mxu0 0.0
  %1976 = vmatprep.subr.mxu0 0.0
  %1977 = vmatpush1.msra.mxu0 0.0
  %1978 = vmatprep.subr.mxu0 0.0
  %1979 = vmatpush1.msra.mxu0 0.0
  %1980 = vmatprep.subr.mxu0 0.0
  %1981 = vmatpush1.msra.mxu0 0.0
  %1982 = vmatprep.subr.mxu0 0.0
  %1983 = vmatpush1.msra.mxu0 0.0
  %1984 = vmatprep.subr.mxu0 0.0
  %1985 = vmatpush1.msra.mxu0 0.0
  %1986 = vmatprep.subr.mxu0 0.0
  %1987 = vmatpush1.msra.mxu0 0.0
  %1988 = vmatprep.subr.mxu0 0.0
  %1989 = vmatpush1.msra.mxu0 0.0
  %1990 = vmatprep.subr.mxu0 0.0
  %1991 = vmatpush1.msra.mxu0 0.0
  %1992 = vmatprep.subr.mxu0 0.0
  %1993 = vmatpush1.msra.mxu0 0.0
  %1994 = vmatprep.subr.mxu0 0.0
  %1995 = vmatpush1.msra.mxu0 0.0
  %1996 = vmatprep.subr.mxu0 0.0
  %1997 = vmatpush1.msra.mxu0 0.0
  %1998 = vmatprep.mubr.f32.mxu0 0.0
  %1999 = vmatmul.mubr.f32.gmra.mrb[0].mxu0 %v1657
  %v2000 = vpop.f32.mrb[0].mxu0
  %v2001 = vadd.f32 0.0, %v2000
  %v2002 = vpop.f32.mrb[0].mxu0
  %2003 = vdwg.mxu0
  %v2004 = vadd.f32 %v1933, %v2001
  %v2005 = vtanh.pop %v2004
  %v2006 = vmul.f32 %v2005, 0.5
  %v2007 = vadd.f32 %v2006, 0.5
  %v2008 = vmul.f32 %v2007, %v1647
  %2010 = vrot.lane.b32.xlu0 %v2005, 64
  %v2011 = vpop.permute.xlu0 %2010
  %v2013 = vmul.f32 %v2007, %v2011
  %2015 = vrot.lane.b32.xlu0 %v2013, 32
  %v2016 = vpop.permute.xlu0 %2015
  %v2018 = vadd.f32 %v2008, %v2016
  %v2019 = vtanh.pop %v2018
  %2021 = vrot.lane.b32.xlu0 %v2019, 64
  %v2022 = vpop.permute.xlu0 %2021
  %v2024 = vmul.f32 %v2007, %v2022
  %2026 = vrot.lane.b32.xlu0 %v2024, 32
  %v2027 = vpop.permute.xlu0 %2026
  %v2028 = vsel %vm69, %v2027, 0
  %2030 = vmatprep.subr.mxu0 0.0
  %2031 = vmatpush1.msra.mxu0 %v40
  %2032 = vmatprep.subr.mxu0 0.0
  %2033 = vmatpush1.msra.mxu0 %v41
  %2034 = vmatprep.subr.mxu0 0.0
  %2035 = vmatpush1.msra.mxu0 %v42
  %2036 = vmatprep.subr.mxu0 0.0
  %2037 = vmatpush1.msra.mxu0 %v43
  %2038 = vmatprep.subr.mxu0 0.0
  %2039 = vmatpush1.msra.mxu0 0.0
  %2040 = vmatprep.subr.mxu0 0.0
  %2041 = vmatpush1.msra.mxu0 0.0
  %2042 = vmatprep.subr.mxu0 0.0
  %2043 = vmatpush1.msra.mxu0 0.0
  %2044 = vmatprep.subr.mxu0 0.0
  %2045 = vmatpush1.msra.mxu0 0.0
  %2046 = vmatprep.subr.mxu0 0.0
  %2047 = vmatpush1.msra.mxu0 0.0
  %2048 = vmatprep.subr.mxu0 0.0
  %2049 = vmatpush1.msra.mxu0 0.0
  %2050 = vmatprep.subr.mxu0 0.0
  %2051 = vmatpush1.msra.mxu0 0.0
  %2052 = vmatprep.subr.mxu0 0.0
  %2053 = vmatpush1.msra.mxu0 0.0
  %2054 = vmatprep.subr.mxu0 0.0
  %2055 = vmatpush1.msra.mxu0 0.0
  %2056 = vmatprep.subr.mxu0 0.0
  %2057 = vmatpush1.msra.mxu0 0.0
  %2058 = vmatprep.subr.mxu0 0.0
  %2059 = vmatpush1.msra.mxu0 0.0
  %2060 = vmatprep.subr.mxu0 0.0
  %2061 = vmatpush1.msra.mxu0 0.0
  %2062 = vmatprep.subr.mxu0 0.0
  %2063 = vmatpush1.msra.mxu0 0.0
  %2064 = vmatprep.subr.mxu0 0.0
  %2065 = vmatpush1.msra.mxu0 0.0
  %2066 = vmatprep.subr.mxu0 0.0
  %2067 = vmatpush1.msra.mxu0 0.0
  %2068 = vmatprep.subr.mxu0 0.0
  %2069 = vmatpush1.msra.mxu0 0.0
  %2070 = vmatprep.subr.mxu0 0.0
  %2071 = vmatpush1.msra.mxu0 0.0
  %2072 = vmatprep.subr.mxu0 0.0
  %2073 = vmatpush1.msra.mxu0 0.0
  %2074 = vmatprep.subr.mxu0 0.0
  %2075 = vmatpush1.msra.mxu0 0.0
  %2076 = vmatprep.subr.mxu0 0.0
  %2077 = vmatpush1.msra.mxu0 0.0
  %2078 = vmatprep.subr.mxu0 0.0
  %2079 = vmatpush1.msra.mxu0 0.0
  %2080 = vmatprep.subr.mxu0 0.0
  %2081 = vmatpush1.msra.mxu0 0.0
  %2082 = vmatprep.subr.mxu0 0.0
  %2083 = vmatpush1.msra.mxu0 0.0
  %2084 = vmatprep.subr.mxu0 0.0
  %2085 = vmatpush1.msra.mxu0 0.0
  %2086 = vmatprep.subr.mxu0 0.0
  %2087 = vmatpush1.msra.mxu0 0.0
  %2088 = vmatprep.subr.mxu0 0.0
  %2089 = vmatpush1.msra.mxu0 0.0
  %2090 = vmatprep.subr.mxu0 0.0
  %2091 = vmatpush1.msra.mxu0 0.0
  %2092 = vmatprep.subr.mxu0 0.0
  %2093 = vmatpush1.msra.mxu0 0.0
  %2094 = vmatprep.mubr.f32.mxu0 0.0
  %2095 = vmatmul.mubr.f32.gmra.mrb[0].mxu0 %v2028
  %v2096 = vpop.f32.mrb[0].mxu0
  %v2097 = vadd.f32 0.0, %v2096
  %v2098 = vpop.f32.mrb[0].mxu0
  %2099 = vdwg.mxu0
  %2101 = vrot.lane.b32.xlu0 %v1824, 32
  %v2102 = vpop.permute.xlu0 %2101
  %v2103 = vsel %vm69, %v2102, 0
  %2105 = vmatprep.subr.mxu0 0.0
  %2106 = vmatpush1.msra.mxu0 %v44
  %2107 = vmatprep.subr.mxu0 0.0
  %2108 = vmatpush1.msra.mxu0 %v45
  %2109 = vmatprep.subr.mxu0 0.0
  %2110 = vmatpush1.msra.mxu0 %v46
  %2111 = vmatprep.subr.mxu0 0.0
  %2112 = vmatpush1.msra.mxu0 %v47
  %2113 = vmatprep.subr.mxu0 0.0
  %2114 = vmatpush1.msra.mxu0 0.0
  %2115 = vmatprep.subr.mxu0 0.0
  %2116 = vmatpush1.msra.mxu0 0.0
  %2117 = vmatprep.subr.mxu0 0.0
  %2118 = vmatpush1.msra.mxu0 0.0
  %2119 = vmatprep.subr.mxu0 0.0
  %2120 = vmatpush1.msra.mxu0 0.0
  %2121 = vmatprep.subr.mxu0 0.0
  %2122 = vmatpush1.msra.mxu0 0.0
  %2123 = vmatprep.subr.mxu0 0.0
  %2124 = vmatpush1.msra.mxu0 0.0
  %2125 = vmatprep.subr.mxu0 0.0
  %2126 = vmatpush1.msra.mxu0 0.0
  %2127 = vmatprep.subr.mxu0 0.0
  %2128 = vmatpush1.msra.mxu0 0.0
  %2129 = vmatprep.subr.mxu0 0.0
  %2130 = vmatpush1.msra.mxu0 0.0
  %2131 = vmatprep.subr.mxu0 0.0
  %2132 = vmatpush1.msra.mxu0 0.0
  %2133 = vmatprep.subr.mxu0 0.0
  %2134 = vmatpush1.msra.mxu0 0.0
  %2135 = vmatprep.subr.mxu0 0.0
  %2136 = vmatpush1.msra.mxu0 0.0
  %2137 = vmatprep.subr.mxu0 0.0
  %2138 = vmatpush1.msra.mxu0 0.0
  %2139 = vmatprep.subr.mxu0 0.0
  %2140 = vmatpush1.msra.mxu0 0.0
  %2141 = vmatprep.subr.mxu0 0.0
  %2142 = vmatpush1.msra.mxu0 0.0
  %2143 = vmatprep.subr.mxu0 0.0
  %2144 = vmatpush1.msra.mxu0 0.0
  %2145 = vmatprep.subr.mxu0 0.0
  %2146 = vmatpush1.msra.mxu0 0.0
  %2147 = vmatprep.subr.mxu0 0.0
  %2148 = vmatpush1.msra.mxu0 0.0
  %2149 = vmatprep.subr.mxu0 0.0
  %2150 = vmatpush1.msra.mxu0 0.0
  %2151 = vmatprep.subr.mxu0 0.0
  %2152 = vmatpush1.msra.mxu0 0.0
  %2153 = vmatprep.subr.mxu0 0.0
  %2154 = vmatpush1.msra.mxu0 0.0
  %2155 = vmatprep.subr.mxu0 0.0
  %2156 = vmatpush1.msra.mxu0 0.0
  %2157 = vmatprep.subr.mxu0 0.0
  %2158 = vmatpush1.msra.mxu0 0.0
  %2159 = vmatprep.subr.mxu0 0.0
  %2160 = vmatpush1.msra.mxu0 0.0
  %2161 = vmatprep.subr.mxu0 0.0
  %2162 = vmatpush1.msra.mxu0 0.0
  %2163 = vmatprep.subr.mxu0 0.0
  %2164 = vmatpush1.msra.mxu0 0.0
  %2165 = vmatprep.subr.mxu0 0.0
  %2166 = vmatpush1.msra.mxu0 0.0
  %2167 = vmatprep.subr.mxu0 0.0
  %2168 = vmatpush1.msra.mxu0 0.0
  %2169 = vmatprep.mubr.f32.mxu0 0.0
  %2170 = vmatmul.mubr.f32.gmra.mrb[0].mxu0 %v2103
  %v2171 = vpop.f32.mrb[0].mxu0
  %v2172 = vadd.f32 %v2097, %v2171
  %v2173 = vpop.f32.mrb[0].mxu0
  %2174 = vdwg.mxu0
  %v2175 = vadd.f32 %v2172, %v313
  %v2176 = vtanh.pop %v2175
  %v2177 = vmul.f32 %v2176, 0.5
  %v2178 = vadd.f32 %v2177, 0.5
  %v2179 = vmul.f32 %v2178, %v1818
  %2181 = vrot.lane.b32.xlu0 %v2176, 64
  %v2182 = vpop.permute.xlu0 %2181
  %v2184 = vmul.f32 %v2178, %v2182
  %2186 = vrot.lane.b32.xlu0 %v2184, 32
  %v2187 = vpop.permute.xlu0 %2186
  %v2189 = vadd.f32 %v2179, %v2187
  %v2190 = vtanh.pop %v2189
  %2192 = vrot.lane.b32.xlu0 %v2190, 64
  %v2193 = vpop.permute.xlu0 %2192
  %v2195 = vmul.f32 %v2178, %v2193
  %v2196 = vmax.f32 %v2195, 0.0
  %2198 = vrot.lane.b32.xlu0 %v2196, 32
  %v2199 = vpop.permute.xlu0 %2198
  %v2200 = vsel %vm69, %v2199, 0
  %2202 = vmatprep.subr.mxu0 0.0
  %2203 = vmatpush1.msra.mxu0 %v49
  %2204 = vmatprep.subr.mxu0 0.0
  %2205 = vmatpush1.msra.mxu0 %v50
  %2206 = vmatprep.subr.mxu0 0.0
  %2207 = vmatpush1.msra.mxu0 %v51
  %2208 = vmatprep.subr.mxu0 0.0
  %2209 = vmatpush1.msra.mxu0 %v52
  %2210 = vmatprep.subr.mxu0 0.0
  %2211 = vmatpush1.msra.mxu0 0.0
  %2212 = vmatprep.subr.mxu0 0.0
  %2213 = vmatpush1.msra.mxu0 0.0
  %2214 = vmatprep.subr.mxu0 0.0
  %2215 = vmatpush1.msra.mxu0 0.0
  %2216 = vmatprep.subr.mxu0 0.0
  %2217 = vmatpush1.msra.mxu0 0.0
  %2218 = vmatprep.subr.mxu0 0.0
  %2219 = vmatpush1.msra.mxu0 0.0
  %2220 = vmatprep.subr.mxu0 0.0
  %2221 = vmatpush1.msra.mxu0 0.0
  %2222 = vmatprep.subr.mxu0 0.0
  %2223 = vmatpush1.msra.mxu0 0.0
  %2224 = vmatprep.subr.mxu0 0.0
  %2225 = vmatpush1.msra.mxu0 0.0
  %2226 = vmatprep.subr.mxu0 0.0
  %2227 = vmatpush1.msra.mxu0 0.0
  %2228 = vmatprep.subr.mxu0 0.0
  %2229 = vmatpush1.msra.mxu0 0.0
  %2230 = vmatprep.subr.mxu0 0.0
  %2231 = vmatpush1.msra.mxu0 0.0
  %2232 = vmatprep.subr.mxu0 0.0
  %2233 = vmatpush1.msra.mxu0 0.0
  %2234 = vmatprep.subr.mxu0 0.0
  %2235 = vmatpush1.msra.mxu0 0.0
  %2236 = vmatprep.subr.mxu0 0.0
  %2237 = vmatpush1.msra.mxu0 0.0
  %2238 = vmatprep.subr.mxu0 0.0
  %2239 = vmatpush1.msra.mxu0 0.0
  %2240 = vmatprep.subr.mxu0 0.0
  %2241 = vmatpush1.msra.mxu0 0.0
  %2242 = vmatprep.subr.mxu0 0.0
  %2243 = vmatpush1.msra.mxu0 0.0
  %2244 = vmatprep.subr.mxu0 0.0
  %2245 = vmatpush1.msra.mxu0 0.0
  %2246 = vmatprep.subr.mxu0 0.0
  %2247 = vmatpush1.msra.mxu0 0.0
  %2248 = vmatprep.subr.mxu0 0.0
  %2249 = vmatpush1.msra.mxu0 0.0
  %2250 = vmatprep.subr.mxu0 0.0
  %2251 = vmatpush1.msra.mxu0 0.0
  %2252 = vmatprep.subr.mxu0 0.0
  %2253 = vmatpush1.msra.mxu0 0.0
  %2254 = vmatprep.subr.mxu0 0.0
  %2255 = vmatpush1.msra.mxu0 0.0
  %2256 = vmatprep.subr.mxu0 0.0
  %2257 = vmatpush1.msra.mxu0 0.0
  %2258 = vmatprep.subr.mxu0 0.0
  %2259 = vmatpush1.msra.mxu0 0.0
  %2260 = vmatprep.subr.mxu0 0.0
  %2261 = vmatpush1.msra.mxu0 0.0
  %2262 = vmatprep.subr.mxu0 0.0
  %2263 = vmatpush1.msra.mxu0 0.0
  %2264 = vmatprep.subr.mxu0 0.0
  %2265 = vmatpush1.msra.mxu0 0.0
  %2266 = vmatprep.mubr.f32.mxu0 0.0
  %2267 = vmatmul.mubr.f32.gmra.mrb[0].mxu0 %v2200
  %v2268 = vpop.f32.mrb[0].mxu0
  %v2269 = vadd.f32 %v341, %v2268
  %v2270 = vpop.f32.mrb[0].mxu0
  %2271 = vdwg.mxu0
  %v2272 = vmax.f32 %v2269, 0.0
  %v2273 = vand.u32 2147483647, %v2269
  %v2274 = vsub.f32 0.0, %v2273
  %v2275 = vmul.f32 %v2274, 1.442695
  %v2276 = vpow.pop %v2275
  %v2277 = vadd.f32 %v2276, 1.0
  %v2278 = vlog2.pop %v2277
  %v2279 = vmul.f32 %v2278, 0.6931472
  %v2280 = vadd.f32 %v2272, %v2279
  %v2281 = vadd.f32 %v2280, 1e-06
  %s2282 = scalar_lea.vmem %s2, 40
  %v2283 = vld [vmem:[%s2282] sm:$0xff]
  %2285 = vrot.lane.b32.xlu0 %v2283, 1
  %v2286 = vpop.permute.xlu0 %2285
  %v2288 = vmul.f32 %v2281, %v2286
  %2290 = vrot.lane.b32.xlu0 %v2288, 127
  %v2291 = vpop.permute.xlu0 %2290
  %v2293 = vadd.f32 %v2269, %v2291
  %s2294 = scalar_lea.vmem %s1, 48
  %v2295 = vld [vmem:[%s2294] sm:$0xff]
  %s2296 = scalar_lea.vmem %s0, 48
  %v2297 = vld [vmem:[%s2296] sm:$0xff]
  %2299 = vset.pattern.permute.xlu0 0
  %2300 = vperm.xlu0 %2299, %v2295
  %v2301 = vpop.permute.xlu0 %2300
  %v2303 = vmul.f32 %v2301, %v65
  %v2304 = vadd.f32 %v2297, %v2303
  %2305 = vmatprep.subr.mxu0 0.0
  %2306 = vmatpush1.msra.mxu0 %v36
  %2307 = vmatprep.subr.mxu0 0.0
  %2308 = vmatpush1.msra.mxu0 %v37
  %2309 = vmatprep.subr.mxu0 0.0
  %2310 = vmatpush1.msra.mxu0 %v38
  %2311 = vmatprep.subr.mxu0 0.0
  %2312 = vmatpush1.msra.mxu0 %v39
  %2313 = vmatprep.subr.mxu0 0.0
  %2314 = vmatpush1.msra.mxu0 0.0
  %2315 = vmatprep.subr.mxu0 0.0
  %2316 = vmatpush1.msra.mxu0 0.0
  %2317 = vmatprep.subr.mxu0 0.0
  %2318 = vmatpush1.msra.mxu0 0.0
  %2319 = vmatprep.subr.mxu0 0.0
  %2320 = vmatpush1.msra.mxu0 0.0
  %2321 = vmatprep.subr.mxu0 0.0
  %2322 = vmatpush1.msra.mxu0 0.0
  %2323 = vmatprep.subr.mxu0 0.0
  %2324 = vmatpush1.msra.mxu0 0.0
  %2325 = vmatprep.subr.mxu0 0.0
  %2326 = vmatpush1.msra.mxu0 0.0
  %2327 = vmatprep.subr.mxu0 0.0
  %2328 = vmatpush1.msra.mxu0 0.0
  %2329 = vmatprep.subr.mxu0 0.0
  %2330 = vmatpush1.msra.mxu0 0.0
  %2331 = vmatprep.subr.mxu0 0.0
  %2332 = vmatpush1.msra.mxu0 0.0
  %2333 = vmatprep.subr.mxu0 0.0
  %2334 = vmatpush1.msra.mxu0 0.0
  %2335 = vmatprep.subr.mxu0 0.0
  %2336 = vmatpush1.msra.mxu0 0.0
  %2337 = vmatprep.subr.mxu0 0.0
  %2338 = vmatpush1.msra.mxu0 0.0
  %2339 = vmatprep.subr.mxu0 0.0
  %2340 = vmatpush1.msra.mxu0 0.0
  %2341 = vmatprep.subr.mxu0 0.0
  %2342 = vmatpush1.msra.mxu0 0.0
  %2343 = vmatprep.subr.mxu0 0.0
  %2344 = vmatpush1.msra.mxu0 0.0
  %2345 = vmatprep.subr.mxu0 0.0
  %2346 = vmatpush1.msra.mxu0 0.0
  %2347 = vmatprep.subr.mxu0 0.0
  %2348 = vmatpush1.msra.mxu0 0.0
  %2349 = vmatprep.subr.mxu0 0.0
  %2350 = vmatpush1.msra.mxu0 0.0
  %2351 = vmatprep.subr.mxu0 0.0
  %2352 = vmatpush1.msra.mxu0 0.0
  %2353 = vmatprep.subr.mxu0 0.0
  %2354 = vmatpush1.msra.mxu0 0.0
  %2355 = vmatprep.subr.mxu0 0.0
  %2356 = vmatpush1.msra.mxu0 0.0
  %2357 = vmatprep.subr.mxu0 0.0
  %2358 = vmatpush1.msra.mxu0 0.0
  %2359 = vmatprep.subr.mxu0 0.0
  %2360 = vmatpush1.msra.mxu0 0.0
  %2361 = vmatprep.subr.mxu0 0.0
  %2362 = vmatpush1.msra.mxu0 0.0
  %2363 = vmatprep.subr.mxu0 0.0
  %2364 = vmatpush1.msra.mxu0 0.0
  %2365 = vmatprep.subr.mxu0 0.0
  %2366 = vmatpush1.msra.mxu0 0.0
  %2367 = vmatprep.subr.mxu0 0.0
  %2368 = vmatpush1.msra.mxu0 0.0
  %2369 = vmatprep.mubr.f32.mxu0 0.0
  %2370 = vmatmul.mubr.f32.gmra.mrb[0].mxu0 %v2028
  %v2371 = vpop.f32.mrb[0].mxu0
  %v2372 = vadd.f32 0.0, %v2371
  %v2373 = vpop.f32.mrb[0].mxu0
  %2374 = vdwg.mxu0
  %v2375 = vadd.f32 %v2304, %v2372
  %v2376 = vtanh.pop %v2375
  %v2377 = vmul.f32 %v2376, 0.5
  %v2378 = vadd.f32 %v2377, 0.5
  %v2379 = vmul.f32 %v2378, %v2018
  %2381 = vrot.lane.b32.xlu0 %v2376, 64
  %v2382 = vpop.permute.xlu0 %2381
  %v2384 = vmul.f32 %v2378, %v2382
  %2386 = vrot.lane.b32.xlu0 %v2384, 32
  %v2387 = vpop.permute.xlu0 %2386
  %v2389 = vadd.f32 %v2379, %v2387
  %v2390 = vtanh.pop %v2389
  %2392 = vrot.lane.b32.xlu0 %v2390, 64
  %v2393 = vpop.permute.xlu0 %2392
  %v2395 = vmul.f32 %v2378, %v2393
  %2397 = vrot.lane.b32.xlu0 %v2395, 32
  %v2398 = vpop.permute.xlu0 %2397
  %v2399 = vsel %vm69, %v2398, 0
  %2401 = vmatprep.subr.mxu0 0.0
  %2402 = vmatpush1.msra.mxu0 %v40
  %2403 = vmatprep.subr.mxu0 0.0
  %2404 = vmatpush1.msra.mxu0 %v41
  %2405 = vmatprep.subr.mxu0 0.0
  %2406 = vmatpush1.msra.mxu0 %v42
  %2407 = vmatprep.subr.mxu0 0.0
  %2408 = vmatpush1.msra.mxu0 %v43
  %2409 = vmatprep.subr.mxu0 0.0
  %2410 = vmatpush1.msra.mxu0 0.0
  %2411 = vmatprep.subr.mxu0 0.0
  %2412 = vmatpush1.msra.mxu0 0.0
  %2413 = vmatprep.subr.mxu0 0.0
  %2414 = vmatpush1.msra.mxu0 0.0
  %2415 = vmatprep.subr.mxu0 0.0
  %2416 = vmatpush1.msra.mxu0 0.0
  %2417 = vmatprep.subr.mxu0 0.0
  %2418 = vmatpush1.msra.mxu0 0.0
  %2419 = vmatprep.subr.mxu0 0.0
  %2420 = vmatpush1.msra.mxu0 0.0
  %2421 = vmatprep.subr.mxu0 0.0
  %2422 = vmatpush1.msra.mxu0 0.0
  %2423 = vmatprep.subr.mxu0 0.0
  %2424 = vmatpush1.msra.mxu0 0.0
  %2425 = vmatprep.subr.mxu0 0.0
  %2426 = vmatpush1.msra.mxu0 0.0
  %2427 = vmatprep.subr.mxu0 0.0
  %2428 = vmatpush1.msra.mxu0 0.0
  %2429 = vmatprep.subr.mxu0 0.0
  %2430 = vmatpush1.msra.mxu0 0.0
  %2431 = vmatprep.subr.mxu0 0.0
  %2432 = vmatpush1.msra.mxu0 0.0
  %2433 = vmatprep.subr.mxu0 0.0
  %2434 = vmatpush1.msra.mxu0 0.0
  %2435 = vmatprep.subr.mxu0 0.0
  %2436 = vmatpush1.msra.mxu0 0.0
  %2437 = vmatprep.subr.mxu0 0.0
  %2438 = vmatpush1.msra.mxu0 0.0
  %2439 = vmatprep.subr.mxu0 0.0
  %2440 = vmatpush1.msra.mxu0 0.0
  %2441 = vmatprep.subr.mxu0 0.0
  %2442 = vmatpush1.msra.mxu0 0.0
  %2443 = vmatprep.subr.mxu0 0.0
  %2444 = vmatpush1.msra.mxu0 0.0
  %2445 = vmatprep.subr.mxu0 0.0
  %2446 = vmatpush1.msra.mxu0 0.0
  %2447 = vmatprep.subr.mxu0 0.0
  %2448 = vmatpush1.msra.mxu0 0.0
  %2449 = vmatprep.subr.mxu0 0.0
  %2450 = vmatpush1.msra.mxu0 0.0
  %2451 = vmatprep.subr.mxu0 0.0
  %2452 = vmatpush1.msra.mxu0 0.0
  %2453 = vmatprep.subr.mxu0 0.0
  %2454 = vmatpush1.msra.mxu0 0.0
  %2455 = vmatprep.subr.mxu0 0.0
  %2456 = vmatpush1.msra.mxu0 0.0
  %2457 = vmatprep.subr.mxu0 0.0
  %2458 = vmatpush1.msra.mxu0 0.0
  %2459 = vmatprep.subr.mxu0 0.0
  %2460 = vmatpush1.msra.mxu0 0.0
  %2461 = vmatprep.subr.mxu0 0.0
  %2462 = vmatpush1.msra.mxu0 0.0
  %2463 = vmatprep.subr.mxu0 0.0
  %2464 = vmatpush1.msra.mxu0 0.0
  %2465 = vmatprep.mubr.f32.mxu0 0.0
  %2466 = vmatmul.mubr.f32.gmra.mrb[0].mxu0 %v2399
  %v2467 = vpop.f32.mrb[0].mxu0
  %v2468 = vadd.f32 0.0, %v2467
  %v2469 = vpop.f32.mrb[0].mxu0
  %2470 = vdwg.mxu0
  %2472 = vrot.lane.b32.xlu0 %v2195, 32
  %v2473 = vpop.permute.xlu0 %2472
  %v2474 = vsel %vm69, %v2473, 0
  %2476 = vmatprep.subr.mxu0 0.0
  %2477 = vmatpush1.msra.mxu0 %v44
  %2478 = vmatprep.subr.mxu0 0.0
  %2479 = vmatpush1.msra.mxu0 %v45
  %2480 = vmatprep.subr.mxu0 0.0
  %2481 = vmatpush1.msra.mxu0 %v46
  %2482 = vmatprep.subr.mxu0 0.0
  %2483 = vmatpush1.msra.mxu0 %v47
  %2484 = vmatprep.subr.mxu0 0.0
  %2485 = vmatpush1.msra.mxu0 0.0
  %2486 = vmatprep.subr.mxu0 0.0
  %2487 = vmatpush1.msra.mxu0 0.0
  %2488 = vmatprep.subr.mxu0 0.0
  %2489 = vmatpush1.msra.mxu0 0.0
  %2490 = vmatprep.subr.mxu0 0.0
  %2491 = vmatpush1.msra.mxu0 0.0
  %2492 = vmatprep.subr.mxu0 0.0
  %2493 = vmatpush1.msra.mxu0 0.0
  %2494 = vmatprep.subr.mxu0 0.0
  %2495 = vmatpush1.msra.mxu0 0.0
  %2496 = vmatprep.subr.mxu0 0.0
  %2497 = vmatpush1.msra.mxu0 0.0
  %2498 = vmatprep.subr.mxu0 0.0
  %2499 = vmatpush1.msra.mxu0 0.0
  %2500 = vmatprep.subr.mxu0 0.0
  %2501 = vmatpush1.msra.mxu0 0.0
  %2502 = vmatprep.subr.mxu0 0.0
  %2503 = vmatpush1.msra.mxu0 0.0
  %2504 = vmatprep.subr.mxu0 0.0
  %2505 = vmatpush1.msra.mxu0 0.0
  %2506 = vmatprep.subr.mxu0 0.0
  %2507 = vmatpush1.msra.mxu0 0.0
  %2508 = vmatprep.subr.mxu0 0.0
  %2509 = vmatpush1.msra.mxu0 0.0
  %2510 = vmatprep.subr.mxu0 0.0
  %2511 = vmatpush1.msra.mxu0 0.0
  %2512 = vmatprep.subr.mxu0 0.0
  %2513 = vmatpush1.msra.mxu0 0.0
  %2514 = vmatprep.subr.mxu0 0.0
  %2515 = vmatpush1.msra.mxu0 0.0
  %2516 = vmatprep.subr.mxu0 0.0
  %2517 = vmatpush1.msra.mxu0 0.0
  %2518 = vmatprep.subr.mxu0 0.0
  %2519 = vmatpush1.msra.mxu0 0.0
  %2520 = vmatprep.subr.mxu0 0.0
  %2521 = vmatpush1.msra.mxu0 0.0
  %2522 = vmatprep.subr.mxu0 0.0
  %2523 = vmatpush1.msra.mxu0 0.0
  %2524 = vmatprep.subr.mxu0 0.0
  %2525 = vmatpush1.msra.mxu0 0.0
  %2526 = vmatprep.subr.mxu0 0.0
  %2527 = vmatpush1.msra.mxu0 0.0
  %2528 = vmatprep.subr.mxu0 0.0
  %2529 = vmatpush1.msra.mxu0 0.0
  %2530 = vmatprep.subr.mxu0 0.0
  %2531 = vmatpush1.msra.mxu0 0.0
  %2532 = vmatprep.subr.mxu0 0.0
  %2533 = vmatpush1.msra.mxu0 0.0
  %2534 = vmatprep.subr.mxu0 0.0
  %2535 = vmatpush1.msra.mxu0 0.0
  %2536 = vmatprep.subr.mxu0 0.0
  %2537 = vmatpush1.msra.mxu0 0.0
  %2538 = vmatprep.subr.mxu0 0.0
  %2539 = vmatpush1.msra.mxu0 0.0
  %2540 = vmatprep.mubr.f32.mxu0 0.0
  %2541 = vmatmul.mubr.f32.gmra.mrb[0].mxu0 %v2474
  %v2542 = vpop.f32.mrb[0].mxu0
  %v2543 = vadd.f32 %v2468, %v2542
  %v2544 = vpop.f32.mrb[0].mxu0
  %2545 = vdwg.mxu0
  %v2546 = vadd.f32 %v2543, %v313
  %v2547 = vtanh.pop %v2546
  %v2548 = vmul.f32 %v2547, 0.5
  %v2549 = vadd.f32 %v2548, 0.5
  %v2550 = vmul.f32 %v2549, %v2189
  %2552 = vrot.lane.b32.xlu0 %v2547, 64
  %v2553 = vpop.permute.xlu0 %2552
  %v2555 = vmul.f32 %v2549, %v2553
  %2557 = vrot.lane.b32.xlu0 %v2555, 32
  %v2558 = vpop.permute.xlu0 %2557
  %v2560 = vadd.f32 %v2550, %v2558
  %v2561 = vtanh.pop %v2560
  %2563 = vrot.lane.b32.xlu0 %v2561, 64
  %v2564 = vpop.permute.xlu0 %2563
  %v2566 = vmul.f32 %v2549, %v2564
  %v2567 = vmax.f32 %v2566, 0.0
  %2569 = vrot.lane.b32.xlu0 %v2567, 32
  %v2570 = vpop.permute.xlu0 %2569
  %v2571 = vsel %vm69, %v2570, 0
  %2573 = vmatprep.subr.mxu0 0.0
  %2574 = vmatpush1.msra.mxu0 %v49
  %2575 = vmatprep.subr.mxu0 0.0
  %2576 = vmatpush1.msra.mxu0 %v50
  %2577 = vmatprep.subr.mxu0 0.0
  %2578 = vmatpush1.msra.mxu0 %v51
  %2579 = vmatprep.subr.mxu0 0.0
  %2580 = vmatpush1.msra.mxu0 %v52
  %2581 = vmatprep.subr.mxu0 0.0
  %2582 = vmatpush1.msra.mxu0 0.0
  %2583 = vmatprep.subr.mxu0 0.0
  %2584 = vmatpush1.msra.mxu0 0.0
  %2585 = vmatprep.subr.mxu0 0.0
  %2586 = vmatpush1.msra.mxu0 0.0
  %2587 = vmatprep.subr.mxu0 0.0
  %2588 = vmatpush1.msra.mxu0 0.0
  %2589 = vmatprep.subr.mxu0 0.0
  %2590 = vmatpush1.msra.mxu0 0.0
  %2591 = vmatprep.subr.mxu0 0.0
  %2592 = vmatpush1.msra.mxu0 0.0
  %2593 = vmatprep.subr.mxu0 0.0
  %2594 = vmatpush1.msra.mxu0 0.0
  %2595 = vmatprep.subr.mxu0 0.0
  %2596 = vmatpush1.msra.mxu0 0.0
  %2597 = vmatprep.subr.mxu0 0.0
  %2598 = vmatpush1.msra.mxu0 0.0
  %2599 = vmatprep.subr.mxu0 0.0
  %2600 = vmatpush1.msra.mxu0 0.0
  %2601 = vmatprep.subr.mxu0 0.0
  %2602 = vmatpush1.msra.mxu0 0.0
  %2603 = vmatprep.subr.mxu0 0.0
  %2604 = vmatpush1.msra.mxu0 0.0
  %2605 = vmatprep.subr.mxu0 0.0
  %2606 = vmatpush1.msra.mxu0 0.0
  %2607 = vmatprep.subr.mxu0 0.0
  %2608 = vmatpush1.msra.mxu0 0.0
  %2609 = vmatprep.subr.mxu0 0.0
  %2610 = vmatpush1.msra.mxu0 0.0
  %2611 = vmatprep.subr.mxu0 0.0
  %2612 = vmatpush1.msra.mxu0 0.0
  %2613 = vmatprep.subr.mxu0 0.0
  %2614 = vmatpush1.msra.mxu0 0.0
  %2615 = vmatprep.subr.mxu0 0.0
  %2616 = vmatpush1.msra.mxu0 0.0
  %2617 = vmatprep.subr.mxu0 0.0
  %2618 = vmatpush1.msra.mxu0 0.0
  %2619 = vmatprep.subr.mxu0 0.0
  %2620 = vmatpush1.msra.mxu0 0.0
  %2621 = vmatprep.subr.mxu0 0.0
  %2622 = vmatpush1.msra.mxu0 0.0
  %2623 = vmatprep.subr.mxu0 0.0
  %2624 = vmatpush1.msra.mxu0 0.0
  %2625 = vmatprep.subr.mxu0 0.0
  %2626 = vmatpush1.msra.mxu0 0.0
  %2627 = vmatprep.subr.mxu0 0.0
  %2628 = vmatpush1.msra.mxu0 0.0
  %2629 = vmatprep.subr.mxu0 0.0
  %2630 = vmatpush1.msra.mxu0 0.0
  %2631 = vmatprep.subr.mxu0 0.0
  %2632 = vmatpush1.msra.mxu0 0.0
  %2633 = vmatprep.subr.mxu0 0.0
  %2634 = vmatpush1.msra.mxu0 0.0
  %2635 = vmatprep.subr.mxu0 0.0
  %2636 = vmatpush1.msra.mxu0 0.0
  %2637 = vmatprep.mubr.f32.mxu0 0.0
  %2638 = vmatmul.mubr.f32.gmra.mrb[0].mxu0 %v2571
  %v2639 = vpop.f32.mrb[0].mxu0
  %v2640 = vadd.f32 %v341, %v2639
  %v2641 = vpop.f32.mrb[0].mxu0
  %2642 = vdwg.mxu0
  %v2643 = vmax.f32 %v2640, 0.0
  %v2644 = vand.u32 2147483647, %v2640
  %v2645 = vsub.f32 0.0, %v2644
  %v2646 = vmul.f32 %v2645, 1.442695
  %v2647 = vpow.pop %v2646
  %v2648 = vadd.f32 %v2647, 1.0
  %v2649 = vlog2.pop %v2648
  %v2650 = vmul.f32 %v2649, 0.6931472
  %v2651 = vadd.f32 %v2643, %v2650
  %v2652 = vadd.f32 %v2651, 1e-06
  %s2653 = scalar_lea.vmem %s2, 48
  %v2654 = vld [vmem:[%s2653] sm:$0xff]
  %2656 = vrot.lane.b32.xlu0 %v2654, 1
  %v2657 = vpop.permute.xlu0 %2656
  %v2659 = vmul.f32 %v2652, %v2657
  %2661 = vrot.lane.b32.xlu0 %v2659, 127
  %v2662 = vpop.permute.xlu0 %2661
  %v2664 = vadd.f32 %v2640, %v2662
  %s2665 = scalar_lea.vmem %s1, 56
  %v2666 = vld [vmem:[%s2665] sm:$0xff]
  %s2667 = scalar_lea.vmem %s0, 56
  %v2668 = vld [vmem:[%s2667] sm:$0xff]
  %2670 = vset.pattern.permute.xlu0 0
  %2671 = vperm.xlu0 %2670, %v2666
  %v2672 = vpop.permute.xlu0 %2671
  %v2674 = vmul.f32 %v2672, %v65
  %v2675 = vadd.f32 %v2668, %v2674
  %2676 = vmatprep.subr.mxu0 0.0
  %2677 = vmatpush1.msra.mxu0 %v36
  %2678 = vmatprep.subr.mxu0 0.0
  %2679 = vmatpush1.msra.mxu0 %v37
  %2680 = vmatprep.subr.mxu0 0.0
  %2681 = vmatpush1.msra.mxu0 %v38
  %2682 = vmatprep.subr.mxu0 0.0
  %2683 = vmatpush1.msra.mxu0 %v39
  %2684 = vmatprep.subr.mxu0 0.0
  %2685 = vmatpush1.msra.mxu0 0.0
  %2686 = vmatprep.subr.mxu0 0.0
  %2687 = vmatpush1.msra.mxu0 0.0
  %2688 = vmatprep.subr.mxu0 0.0
  %2689 = vmatpush1.msra.mxu0 0.0
  %2690 = vmatprep.subr.mxu0 0.0
  %2691 = vmatpush1.msra.mxu0 0.0
  %2692 = vmatprep.subr.mxu0 0.0
  %2693 = vmatpush1.msra.mxu0 0.0
  %2694 = vmatprep.subr.mxu0 0.0
  %2695 = vmatpush1.msra.mxu0 0.0
  %2696 = vmatprep.subr.mxu0 0.0
  %2697 = vmatpush1.msra.mxu0 0.0
  %2698 = vmatprep.subr.mxu0 0.0
  %2699 = vmatpush1.msra.mxu0 0.0
  %2700 = vmatprep.subr.mxu0 0.0
  %2701 = vmatpush1.msra.mxu0 0.0
  %2702 = vmatprep.subr.mxu0 0.0
  %2703 = vmatpush1.msra.mxu0 0.0
  %2704 = vmatprep.subr.mxu0 0.0
  %2705 = vmatpush1.msra.mxu0 0.0
  %2706 = vmatprep.subr.mxu0 0.0
  %2707 = vmatpush1.msra.mxu0 0.0
  %2708 = vmatprep.subr.mxu0 0.0
  %2709 = vmatpush1.msra.mxu0 0.0
  %2710 = vmatprep.subr.mxu0 0.0
  %2711 = vmatpush1.msra.mxu0 0.0
  %2712 = vmatprep.subr.mxu0 0.0
  %2713 = vmatpush1.msra.mxu0 0.0
  %2714 = vmatprep.subr.mxu0 0.0
  %2715 = vmatpush1.msra.mxu0 0.0
  %2716 = vmatprep.subr.mxu0 0.0
  %2717 = vmatpush1.msra.mxu0 0.0
  %2718 = vmatprep.subr.mxu0 0.0
  %2719 = vmatpush1.msra.mxu0 0.0
  %2720 = vmatprep.subr.mxu0 0.0
  %2721 = vmatpush1.msra.mxu0 0.0
  %2722 = vmatprep.subr.mxu0 0.0
  %2723 = vmatpush1.msra.mxu0 0.0
  %2724 = vmatprep.subr.mxu0 0.0
  %2725 = vmatpush1.msra.mxu0 0.0
  %2726 = vmatprep.subr.mxu0 0.0
  %2727 = vmatpush1.msra.mxu0 0.0
  %2728 = vmatprep.subr.mxu0 0.0
  %2729 = vmatpush1.msra.mxu0 0.0
  %2730 = vmatprep.subr.mxu0 0.0
  %2731 = vmatpush1.msra.mxu0 0.0
  %2732 = vmatprep.subr.mxu0 0.0
  %2733 = vmatpush1.msra.mxu0 0.0
  %2734 = vmatprep.subr.mxu0 0.0
  %2735 = vmatpush1.msra.mxu0 0.0
  %2736 = vmatprep.subr.mxu0 0.0
  %2737 = vmatpush1.msra.mxu0 0.0
  %2738 = vmatprep.subr.mxu0 0.0
  %2739 = vmatpush1.msra.mxu0 0.0
  %2740 = vmatprep.mubr.f32.mxu0 0.0
  %2741 = vmatmul.mubr.f32.gmra.mrb[0].mxu0 %v2399
  %v2742 = vpop.f32.mrb[0].mxu0
  %v2743 = vadd.f32 0.0, %v2742
  %v2744 = vpop.f32.mrb[0].mxu0
  %2745 = vdwg.mxu0
  %v2746 = vadd.f32 %v2675, %v2743
  %v2747 = vtanh.pop %v2746
  %v2748 = vmul.f32 %v2747, 0.5
  %v2749 = vadd.f32 %v2748, 0.5
  %v2750 = vmul.f32 %v2749, %v2389
  %2752 = vrot.lane.b32.xlu0 %v2747, 64
  %v2753 = vpop.permute.xlu0 %2752
  %v2755 = vmul.f32 %v2749, %v2753
  %2757 = vrot.lane.b32.xlu0 %v2755, 32
  %v2758 = vpop.permute.xlu0 %2757
  %v2760 = vadd.f32 %v2750, %v2758
  %v2761 = vtanh.pop %v2760
  %2763 = vrot.lane.b32.xlu0 %v2761, 64
  %v2764 = vpop.permute.xlu0 %2763
  %v2766 = vmul.f32 %v2749, %v2764
  %2768 = vrot.lane.b32.xlu0 %v2766, 32
  %v2769 = vpop.permute.xlu0 %2768
  %v2770 = vsel %vm69, %v2769, 0
  %2772 = vmatprep.subr.mxu0 0.0
  %2773 = vmatpush1.msra.mxu0 %v40
  %2774 = vmatprep.subr.mxu0 0.0
  %2775 = vmatpush1.msra.mxu0 %v41
  %2776 = vmatprep.subr.mxu0 0.0
  %2777 = vmatpush1.msra.mxu0 %v42
  %2778 = vmatprep.subr.mxu0 0.0
  %2779 = vmatpush1.msra.mxu0 %v43
  %2780 = vmatprep.subr.mxu0 0.0
  %2781 = vmatpush1.msra.mxu0 0.0
  %2782 = vmatprep.subr.mxu0 0.0
  %2783 = vmatpush1.msra.mxu0 0.0
  %2784 = vmatprep.subr.mxu0 0.0
  %2785 = vmatpush1.msra.mxu0 0.0
  %2786 = vmatprep.subr.mxu0 0.0
  %2787 = vmatpush1.msra.mxu0 0.0
  %2788 = vmatprep.subr.mxu0 0.0
  %2789 = vmatpush1.msra.mxu0 0.0
  %2790 = vmatprep.subr.mxu0 0.0
  %2791 = vmatpush1.msra.mxu0 0.0
  %2792 = vmatprep.subr.mxu0 0.0
  %2793 = vmatpush1.msra.mxu0 0.0
  %2794 = vmatprep.subr.mxu0 0.0
  %2795 = vmatpush1.msra.mxu0 0.0
  %2796 = vmatprep.subr.mxu0 0.0
  %2797 = vmatpush1.msra.mxu0 0.0
  %2798 = vmatprep.subr.mxu0 0.0
  %2799 = vmatpush1.msra.mxu0 0.0
  %2800 = vmatprep.subr.mxu0 0.0
  %2801 = vmatpush1.msra.mxu0 0.0
  %2802 = vmatprep.subr.mxu0 0.0
  %2803 = vmatpush1.msra.mxu0 0.0
  %2804 = vmatprep.subr.mxu0 0.0
  %2805 = vmatpush1.msra.mxu0 0.0
  %2806 = vmatprep.subr.mxu0 0.0
  %2807 = vmatpush1.msra.mxu0 0.0
  %2808 = vmatprep.subr.mxu0 0.0
  %2809 = vmatpush1.msra.mxu0 0.0
  %2810 = vmatprep.subr.mxu0 0.0
  %2811 = vmatpush1.msra.mxu0 0.0
  %2812 = vmatprep.subr.mxu0 0.0
  %2813 = vmatpush1.msra.mxu0 0.0
  %2814 = vmatprep.subr.mxu0 0.0
  %2815 = vmatpush1.msra.mxu0 0.0
  %2816 = vmatprep.subr.mxu0 0.0
  %2817 = vmatpush1.msra.mxu0 0.0
  %2818 = vmatprep.subr.mxu0 0.0
  %2819 = vmatpush1.msra.mxu0 0.0
  %2820 = vmatprep.subr.mxu0 0.0
  %2821 = vmatpush1.msra.mxu0 0.0
  %2822 = vmatprep.subr.mxu0 0.0
  %2823 = vmatpush1.msra.mxu0 0.0
  %2824 = vmatprep.subr.mxu0 0.0
  %2825 = vmatpush1.msra.mxu0 0.0
  %2826 = vmatprep.subr.mxu0 0.0
  %2827 = vmatpush1.msra.mxu0 0.0
  %2828 = vmatprep.subr.mxu0 0.0
  %2829 = vmatpush1.msra.mxu0 0.0
  %2830 = vmatprep.subr.mxu0 0.0
  %2831 = vmatpush1.msra.mxu0 0.0
  %2832 = vmatprep.subr.mxu0 0.0
  %2833 = vmatpush1.msra.mxu0 0.0
  %2834 = vmatprep.subr.mxu0 0.0
  %2835 = vmatpush1.msra.mxu0 0.0
  %2836 = vmatprep.mubr.f32.mxu0 0.0
  %2837 = vmatmul.mubr.f32.gmra.mrb[0].mxu0 %v2770
  %v2838 = vpop.f32.mrb[0].mxu0
  %v2839 = vadd.f32 0.0, %v2838
  %v2840 = vpop.f32.mrb[0].mxu0
  %2841 = vdwg.mxu0
  %2843 = vrot.lane.b32.xlu0 %v2566, 32
  %v2844 = vpop.permute.xlu0 %2843
  %v2845 = vsel %vm69, %v2844, 0
  %2847 = vmatprep.subr.mxu0 0.0
  %2848 = vmatpush1.msra.mxu0 %v44
  %2849 = vmatprep.subr.mxu0 0.0
  %2850 = vmatpush1.msra.mxu0 %v45
  %2851 = vmatprep.subr.mxu0 0.0
  %2852 = vmatpush1.msra.mxu0 %v46
  %2853 = vmatprep.subr.mxu0 0.0
  %2854 = vmatpush1.msra.mxu0 %v47
  %2855 = vmatprep.subr.mxu0 0.0
  %2856 = vmatpush1.msra.mxu0 0.0
  %2857 = vmatprep.subr.mxu0 0.0
  %2858 = vmatpush1.msra.mxu0 0.0
  %2859 = vmatprep.subr.mxu0 0.0
  %2860 = vmatpush1.msra.mxu0 0.0
  %2861 = vmatprep.subr.mxu0 0.0
  %2862 = vmatpush1.msra.mxu0 0.0
  %2863 = vmatprep.subr.mxu0 0.0
  %2864 = vmatpush1.msra.mxu0 0.0
  %2865 = vmatprep.subr.mxu0 0.0
  %2866 = vmatpush1.msra.mxu0 0.0
  %2867 = vmatprep.subr.mxu0 0.0
  %2868 = vmatpush1.msra.mxu0 0.0
  %2869 = vmatprep.subr.mxu0 0.0
  %2870 = vmatpush1.msra.mxu0 0.0
  %2871 = vmatprep.subr.mxu0 0.0
  %2872 = vmatpush1.msra.mxu0 0.0
  %2873 = vmatprep.subr.mxu0 0.0
  %2874 = vmatpush1.msra.mxu0 0.0
  %2875 = vmatprep.subr.mxu0 0.0
  %2876 = vmatpush1.msra.mxu0 0.0
  %2877 = vmatprep.subr.mxu0 0.0
  %2878 = vmatpush1.msra.mxu0 0.0
  %2879 = vmatprep.subr.mxu0 0.0
  %2880 = vmatpush1.msra.mxu0 0.0
  %2881 = vmatprep.subr.mxu0 0.0
  %2882 = vmatpush1.msra.mxu0 0.0
  %2883 = vmatprep.subr.mxu0 0.0
  %2884 = vmatpush1.msra.mxu0 0.0
  %2885 = vmatprep.subr.mxu0 0.0
  %2886 = vmatpush1.msra.mxu0 0.0
  %2887 = vmatprep.subr.mxu0 0.0
  %2888 = vmatpush1.msra.mxu0 0.0
  %2889 = vmatprep.subr.mxu0 0.0
  %2890 = vmatpush1.msra.mxu0 0.0
  %2891 = vmatprep.subr.mxu0 0.0
  %2892 = vmatpush1.msra.mxu0 0.0
  %2893 = vmatprep.subr.mxu0 0.0
  %2894 = vmatpush1.msra.mxu0 0.0
  %2895 = vmatprep.subr.mxu0 0.0
  %2896 = vmatpush1.msra.mxu0 0.0
  %2897 = vmatprep.subr.mxu0 0.0
  %2898 = vmatpush1.msra.mxu0 0.0
  %2899 = vmatprep.subr.mxu0 0.0
  %2900 = vmatpush1.msra.mxu0 0.0
  %2901 = vmatprep.subr.mxu0 0.0
  %2902 = vmatpush1.msra.mxu0 0.0
  %2903 = vmatprep.subr.mxu0 0.0
  %2904 = vmatpush1.msra.mxu0 0.0
  %2905 = vmatprep.subr.mxu0 0.0
  %2906 = vmatpush1.msra.mxu0 0.0
  %2907 = vmatprep.subr.mxu0 0.0
  %2908 = vmatpush1.msra.mxu0 0.0
  %2909 = vmatprep.subr.mxu0 0.0
  %2910 = vmatpush1.msra.mxu0 0.0
  %2911 = vmatprep.mubr.f32.mxu0 0.0
  %2912 = vmatmul.mubr.f32.gmra.mrb[0].mxu0 %v2845
  %v2913 = vpop.f32.mrb[0].mxu0
  %v2914 = vadd.f32 %v2839, %v2913
  %v2915 = vpop.f32.mrb[0].mxu0
  %2916 = vdwg.mxu0
  %v2917 = vadd.f32 %v2914, %v313
  %v2918 = vtanh.pop %v2917
  %v2919 = vmul.f32 %v2918, 0.5
  %v2920 = vadd.f32 %v2919, 0.5
  %v2921 = vmul.f32 %v2920, %v2560
  %2923 = vrot.lane.b32.xlu0 %v2918, 64
  %v2924 = vpop.permute.xlu0 %2923
  %v2926 = vmul.f32 %v2920, %v2924
  %2928 = vrot.lane.b32.xlu0 %v2926, 32
  %v2929 = vpop.permute.xlu0 %2928
  %v2931 = vadd.f32 %v2921, %v2929
  %v2932 = vtanh.pop %v2931
  %2934 = vrot.lane.b32.xlu0 %v2932, 64
  %v2935 = vpop.permute.xlu0 %2934
  %v2937 = vmul.f32 %v2920, %v2935
  %v2938 = vmax.f32 %v2937, 0.0
  %2940 = vrot.lane.b32.xlu0 %v2938, 32
  %v2941 = vpop.permute.xlu0 %2940
  %v2942 = vsel %vm69, %v2941, 0
  %2944 = vmatprep.subr.mxu0 0.0
  %2945 = vmatpush1.msra.mxu0 %v49
  %2946 = vmatprep.subr.mxu0 0.0
  %2947 = vmatpush1.msra.mxu0 %v50
  %2948 = vmatprep.subr.mxu0 0.0
  %2949 = vmatpush1.msra.mxu0 %v51
  %2950 = vmatprep.subr.mxu0 0.0
  %2951 = vmatpush1.msra.mxu0 %v52
  %2952 = vmatprep.subr.mxu0 0.0
  %2953 = vmatpush1.msra.mxu0 0.0
  %2954 = vmatprep.subr.mxu0 0.0
  %2955 = vmatpush1.msra.mxu0 0.0
  %2956 = vmatprep.subr.mxu0 0.0
  %2957 = vmatpush1.msra.mxu0 0.0
  %2958 = vmatprep.subr.mxu0 0.0
  %2959 = vmatpush1.msra.mxu0 0.0
  %2960 = vmatprep.subr.mxu0 0.0
  %2961 = vmatpush1.msra.mxu0 0.0
  %2962 = vmatprep.subr.mxu0 0.0
  %2963 = vmatpush1.msra.mxu0 0.0
  %2964 = vmatprep.subr.mxu0 0.0
  %2965 = vmatpush1.msra.mxu0 0.0
  %2966 = vmatprep.subr.mxu0 0.0
  %2967 = vmatpush1.msra.mxu0 0.0
  %2968 = vmatprep.subr.mxu0 0.0
  %2969 = vmatpush1.msra.mxu0 0.0
  %2970 = vmatprep.subr.mxu0 0.0
  %2971 = vmatpush1.msra.mxu0 0.0
  %2972 = vmatprep.subr.mxu0 0.0
  %2973 = vmatpush1.msra.mxu0 0.0
  %2974 = vmatprep.subr.mxu0 0.0
  %2975 = vmatpush1.msra.mxu0 0.0
  %2976 = vmatprep.subr.mxu0 0.0
  %2977 = vmatpush1.msra.mxu0 0.0
  %2978 = vmatprep.subr.mxu0 0.0
  %2979 = vmatpush1.msra.mxu0 0.0
  %2980 = vmatprep.subr.mxu0 0.0
  %2981 = vmatpush1.msra.mxu0 0.0
  %2982 = vmatprep.subr.mxu0 0.0
  %2983 = vmatpush1.msra.mxu0 0.0
  %2984 = vmatprep.subr.mxu0 0.0
  %2985 = vmatpush1.msra.mxu0 0.0
  %2986 = vmatprep.subr.mxu0 0.0
  %2987 = vmatpush1.msra.mxu0 0.0
  %2988 = vmatprep.subr.mxu0 0.0
  %2989 = vmatpush1.msra.mxu0 0.0
  %2990 = vmatprep.subr.mxu0 0.0
  %2991 = vmatpush1.msra.mxu0 0.0
  %2992 = vmatprep.subr.mxu0 0.0
  %2993 = vmatpush1.msra.mxu0 0.0
  %2994 = vmatprep.subr.mxu0 0.0
  %2995 = vmatpush1.msra.mxu0 0.0
  %2996 = vmatprep.subr.mxu0 0.0
  %2997 = vmatpush1.msra.mxu0 0.0
  %2998 = vmatprep.subr.mxu0 0.0
  %2999 = vmatpush1.msra.mxu0 0.0
  %3000 = vmatprep.subr.mxu0 0.0
  %3001 = vmatpush1.msra.mxu0 0.0
  %3002 = vmatprep.subr.mxu0 0.0
  %3003 = vmatpush1.msra.mxu0 0.0
  %3004 = vmatprep.subr.mxu0 0.0
  %3005 = vmatpush1.msra.mxu0 0.0
  %3006 = vmatprep.subr.mxu0 0.0
  %3007 = vmatpush1.msra.mxu0 0.0
  %3008 = vmatprep.mubr.f32.mxu0 0.0
  %3009 = vmatmul.mubr.f32.gmra.mrb[0].mxu0 %v2942
  %v3010 = vpop.f32.mrb[0].mxu0
  %v3011 = vadd.f32 %v341, %v3010
  %v3012 = vpop.f32.mrb[0].mxu0
  %3013 = vdwg.mxu0
  %v3014 = vmax.f32 %v3011, 0.0
  %v3015 = vand.u32 2147483647, %v3011
  %v3016 = vsub.f32 0.0, %v3015
  %v3017 = vmul.f32 %v3016, 1.442695
  %v3018 = vpow.pop %v3017
  %v3019 = vadd.f32 %v3018, 1.0
  %v3020 = vlog2.pop %v3019
  %v3021 = vmul.f32 %v3020, 0.6931472
  %v3022 = vadd.f32 %v3014, %v3021
  %v3023 = vadd.f32 %v3022, 1e-06
  %s3024 = scalar_lea.vmem %s2, 56
  %v3025 = vld [vmem:[%s3024] sm:$0xff]
  %3027 = vrot.lane.b32.xlu0 %v3025, 1
  %v3028 = vpop.permute.xlu0 %3027
  %v3030 = vmul.f32 %v3023, %v3028
  %3032 = vrot.lane.b32.xlu0 %v3030, 127
  %v3033 = vpop.permute.xlu0 %3032
  %v3035 = vadd.f32 %v3011, %v3033
  %s3036 = scalar_lea.vmem %s0, 64
  %v3037 = vld [vmem:[%s3036] sm:$0xff]
  %3039 = vset.pattern.permute.xlu0 0
  %3040 = vperm.xlu0 %3039, %v3035
  %v3041 = vpop.permute.xlu0 %3040
  %v3043 = vmul.f32 %v3041, %v65
  %v3044 = vadd.f32 %v3037, %v3043
  %3045 = vmatprep.subr.mxu0 0.0
  %3046 = vmatpush1.msra.mxu0 %v36
  %3047 = vmatprep.subr.mxu0 0.0
  %3048 = vmatpush1.msra.mxu0 %v37
  %3049 = vmatprep.subr.mxu0 0.0
  %3050 = vmatpush1.msra.mxu0 %v38
  %3051 = vmatprep.subr.mxu0 0.0
  %3052 = vmatpush1.msra.mxu0 %v39
  %3053 = vmatprep.subr.mxu0 0.0
  %3054 = vmatpush1.msra.mxu0 0.0
  %3055 = vmatprep.subr.mxu0 0.0
  %3056 = vmatpush1.msra.mxu0 0.0
  %3057 = vmatprep.subr.mxu0 0.0
  %3058 = vmatpush1.msra.mxu0 0.0
  %3059 = vmatprep.subr.mxu0 0.0
  %3060 = vmatpush1.msra.mxu0 0.0
  %3061 = vmatprep.subr.mxu0 0.0
  %3062 = vmatpush1.msra.mxu0 0.0
  %3063 = vmatprep.subr.mxu0 0.0
  %3064 = vmatpush1.msra.mxu0 0.0
  %3065 = vmatprep.subr.mxu0 0.0
  %3066 = vmatpush1.msra.mxu0 0.0
  %3067 = vmatprep.subr.mxu0 0.0
  %3068 = vmatpush1.msra.mxu0 0.0
  %3069 = vmatprep.subr.mxu0 0.0
  %3070 = vmatpush1.msra.mxu0 0.0
  %3071 = vmatprep.subr.mxu0 0.0
  %3072 = vmatpush1.msra.mxu0 0.0
  %3073 = vmatprep.subr.mxu0 0.0
  %3074 = vmatpush1.msra.mxu0 0.0
  %3075 = vmatprep.subr.mxu0 0.0
  %3076 = vmatpush1.msra.mxu0 0.0
  %3077 = vmatprep.subr.mxu0 0.0
  %3078 = vmatpush1.msra.mxu0 0.0
  %3079 = vmatprep.subr.mxu0 0.0
  %3080 = vmatpush1.msra.mxu0 0.0
  %3081 = vmatprep.subr.mxu0 0.0
  %3082 = vmatpush1.msra.mxu0 0.0
  %3083 = vmatprep.subr.mxu0 0.0
  %3084 = vmatpush1.msra.mxu0 0.0
  %3085 = vmatprep.subr.mxu0 0.0
  %3086 = vmatpush1.msra.mxu0 0.0
  %3087 = vmatprep.subr.mxu0 0.0
  %3088 = vmatpush1.msra.mxu0 0.0
  %3089 = vmatprep.subr.mxu0 0.0
  %3090 = vmatpush1.msra.mxu0 0.0
  %3091 = vmatprep.subr.mxu0 0.0
  %3092 = vmatpush1.msra.mxu0 0.0
  %3093 = vmatprep.subr.mxu0 0.0
  %3094 = vmatpush1.msra.mxu0 0.0
  %3095 = vmatprep.subr.mxu0 0.0
  %3096 = vmatpush1.msra.mxu0 0.0
  %3097 = vmatprep.subr.mxu0 0.0
  %3098 = vmatpush1.msra.mxu0 0.0
  %3099 = vmatprep.subr.mxu0 0.0
  %3100 = vmatpush1.msra.mxu0 0.0
  %3101 = vmatprep.subr.mxu0 0.0
  %3102 = vmatpush1.msra.mxu0 0.0
  %3103 = vmatprep.subr.mxu0 0.0
  %3104 = vmatpush1.msra.mxu0 0.0
  %3105 = vmatprep.subr.mxu0 0.0
  %3106 = vmatpush1.msra.mxu0 0.0
  %3107 = vmatprep.subr.mxu0 0.0
  %3108 = vmatpush1.msra.mxu0 0.0
  %3109 = vmatprep.mubr.f32.mxu0 0.0
  %3110 = vmatmul.mubr.f32.gmra.mrb[0].mxu0 %v2770
  %v3111 = vpop.f32.mrb[0].mxu0
  %v3112 = vadd.f32 0.0, %v3111
  %v3113 = vpop.f32.mrb[0].mxu0
  %3114 = vdwg.mxu0
  %v3115 = vadd.f32 %v3044, %v3112
  %v3116 = vtanh.pop %v3115
  %v3117 = vmul.f32 %v3116, 0.5
  %v3118 = vadd.f32 %v3117, 0.5
  %v3119 = vmul.f32 %v3118, %v2760
  %3121 = vrot.lane.b32.xlu0 %v3116, 64
  %v3122 = vpop.permute.xlu0 %3121
  %v3124 = vmul.f32 %v3118, %v3122
  %3126 = vrot.lane.b32.xlu0 %v3124, 32
  %v3127 = vpop.permute.xlu0 %3126
  %v3129 = vadd.f32 %v3119, %v3127
  %v3130 = vtanh.pop %v3129
  %3132 = vrot.lane.b32.xlu0 %v3130, 64
  %v3133 = vpop.permute.xlu0 %3132
  %v3135 = vmul.f32 %v3118, %v3133
  %3137 = vrot.lane.b32.xlu0 %v3135, 32
  %v3138 = vpop.permute.xlu0 %3137
  %v3139 = vsel %vm69, %v3138, 0
  %3141 = vmatprep.subr.mxu0 0.0
  %3142 = vmatpush1.msra.mxu0 %v40
  %3143 = vmatprep.subr.mxu0 0.0
  %3144 = vmatpush1.msra.mxu0 %v41
  %3145 = vmatprep.subr.mxu0 0.0
  %3146 = vmatpush1.msra.mxu0 %v42
  %3147 = vmatprep.subr.mxu0 0.0
  %3148 = vmatpush1.msra.mxu0 %v43
  %3149 = vmatprep.subr.mxu0 0.0
  %3150 = vmatpush1.msra.mxu0 0.0
  %3151 = vmatprep.subr.mxu0 0.0
  %3152 = vmatpush1.msra.mxu0 0.0
  %3153 = vmatprep.subr.mxu0 0.0
  %3154 = vmatpush1.msra.mxu0 0.0
  %3155 = vmatprep.subr.mxu0 0.0
  %3156 = vmatpush1.msra.mxu0 0.0
  %3157 = vmatprep.subr.mxu0 0.0
  %3158 = vmatpush1.msra.mxu0 0.0
  %3159 = vmatprep.subr.mxu0 0.0
  %3160 = vmatpush1.msra.mxu0 0.0
  %3161 = vmatprep.subr.mxu0 0.0
  %3162 = vmatpush1.msra.mxu0 0.0
  %3163 = vmatprep.subr.mxu0 0.0
  %3164 = vmatpush1.msra.mxu0 0.0
  %3165 = vmatprep.subr.mxu0 0.0
  %3166 = vmatpush1.msra.mxu0 0.0
  %3167 = vmatprep.subr.mxu0 0.0
  %3168 = vmatpush1.msra.mxu0 0.0
  %3169 = vmatprep.subr.mxu0 0.0
  %3170 = vmatpush1.msra.mxu0 0.0
  %3171 = vmatprep.subr.mxu0 0.0
  %3172 = vmatpush1.msra.mxu0 0.0
  %3173 = vmatprep.subr.mxu0 0.0
  %3174 = vmatpush1.msra.mxu0 0.0
  %3175 = vmatprep.subr.mxu0 0.0
  %3176 = vmatpush1.msra.mxu0 0.0
  %3177 = vmatprep.subr.mxu0 0.0
  %3178 = vmatpush1.msra.mxu0 0.0
  %3179 = vmatprep.subr.mxu0 0.0
  %3180 = vmatpush1.msra.mxu0 0.0
  %3181 = vmatprep.subr.mxu0 0.0
  %3182 = vmatpush1.msra.mxu0 0.0
  %3183 = vmatprep.subr.mxu0 0.0
  %3184 = vmatpush1.msra.mxu0 0.0
  %3185 = vmatprep.subr.mxu0 0.0
  %3186 = vmatpush1.msra.mxu0 0.0
  %3187 = vmatprep.subr.mxu0 0.0
  %3188 = vmatpush1.msra.mxu0 0.0
  %3189 = vmatprep.subr.mxu0 0.0
  %3190 = vmatpush1.msra.mxu0 0.0
  %3191 = vmatprep.subr.mxu0 0.0
  %3192 = vmatpush1.msra.mxu0 0.0
  %3193 = vmatprep.subr.mxu0 0.0
  %3194 = vmatpush1.msra.mxu0 0.0
  %3195 = vmatprep.subr.mxu0 0.0
  %3196 = vmatpush1.msra.mxu0 0.0
  %3197 = vmatprep.subr.mxu0 0.0
  %3198 = vmatpush1.msra.mxu0 0.0
  %3199 = vmatprep.subr.mxu0 0.0
  %3200 = vmatpush1.msra.mxu0 0.0
  %3201 = vmatprep.subr.mxu0 0.0
  %3202 = vmatpush1.msra.mxu0 0.0
  %3203 = vmatprep.subr.mxu0 0.0
  %3204 = vmatpush1.msra.mxu0 0.0
  %3205 = vmatprep.mubr.f32.mxu0 0.0
  %3206 = vmatmul.mubr.f32.gmra.mrb[0].mxu0 %v3139
  %v3207 = vpop.f32.mrb[0].mxu0
  %v3208 = vadd.f32 0.0, %v3207
  %v3209 = vpop.f32.mrb[0].mxu0
  %3210 = vdwg.mxu0
  %3212 = vrot.lane.b32.xlu0 %v2937, 32
  %v3213 = vpop.permute.xlu0 %3212
  %v3214 = vsel %vm69, %v3213, 0
  %3216 = vmatprep.subr.mxu0 0.0
  %3217 = vmatpush1.msra.mxu0 %v44
  %3218 = vmatprep.subr.mxu0 0.0
  %3219 = vmatpush1.msra.mxu0 %v45
  %3220 = vmatprep.subr.mxu0 0.0
  %3221 = vmatpush1.msra.mxu0 %v46
  %3222 = vmatprep.subr.mxu0 0.0
  %3223 = vmatpush1.msra.mxu0 %v47
  %3224 = vmatprep.subr.mxu0 0.0
  %3225 = vmatpush1.msra.mxu0 0.0
  %3226 = vmatprep.subr.mxu0 0.0
  %3227 = vmatpush1.msra.mxu0 0.0
  %3228 = vmatprep.subr.mxu0 0.0
  %3229 = vmatpush1.msra.mxu0 0.0
  %3230 = vmatprep.subr.mxu0 0.0
  %3231 = vmatpush1.msra.mxu0 0.0
  %3232 = vmatprep.subr.mxu0 0.0
  %3233 = vmatpush1.msra.mxu0 0.0
  %3234 = vmatprep.subr.mxu0 0.0
  %3235 = vmatpush1.msra.mxu0 0.0
  %3236 = vmatprep.subr.mxu0 0.0
  %3237 = vmatpush1.msra.mxu0 0.0
  %3238 = vmatprep.subr.mxu0 0.0
  %3239 = vmatpush1.msra.mxu0 0.0
  %3240 = vmatprep.subr.mxu0 0.0
  %3241 = vmatpush1.msra.mxu0 0.0
  %3242 = vmatprep.subr.mxu0 0.0
  %3243 = vmatpush1.msra.mxu0 0.0
  %3244 = vmatprep.subr.mxu0 0.0
  %3245 = vmatpush1.msra.mxu0 0.0
  %3246 = vmatprep.subr.mxu0 0.0
  %3247 = vmatpush1.msra.mxu0 0.0
  %3248 = vmatprep.subr.mxu0 0.0
  %3249 = vmatpush1.msra.mxu0 0.0
  %3250 = vmatprep.subr.mxu0 0.0
  %3251 = vmatpush1.msra.mxu0 0.0
  %3252 = vmatprep.subr.mxu0 0.0
  %3253 = vmatpush1.msra.mxu0 0.0
  %3254 = vmatprep.subr.mxu0 0.0
  %3255 = vmatpush1.msra.mxu0 0.0
  %3256 = vmatprep.subr.mxu0 0.0
  %3257 = vmatpush1.msra.mxu0 0.0
  %3258 = vmatprep.subr.mxu0 0.0
  %3259 = vmatpush1.msra.mxu0 0.0
  %3260 = vmatprep.subr.mxu0 0.0
  %3261 = vmatpush1.msra.mxu0 0.0
  %3262 = vmatprep.subr.mxu0 0.0
  %3263 = vmatpush1.msra.mxu0 0.0
  %3264 = vmatprep.subr.mxu0 0.0
  %3265 = vmatpush1.msra.mxu0 0.0
  %3266 = vmatprep.subr.mxu0 0.0
  %3267 = vmatpush1.msra.mxu0 0.0
  %3268 = vmatprep.subr.mxu0 0.0
  %3269 = vmatpush1.msra.mxu0 0.0
  %3270 = vmatprep.subr.mxu0 0.0
  %3271 = vmatpush1.msra.mxu0 0.0
  %3272 = vmatprep.subr.mxu0 0.0
  %3273 = vmatpush1.msra.mxu0 0.0
  %3274 = vmatprep.subr.mxu0 0.0
  %3275 = vmatpush1.msra.mxu0 0.0
  %3276 = vmatprep.subr.mxu0 0.0
  %3277 = vmatpush1.msra.mxu0 0.0
  %3278 = vmatprep.subr.mxu0 0.0
  %3279 = vmatpush1.msra.mxu0 0.0
  %3280 = vmatprep.mubr.f32.mxu0 0.0
  %3281 = vmatmul.mubr.f32.gmra.mrb[0].mxu0 %v3214
  %v3282 = vpop.f32.mrb[0].mxu0
  %v3283 = vadd.f32 %v3208, %v3282
  %v3284 = vpop.f32.mrb[0].mxu0
  %3285 = vdwg.mxu0
  %v3286 = vadd.f32 %v3283, %v313
  %v3287 = vtanh.pop %v3286
  %v3288 = vmul.f32 %v3287, 0.5
  %v3289 = vadd.f32 %v3288, 0.5
  %v3290 = vmul.f32 %v3289, %v2931
  %3292 = vrot.lane.b32.xlu0 %v3287, 64
  %v3293 = vpop.permute.xlu0 %3292
  %v3295 = vmul.f32 %v3289, %v3293
  %3297 = vrot.lane.b32.xlu0 %v3295, 32
  %v3298 = vpop.permute.xlu0 %3297
  %v3300 = vadd.f32 %v3290, %v3298
  %v3301 = vtanh.pop %v3300
  %3303 = vrot.lane.b32.xlu0 %v3301, 64
  %v3304 = vpop.permute.xlu0 %3303
  %v3306 = vmul.f32 %v3289, %v3304
  %v3307 = vmax.f32 %v3306, 0.0
  %3309 = vrot.lane.b32.xlu0 %v3307, 32
  %v3310 = vpop.permute.xlu0 %3309
  %v3311 = vsel %vm69, %v3310, 0
  %3313 = vmatprep.subr.mxu0 0.0
  %3314 = vmatpush1.msra.mxu0 %v49
  %3315 = vmatprep.subr.mxu0 0.0
  %3316 = vmatpush1.msra.mxu0 %v50
  %3317 = vmatprep.subr.mxu0 0.0
  %3318 = vmatpush1.msra.mxu0 %v51
  %3319 = vmatprep.subr.mxu0 0.0
  %3320 = vmatpush1.msra.mxu0 %v52
  %3321 = vmatprep.subr.mxu0 0.0
  %3322 = vmatpush1.msra.mxu0 0.0
  %3323 = vmatprep.subr.mxu0 0.0
  %3324 = vmatpush1.msra.mxu0 0.0
  %3325 = vmatprep.subr.mxu0 0.0
  %3326 = vmatpush1.msra.mxu0 0.0
  %3327 = vmatprep.subr.mxu0 0.0
  %3328 = vmatpush1.msra.mxu0 0.0
  %3329 = vmatprep.subr.mxu0 0.0
  %3330 = vmatpush1.msra.mxu0 0.0
  %3331 = vmatprep.subr.mxu0 0.0
  %3332 = vmatpush1.msra.mxu0 0.0
  %3333 = vmatprep.subr.mxu0 0.0
  %3334 = vmatpush1.msra.mxu0 0.0
  %3335 = vmatprep.subr.mxu0 0.0
  %3336 = vmatpush1.msra.mxu0 0.0
  %3337 = vmatprep.subr.mxu0 0.0
  %3338 = vmatpush1.msra.mxu0 0.0
  %3339 = vmatprep.subr.mxu0 0.0
  %3340 = vmatpush1.msra.mxu0 0.0
  %3341 = vmatprep.subr.mxu0 0.0
  %3342 = vmatpush1.msra.mxu0 0.0
  %3343 = vmatprep.subr.mxu0 0.0
  %3344 = vmatpush1.msra.mxu0 0.0
  %3345 = vmatprep.subr.mxu0 0.0
  %3346 = vmatpush1.msra.mxu0 0.0
  %3347 = vmatprep.subr.mxu0 0.0
  %3348 = vmatpush1.msra.mxu0 0.0
  %3349 = vmatprep.subr.mxu0 0.0
  %3350 = vmatpush1.msra.mxu0 0.0
  %3351 = vmatprep.subr.mxu0 0.0
  %3352 = vmatpush1.msra.mxu0 0.0
  %3353 = vmatprep.subr.mxu0 0.0
  %3354 = vmatpush1.msra.mxu0 0.0
  %3355 = vmatprep.subr.mxu0 0.0
  %3356 = vmatpush1.msra.mxu0 0.0
  %3357 = vmatprep.subr.mxu0 0.0
  %3358 = vmatpush1.msra.mxu0 0.0
  %3359 = vmatprep.subr.mxu0 0.0
  %3360 = vmatpush1.msra.mxu0 0.0
  %3361 = vmatprep.subr.mxu0 0.0
  %3362 = vmatpush1.msra.mxu0 0.0
  %3363 = vmatprep.subr.mxu0 0.0
  %3364 = vmatpush1.msra.mxu0 0.0
  %3365 = vmatprep.subr.mxu0 0.0
  %3366 = vmatpush1.msra.mxu0 0.0
  %3367 = vmatprep.subr.mxu0 0.0
  %3368 = vmatpush1.msra.mxu0 0.0
  %3369 = vmatprep.subr.mxu0 0.0
  %3370 = vmatpush1.msra.mxu0 0.0
  %3371 = vmatprep.subr.mxu0 0.0
  %3372 = vmatpush1.msra.mxu0 0.0
  %3373 = vmatprep.subr.mxu0 0.0
  %3374 = vmatpush1.msra.mxu0 0.0
  %3375 = vmatprep.subr.mxu0 0.0
  %3376 = vmatpush1.msra.mxu0 0.0
  %3377 = vmatprep.mubr.f32.mxu0 0.0
  %3378 = vmatmul.mubr.f32.gmra.mrb[0].mxu0 %v3311
  %v3379 = vpop.f32.mrb[0].mxu0
  %v3380 = vadd.f32 %v341, %v3379
  %v3381 = vpop.f32.mrb[0].mxu0
  %3382 = vdwg.mxu0
  %v3383 = vmax.f32 %v3380, 0.0
  %v3384 = vand.u32 2147483647, %v3380
  %v3385 = vsub.f32 0.0, %v3384
  %v3386 = vmul.f32 %v3385, 1.442695
  %v3387 = vpow.pop %v3386
  %v3388 = vadd.f32 %v3387, 1.0
  %v3389 = vlog2.pop %v3388
  %v3390 = vmul.f32 %v3389, 0.6931472
  %v3391 = vadd.f32 %v3383, %v3390
  %v3392 = vadd.f32 %v3391, 1e-06
  %s3393 = scalar_lea.vmem %s2, 64
  %v3394 = vld [vmem:[%s3393] sm:$0xff]
  %3396 = vrot.lane.b32.xlu0 %v3394, 1
  %v3397 = vpop.permute.xlu0 %3396
  %v3399 = vmul.f32 %v3392, %v3397
  %3401 = vrot.lane.b32.xlu0 %v3399, 127
  %v3402 = vpop.permute.xlu0 %3401
  %v3404 = vadd.f32 %v3380, %v3402
  %s3405 = scalar_lea.vmem %s0, 72
  %v3406 = vld [vmem:[%s3405] sm:$0xff]
  %3408 = vset.pattern.permute.xlu0 0
  %3409 = vperm.xlu0 %3408, %v3404
  %v3410 = vpop.permute.xlu0 %3409
  %v3412 = vmul.f32 %v3410, %v65
  %v3413 = vadd.f32 %v3406, %v3412
  %3414 = vmatprep.subr.mxu0 0.0
  %3415 = vmatpush1.msra.mxu0 %v36
  %3416 = vmatprep.subr.mxu0 0.0
  %3417 = vmatpush1.msra.mxu0 %v37
  %3418 = vmatprep.subr.mxu0 0.0
  %3419 = vmatpush1.msra.mxu0 %v38
  %3420 = vmatprep.subr.mxu0 0.0
  %3421 = vmatpush1.msra.mxu0 %v39
  %3422 = vmatprep.subr.mxu0 0.0
  %3423 = vmatpush1.msra.mxu0 0.0
  %3424 = vmatprep.subr.mxu0 0.0
  %3425 = vmatpush1.msra.mxu0 0.0
  %3426 = vmatprep.subr.mxu0 0.0
  %3427 = vmatpush1.msra.mxu0 0.0
  %3428 = vmatprep.subr.mxu0 0.0
  %3429 = vmatpush1.msra.mxu0 0.0
  %3430 = vmatprep.subr.mxu0 0.0
  %3431 = vmatpush1.msra.mxu0 0.0
  %3432 = vmatprep.subr.mxu0 0.0
  %3433 = vmatpush1.msra.mxu0 0.0
  %3434 = vmatprep.subr.mxu0 0.0
  %3435 = vmatpush1.msra.mxu0 0.0
  %3436 = vmatprep.subr.mxu0 0.0
  %3437 = vmatpush1.msra.mxu0 0.0
  %3438 = vmatprep.subr.mxu0 0.0
  %3439 = vmatpush1.msra.mxu0 0.0
  %3440 = vmatprep.subr.mxu0 0.0
  %3441 = vmatpush1.msra.mxu0 0.0
  %3442 = vmatprep.subr.mxu0 0.0
  %3443 = vmatpush1.msra.mxu0 0.0
  %3444 = vmatprep.subr.mxu0 0.0
  %3445 = vmatpush1.msra.mxu0 0.0
  %3446 = vmatprep.subr.mxu0 0.0
  %3447 = vmatpush1.msra.mxu0 0.0
  %3448 = vmatprep.subr.mxu0 0.0
  %3449 = vmatpush1.msra.mxu0 0.0
  %3450 = vmatprep.subr.mxu0 0.0
  %3451 = vmatpush1.msra.mxu0 0.0
  %3452 = vmatprep.subr.mxu0 0.0
  %3453 = vmatpush1.msra.mxu0 0.0
  %3454 = vmatprep.subr.mxu0 0.0
  %3455 = vmatpush1.msra.mxu0 0.0
  %3456 = vmatprep.subr.mxu0 0.0
  %3457 = vmatpush1.msra.mxu0 0.0
  %3458 = vmatprep.subr.mxu0 0.0
  %3459 = vmatpush1.msra.mxu0 0.0
  %3460 = vmatprep.subr.mxu0 0.0
  %3461 = vmatpush1.msra.mxu0 0.0
  %3462 = vmatprep.subr.mxu0 0.0
  %3463 = vmatpush1.msra.mxu0 0.0
  %3464 = vmatprep.subr.mxu0 0.0
  %3465 = vmatpush1.msra.mxu0 0.0
  %3466 = vmatprep.subr.mxu0 0.0
  %3467 = vmatpush1.msra.mxu0 0.0
  %3468 = vmatprep.subr.mxu0 0.0
  %3469 = vmatpush1.msra.mxu0 0.0
  %3470 = vmatprep.subr.mxu0 0.0
  %3471 = vmatpush1.msra.mxu0 0.0
  %3472 = vmatprep.subr.mxu0 0.0
  %3473 = vmatpush1.msra.mxu0 0.0
  %3474 = vmatprep.subr.mxu0 0.0
  %3475 = vmatpush1.msra.mxu0 0.0
  %3476 = vmatprep.subr.mxu0 0.0
  %3477 = vmatpush1.msra.mxu0 0.0
  %3478 = vmatprep.mubr.f32.mxu0 0.0
  %3479 = vmatmul.mubr.f32.gmra.mrb[0].mxu0 %v3139
  %v3480 = vpop.f32.mrb[0].mxu0
  %v3481 = vadd.f32 0.0, %v3480
  %v3482 = vpop.f32.mrb[0].mxu0
  %3483 = vdwg.mxu0
  %v3484 = vadd.f32 %v3413, %v3481
  %v3485 = vtanh.pop %v3484
  %v3486 = vmul.f32 %v3485, 0.5
  %v3487 = vadd.f32 %v3486, 0.5
  %v3488 = vmul.f32 %v3487, %v3129
  %3490 = vrot.lane.b32.xlu0 %v3485, 64
  %v3491 = vpop.permute.xlu0 %3490
  %v3493 = vmul.f32 %v3487, %v3491
  %3495 = vrot.lane.b32.xlu0 %v3493, 32
  %v3496 = vpop.permute.xlu0 %3495
  %v3498 = vadd.f32 %v3488, %v3496
  %v3499 = vtanh.pop %v3498
  %3501 = vrot.lane.b32.xlu0 %v3499, 64
  %v3502 = vpop.permute.xlu0 %3501
  %v3504 = vmul.f32 %v3487, %v3502
  %3506 = vrot.lane.b32.xlu0 %v3504, 32
  %v3507 = vpop.permute.xlu0 %3506
  %v3508 = vsel %vm69, %v3507, 0
  %3510 = vmatprep.subr.mxu0 0.0
  %3511 = vmatpush1.msra.mxu0 %v40
  %3512 = vmatprep.subr.mxu0 0.0
  %3513 = vmatpush1.msra.mxu0 %v41
  %3514 = vmatprep.subr.mxu0 0.0
  %3515 = vmatpush1.msra.mxu0 %v42
  %3516 = vmatprep.subr.mxu0 0.0
  %3517 = vmatpush1.msra.mxu0 %v43
  %3518 = vmatprep.subr.mxu0 0.0
  %3519 = vmatpush1.msra.mxu0 0.0
  %3520 = vmatprep.subr.mxu0 0.0
  %3521 = vmatpush1.msra.mxu0 0.0
  %3522 = vmatprep.subr.mxu0 0.0
  %3523 = vmatpush1.msra.mxu0 0.0
  %3524 = vmatprep.subr.mxu0 0.0
  %3525 = vmatpush1.msra.mxu0 0.0
  %3526 = vmatprep.subr.mxu0 0.0
  %3527 = vmatpush1.msra.mxu0 0.0
  %3528 = vmatprep.subr.mxu0 0.0
  %3529 = vmatpush1.msra.mxu0 0.0
  %3530 = vmatprep.subr.mxu0 0.0
  %3531 = vmatpush1.msra.mxu0 0.0
  %3532 = vmatprep.subr.mxu0 0.0
  %3533 = vmatpush1.msra.mxu0 0.0
  %3534 = vmatprep.subr.mxu0 0.0
  %3535 = vmatpush1.msra.mxu0 0.0
  %3536 = vmatprep.subr.mxu0 0.0
  %3537 = vmatpush1.msra.mxu0 0.0
  %3538 = vmatprep.subr.mxu0 0.0
  %3539 = vmatpush1.msra.mxu0 0.0
  %3540 = vmatprep.subr.mxu0 0.0
  %3541 = vmatpush1.msra.mxu0 0.0
  %3542 = vmatprep.subr.mxu0 0.0
  %3543 = vmatpush1.msra.mxu0 0.0
  %3544 = vmatprep.subr.mxu0 0.0
  %3545 = vmatpush1.msra.mxu0 0.0
  %3546 = vmatprep.subr.mxu0 0.0
  %3547 = vmatpush1.msra.mxu0 0.0
  %3548 = vmatprep.subr.mxu0 0.0
  %3549 = vmatpush1.msra.mxu0 0.0
  %3550 = vmatprep.subr.mxu0 0.0
  %3551 = vmatpush1.msra.mxu0 0.0
  %3552 = vmatprep.subr.mxu0 0.0
  %3553 = vmatpush1.msra.mxu0 0.0
  %3554 = vmatprep.subr.mxu0 0.0
  %3555 = vmatpush1.msra.mxu0 0.0
  %3556 = vmatprep.subr.mxu0 0.0
  %3557 = vmatpush1.msra.mxu0 0.0
  %3558 = vmatprep.subr.mxu0 0.0
  %3559 = vmatpush1.msra.mxu0 0.0
  %3560 = vmatprep.subr.mxu0 0.0
  %3561 = vmatpush1.msra.mxu0 0.0
  %3562 = vmatprep.subr.mxu0 0.0
  %3563 = vmatpush1.msra.mxu0 0.0
  %3564 = vmatprep.subr.mxu0 0.0
  %3565 = vmatpush1.msra.mxu0 0.0
  %3566 = vmatprep.subr.mxu0 0.0
  %3567 = vmatpush1.msra.mxu0 0.0
  %3568 = vmatprep.subr.mxu0 0.0
  %3569 = vmatpush1.msra.mxu0 0.0
  %3570 = vmatprep.subr.mxu0 0.0
  %3571 = vmatpush1.msra.mxu0 0.0
  %3572 = vmatprep.subr.mxu0 0.0
  %3573 = vmatpush1.msra.mxu0 0.0
  %3574 = vmatprep.mubr.f32.mxu0 0.0
  %3575 = vmatmul.mubr.f32.gmra.mrb[0].mxu0 %v3508
  %v3576 = vpop.f32.mrb[0].mxu0
  %v3577 = vadd.f32 0.0, %v3576
  %v3578 = vpop.f32.mrb[0].mxu0
  %3579 = vdwg.mxu0
  %3581 = vrot.lane.b32.xlu0 %v3306, 32
  %v3582 = vpop.permute.xlu0 %3581
  %v3583 = vsel %vm69, %v3582, 0
  %3585 = vmatprep.subr.mxu0 0.0
  %3586 = vmatpush1.msra.mxu0 %v44
  %3587 = vmatprep.subr.mxu0 0.0
  %3588 = vmatpush1.msra.mxu0 %v45
  %3589 = vmatprep.subr.mxu0 0.0
  %3590 = vmatpush1.msra.mxu0 %v46
  %3591 = vmatprep.subr.mxu0 0.0
  %3592 = vmatpush1.msra.mxu0 %v47
  %3593 = vmatprep.subr.mxu0 0.0
  %3594 = vmatpush1.msra.mxu0 0.0
  %3595 = vmatprep.subr.mxu0 0.0
  %3596 = vmatpush1.msra.mxu0 0.0
  %3597 = vmatprep.subr.mxu0 0.0
  %3598 = vmatpush1.msra.mxu0 0.0
  %3599 = vmatprep.subr.mxu0 0.0
  %3600 = vmatpush1.msra.mxu0 0.0
  %3601 = vmatprep.subr.mxu0 0.0
  %3602 = vmatpush1.msra.mxu0 0.0
  %3603 = vmatprep.subr.mxu0 0.0
  %3604 = vmatpush1.msra.mxu0 0.0
  %3605 = vmatprep.subr.mxu0 0.0
  %3606 = vmatpush1.msra.mxu0 0.0
  %3607 = vmatprep.subr.mxu0 0.0
  %3608 = vmatpush1.msra.mxu0 0.0
  %3609 = vmatprep.subr.mxu0 0.0
  %3610 = vmatpush1.msra.mxu0 0.0
  %3611 = vmatprep.subr.mxu0 0.0
  %3612 = vmatpush1.msra.mxu0 0.0
  %3613 = vmatprep.subr.mxu0 0.0
  %3614 = vmatpush1.msra.mxu0 0.0
  %3615 = vmatprep.subr.mxu0 0.0
  %3616 = vmatpush1.msra.mxu0 0.0
  %3617 = vmatprep.subr.mxu0 0.0
  %3618 = vmatpush1.msra.mxu0 0.0
  %3619 = vmatprep.subr.mxu0 0.0
  %3620 = vmatpush1.msra.mxu0 0.0
  %3621 = vmatprep.subr.mxu0 0.0
  %3622 = vmatpush1.msra.mxu0 0.0
  %3623 = vmatprep.subr.mxu0 0.0
  %3624 = vmatpush1.msra.mxu0 0.0
  %3625 = vmatprep.subr.mxu0 0.0
  %3626 = vmatpush1.msra.mxu0 0.0
  %3627 = vmatprep.subr.mxu0 0.0
  %3628 = vmatpush1.msra.mxu0 0.0
  %3629 = vmatprep.subr.mxu0 0.0
  %3630 = vmatpush1.msra.mxu0 0.0
  %3631 = vmatprep.subr.mxu0 0.0
  %3632 = vmatpush1.msra.mxu0 0.0
  %3633 = vmatprep.subr.mxu0 0.0
  %3634 = vmatpush1.msra.mxu0 0.0
  %3635 = vmatprep.subr.mxu0 0.0
  %3636 = vmatpush1.msra.mxu0 0.0
  %3637 = vmatprep.subr.mxu0 0.0
  %3638 = vmatpush1.msra.mxu0 0.0
  %3639 = vmatprep.subr.mxu0 0.0
  %3640 = vmatpush1.msra.mxu0 0.0
  %3641 = vmatprep.subr.mxu0 0.0
  %3642 = vmatpush1.msra.mxu0 0.0
  %3643 = vmatprep.subr.mxu0 0.0
  %3644 = vmatpush1.msra.mxu0 0.0
  %3645 = vmatprep.subr.mxu0 0.0
  %3646 = vmatpush1.msra.mxu0 0.0
  %3647 = vmatprep.subr.mxu0 0.0
  %3648 = vmatpush1.msra.mxu0 0.0
  %3649 = vmatprep.mubr.f32.mxu0 0.0
  %3650 = vmatmul.mubr.f32.gmra.mrb[0].mxu0 %v3583
  %v3651 = vpop.f32.mrb[0].mxu0
  %v3652 = vadd.f32 %v3577, %v3651
  %v3653 = vpop.f32.mrb[0].mxu0
  %3654 = vdwg.mxu0
  %v3655 = vadd.f32 %v3652, %v313
  %v3656 = vtanh.pop %v3655
  %v3657 = vmul.f32 %v3656, 0.5
  %v3658 = vadd.f32 %v3657, 0.5
  %v3659 = vmul.f32 %v3658, %v3300
  %3661 = vrot.lane.b32.xlu0 %v3656, 64
  %v3662 = vpop.permute.xlu0 %3661
  %v3664 = vmul.f32 %v3658, %v3662
  %3666 = vrot.lane.b32.xlu0 %v3664, 32
  %v3667 = vpop.permute.xlu0 %3666
  %v3669 = vadd.f32 %v3659, %v3667
  %v3670 = vtanh.pop %v3669
  %3672 = vrot.lane.b32.xlu0 %v3670, 64
  %v3673 = vpop.permute.xlu0 %3672
  %v3675 = vmul.f32 %v3658, %v3673
  %v3676 = vmax.f32 %v3675, 0.0
  %3678 = vrot.lane.b32.xlu0 %v3676, 32
  %v3679 = vpop.permute.xlu0 %3678
  %v3680 = vsel %vm69, %v3679, 0
  %3682 = vmatprep.subr.mxu0 0.0
  %3683 = vmatpush1.msra.mxu0 %v49
  %3684 = vmatprep.subr.mxu0 0.0
  %3685 = vmatpush1.msra.mxu0 %v50
  %3686 = vmatprep.subr.mxu0 0.0
  %3687 = vmatpush1.msra.mxu0 %v51
  %3688 = vmatprep.subr.mxu0 0.0
  %3689 = vmatpush1.msra.mxu0 %v52
  %3690 = vmatprep.subr.mxu0 0.0
  %3691 = vmatpush1.msra.mxu0 0.0
  %3692 = vmatprep.subr.mxu0 0.0
  %3693 = vmatpush1.msra.mxu0 0.0
  %3694 = vmatprep.subr.mxu0 0.0
  %3695 = vmatpush1.msra.mxu0 0.0
  %3696 = vmatprep.subr.mxu0 0.0
  %3697 = vmatpush1.msra.mxu0 0.0
  %3698 = vmatprep.subr.mxu0 0.0
  %3699 = vmatpush1.msra.mxu0 0.0
  %3700 = vmatprep.subr.mxu0 0.0
  %3701 = vmatpush1.msra.mxu0 0.0
  %3702 = vmatprep.subr.mxu0 0.0
  %3703 = vmatpush1.msra.mxu0 0.0
  %3704 = vmatprep.subr.mxu0 0.0
  %3705 = vmatpush1.msra.mxu0 0.0
  %3706 = vmatprep.subr.mxu0 0.0
  %3707 = vmatpush1.msra.mxu0 0.0
  %3708 = vmatprep.subr.mxu0 0.0
  %3709 = vmatpush1.msra.mxu0 0.0
  %3710 = vmatprep.subr.mxu0 0.0
  %3711 = vmatpush1.msra.mxu0 0.0
  %3712 = vmatprep.subr.mxu0 0.0
  %3713 = vmatpush1.msra.mxu0 0.0
  %3714 = vmatprep.subr.mxu0 0.0
  %3715 = vmatpush1.msra.mxu0 0.0
  %3716 = vmatprep.subr.mxu0 0.0
  %3717 = vmatpush1.msra.mxu0 0.0
  %3718 = vmatprep.subr.mxu0 0.0
  %3719 = vmatpush1.msra.mxu0 0.0
  %3720 = vmatprep.subr.mxu0 0.0
  %3721 = vmatpush1.msra.mxu0 0.0
  %3722 = vmatprep.subr.mxu0 0.0
  %3723 = vmatpush1.msra.mxu0 0.0
  %3724 = vmatprep.subr.mxu0 0.0
  %3725 = vmatpush1.msra.mxu0 0.0
  %3726 = vmatprep.subr.mxu0 0.0
  %3727 = vmatpush1.msra.mxu0 0.0
  %3728 = vmatprep.subr.mxu0 0.0
  %3729 = vmatpush1.msra.mxu0 0.0
  %3730 = vmatprep.subr.mxu0 0.0
  %3731 = vmatpush1.msra.mxu0 0.0
  %3732 = vmatprep.subr.mxu0 0.0
  %3733 = vmatpush1.msra.mxu0 0.0
  %3734 = vmatprep.subr.mxu0 0.0
  %3735 = vmatpush1.msra.mxu0 0.0
  %3736 = vmatprep.subr.mxu0 0.0
  %3737 = vmatpush1.msra.mxu0 0.0
  %3738 = vmatprep.subr.mxu0 0.0
  %3739 = vmatpush1.msra.mxu0 0.0
  %3740 = vmatprep.subr.mxu0 0.0
  %3741 = vmatpush1.msra.mxu0 0.0
  %3742 = vmatprep.subr.mxu0 0.0
  %3743 = vmatpush1.msra.mxu0 0.0
  %3744 = vmatprep.subr.mxu0 0.0
  %3745 = vmatpush1.msra.mxu0 0.0
  %3746 = vmatprep.mubr.f32.mxu0 0.0
  %3747 = vmatmul.mubr.f32.gmra.mrb[0].mxu0 %v3680
  %v3748 = vpop.f32.mrb[0].mxu0
  %v3749 = vadd.f32 %v341, %v3748
  %v3750 = vpop.f32.mrb[0].mxu0
  %3751 = vdwg.mxu0
  %v3752 = vmax.f32 %v3749, 0.0
  %v3753 = vand.u32 2147483647, %v3749
  %v3754 = vsub.f32 0.0, %v3753
  %v3755 = vmul.f32 %v3754, 1.442695
  %v3756 = vpow.pop %v3755
  %v3757 = vadd.f32 %v3756, 1.0
  %v3758 = vlog2.pop %v3757
  %v3759 = vmul.f32 %v3758, 0.6931472
  %v3760 = vadd.f32 %v3752, %v3759
  %v3761 = vadd.f32 %v3760, 1e-06
  %s3762 = scalar_lea.vmem %s2, 72
  %v3763 = vld [vmem:[%s3762] sm:$0xff]
  %3765 = vrot.lane.b32.xlu0 %v3763, 1
  %v3766 = vpop.permute.xlu0 %3765
  %v3768 = vmul.f32 %v3761, %v3766
  %3770 = vrot.lane.b32.xlu0 %v3768, 127
  %v3771 = vpop.permute.xlu0 %3770
  %v3773 = vadd.f32 %v3749, %v3771
  %s3774 = scalar_lea.vmem %s0, 80
  %v3775 = vld [vmem:[%s3774] sm:$0xff]
  %3777 = vset.pattern.permute.xlu0 0
  %3778 = vperm.xlu0 %3777, %v3773
  %v3779 = vpop.permute.xlu0 %3778
  %v3781 = vmul.f32 %v3779, %v65
  %v3782 = vadd.f32 %v3775, %v3781
  %3783 = vmatprep.subr.mxu0 0.0
  %3784 = vmatpush1.msra.mxu0 %v36
  %3785 = vmatprep.subr.mxu0 0.0
  %3786 = vmatpush1.msra.mxu0 %v37
  %3787 = vmatprep.subr.mxu0 0.0
  %3788 = vmatpush1.msra.mxu0 %v38
  %3789 = vmatprep.subr.mxu0 0.0
  %3790 = vmatpush1.msra.mxu0 %v39
  %3791 = vmatprep.subr.mxu0 0.0
  %3792 = vmatpush1.msra.mxu0 0.0
  %3793 = vmatprep.subr.mxu0 0.0
  %3794 = vmatpush1.msra.mxu0 0.0
  %3795 = vmatprep.subr.mxu0 0.0
  %3796 = vmatpush1.msra.mxu0 0.0
  %3797 = vmatprep.subr.mxu0 0.0
  %3798 = vmatpush1.msra.mxu0 0.0
  %3799 = vmatprep.subr.mxu0 0.0
  %3800 = vmatpush1.msra.mxu0 0.0
  %3801 = vmatprep.subr.mxu0 0.0
  %3802 = vmatpush1.msra.mxu0 0.0
  %3803 = vmatprep.subr.mxu0 0.0
  %3804 = vmatpush1.msra.mxu0 0.0
  %3805 = vmatprep.subr.mxu0 0.0
  %3806 = vmatpush1.msra.mxu0 0.0
  %3807 = vmatprep.subr.mxu0 0.0
  %3808 = vmatpush1.msra.mxu0 0.0
  %3809 = vmatprep.subr.mxu0 0.0
  %3810 = vmatpush1.msra.mxu0 0.0
  %3811 = vmatprep.subr.mxu0 0.0
  %3812 = vmatpush1.msra.mxu0 0.0
  %3813 = vmatprep.subr.mxu0 0.0
  %3814 = vmatpush1.msra.mxu0 0.0
  %3815 = vmatprep.subr.mxu0 0.0
  %3816 = vmatpush1.msra.mxu0 0.0
  %3817 = vmatprep.subr.mxu0 0.0
  %3818 = vmatpush1.msra.mxu0 0.0
  %3819 = vmatprep.subr.mxu0 0.0
  %3820 = vmatpush1.msra.mxu0 0.0
  %3821 = vmatprep.subr.mxu0 0.0
  %3822 = vmatpush1.msra.mxu0 0.0
  %3823 = vmatprep.subr.mxu0 0.0
  %3824 = vmatpush1.msra.mxu0 0.0
  %3825 = vmatprep.subr.mxu0 0.0
  %3826 = vmatpush1.msra.mxu0 0.0
  %3827 = vmatprep.subr.mxu0 0.0
  %3828 = vmatpush1.msra.mxu0 0.0
  %3829 = vmatprep.subr.mxu0 0.0
  %3830 = vmatpush1.msra.mxu0 0.0
  %3831 = vmatprep.subr.mxu0 0.0
  %3832 = vmatpush1.msra.mxu0 0.0
  %3833 = vmatprep.subr.mxu0 0.0
  %3834 = vmatpush1.msra.mxu0 0.0
  %3835 = vmatprep.subr.mxu0 0.0
  %3836 = vmatpush1.msra.mxu0 0.0
  %3837 = vmatprep.subr.mxu0 0.0
  %3838 = vmatpush1.msra.mxu0 0.0
  %3839 = vmatprep.subr.mxu0 0.0
  %3840 = vmatpush1.msra.mxu0 0.0
  %3841 = vmatprep.subr.mxu0 0.0
  %3842 = vmatpush1.msra.mxu0 0.0
  %3843 = vmatprep.subr.mxu0 0.0
  %3844 = vmatpush1.msra.mxu0 0.0
  %3845 = vmatprep.subr.mxu0 0.0
  %3846 = vmatpush1.msra.mxu0 0.0
  %3847 = vmatprep.mubr.f32.mxu0 0.0
  %3848 = vmatmul.mubr.f32.gmra.mrb[0].mxu0 %v3508
  %v3849 = vpop.f32.mrb[0].mxu0
  %v3850 = vadd.f32 0.0, %v3849
  %v3851 = vpop.f32.mrb[0].mxu0
  %3852 = vdwg.mxu0
  %v3853 = vadd.f32 %v3782, %v3850
  %v3854 = vtanh.pop %v3853
  %v3855 = vmul.f32 %v3854, 0.5
  %v3856 = vadd.f32 %v3855, 0.5
  %v3857 = vmul.f32 %v3856, %v3498
  %3859 = vrot.lane.b32.xlu0 %v3854, 64
  %v3860 = vpop.permute.xlu0 %3859
  %v3862 = vmul.f32 %v3856, %v3860
  %3864 = vrot.lane.b32.xlu0 %v3862, 32
  %v3865 = vpop.permute.xlu0 %3864
  %v3867 = vadd.f32 %v3857, %v3865
  %v3868 = vtanh.pop %v3867
  %3870 = vrot.lane.b32.xlu0 %v3868, 64
  %v3871 = vpop.permute.xlu0 %3870
  %v3873 = vmul.f32 %v3856, %v3871
  %3875 = vrot.lane.b32.xlu0 %v3873, 32
  %v3876 = vpop.permute.xlu0 %3875
  %v3877 = vsel %vm69, %v3876, 0
  %3879 = vmatprep.subr.mxu0 0.0
  %3880 = vmatpush1.msra.mxu0 %v40
  %3881 = vmatprep.subr.mxu0 0.0
  %3882 = vmatpush1.msra.mxu0 %v41
  %3883 = vmatprep.subr.mxu0 0.0
  %3884 = vmatpush1.msra.mxu0 %v42
  %3885 = vmatprep.subr.mxu0 0.0
  %3886 = vmatpush1.msra.mxu0 %v43
  %3887 = vmatprep.subr.mxu0 0.0
  %3888 = vmatpush1.msra.mxu0 0.0
  %3889 = vmatprep.subr.mxu0 0.0
  %3890 = vmatpush1.msra.mxu0 0.0
  %3891 = vmatprep.subr.mxu0 0.0
  %3892 = vmatpush1.msra.mxu0 0.0
  %3893 = vmatprep.subr.mxu0 0.0
  %3894 = vmatpush1.msra.mxu0 0.0
  %3895 = vmatprep.subr.mxu0 0.0
  %3896 = vmatpush1.msra.mxu0 0.0
  %3897 = vmatprep.subr.mxu0 0.0
  %3898 = vmatpush1.msra.mxu0 0.0
  %3899 = vmatprep.subr.mxu0 0.0
  %3900 = vmatpush1.msra.mxu0 0.0
  %3901 = vmatprep.subr.mxu0 0.0
  %3902 = vmatpush1.msra.mxu0 0.0
  %3903 = vmatprep.subr.mxu0 0.0
  %3904 = vmatpush1.msra.mxu0 0.0
  %3905 = vmatprep.subr.mxu0 0.0
  %3906 = vmatpush1.msra.mxu0 0.0
  %3907 = vmatprep.subr.mxu0 0.0
  %3908 = vmatpush1.msra.mxu0 0.0
  %3909 = vmatprep.subr.mxu0 0.0
  %3910 = vmatpush1.msra.mxu0 0.0
  %3911 = vmatprep.subr.mxu0 0.0
  %3912 = vmatpush1.msra.mxu0 0.0
  %3913 = vmatprep.subr.mxu0 0.0
  %3914 = vmatpush1.msra.mxu0 0.0
  %3915 = vmatprep.subr.mxu0 0.0
  %3916 = vmatpush1.msra.mxu0 0.0
  %3917 = vmatprep.subr.mxu0 0.0
  %3918 = vmatpush1.msra.mxu0 0.0
  %3919 = vmatprep.subr.mxu0 0.0
  %3920 = vmatpush1.msra.mxu0 0.0
  %3921 = vmatprep.subr.mxu0 0.0
  %3922 = vmatpush1.msra.mxu0 0.0
  %3923 = vmatprep.subr.mxu0 0.0
  %3924 = vmatpush1.msra.mxu0 0.0
  %3925 = vmatprep.subr.mxu0 0.0
  %3926 = vmatpush1.msra.mxu0 0.0
  %3927 = vmatprep.subr.mxu0 0.0
  %3928 = vmatpush1.msra.mxu0 0.0
  %3929 = vmatprep.subr.mxu0 0.0
  %3930 = vmatpush1.msra.mxu0 0.0
  %3931 = vmatprep.subr.mxu0 0.0
  %3932 = vmatpush1.msra.mxu0 0.0
  %3933 = vmatprep.subr.mxu0 0.0
  %3934 = vmatpush1.msra.mxu0 0.0
  %3935 = vmatprep.subr.mxu0 0.0
  %3936 = vmatpush1.msra.mxu0 0.0
  %3937 = vmatprep.subr.mxu0 0.0
  %3938 = vmatpush1.msra.mxu0 0.0
  %3939 = vmatprep.subr.mxu0 0.0
  %3940 = vmatpush1.msra.mxu0 0.0
  %3941 = vmatprep.subr.mxu0 0.0
  %3942 = vmatpush1.msra.mxu0 0.0
  %3943 = vmatprep.mubr.f32.mxu0 0.0
  %3944 = vmatmul.mubr.f32.gmra.mrb[0].mxu0 %v3877
  %v3945 = vpop.f32.mrb[0].mxu0
  %v3946 = vadd.f32 0.0, %v3945
  %v3947 = vpop.f32.mrb[0].mxu0
  %3948 = vdwg.mxu0
  %3950 = vrot.lane.b32.xlu0 %v3675, 32
  %v3951 = vpop.permute.xlu0 %3950
  %v3952 = vsel %vm69, %v3951, 0
  %3954 = vmatprep.subr.mxu0 0.0
  %3955 = vmatpush1.msra.mxu0 %v44
  %3956 = vmatprep.subr.mxu0 0.0
  %3957 = vmatpush1.msra.mxu0 %v45
  %3958 = vmatprep.subr.mxu0 0.0
  %3959 = vmatpush1.msra.mxu0 %v46
  %3960 = vmatprep.subr.mxu0 0.0
  %3961 = vmatpush1.msra.mxu0 %v47
  %3962 = vmatprep.subr.mxu0 0.0
  %3963 = vmatpush1.msra.mxu0 0.0
  %3964 = vmatprep.subr.mxu0 0.0
  %3965 = vmatpush1.msra.mxu0 0.0
  %3966 = vmatprep.subr.mxu0 0.0
  %3967 = vmatpush1.msra.mxu0 0.0
  %3968 = vmatprep.subr.mxu0 0.0
  %3969 = vmatpush1.msra.mxu0 0.0
  %3970 = vmatprep.subr.mxu0 0.0
  %3971 = vmatpush1.msra.mxu0 0.0
  %3972 = vmatprep.subr.mxu0 0.0
  %3973 = vmatpush1.msra.mxu0 0.0
  %3974 = vmatprep.subr.mxu0 0.0
  %3975 = vmatpush1.msra.mxu0 0.0
  %3976 = vmatprep.subr.mxu0 0.0
  %3977 = vmatpush1.msra.mxu0 0.0
  %3978 = vmatprep.subr.mxu0 0.0
  %3979 = vmatpush1.msra.mxu0 0.0
  %3980 = vmatprep.subr.mxu0 0.0
  %3981 = vmatpush1.msra.mxu0 0.0
  %3982 = vmatprep.subr.mxu0 0.0
  %3983 = vmatpush1.msra.mxu0 0.0
  %3984 = vmatprep.subr.mxu0 0.0
  %3985 = vmatpush1.msra.mxu0 0.0
  %3986 = vmatprep.subr.mxu0 0.0
  %3987 = vmatpush1.msra.mxu0 0.0
  %3988 = vmatprep.subr.mxu0 0.0
  %3989 = vmatpush1.msra.mxu0 0.0
  %3990 = vmatprep.subr.mxu0 0.0
  %3991 = vmatpush1.msra.mxu0 0.0
  %3992 = vmatprep.subr.mxu0 0.0
  %3993 = vmatpush1.msra.mxu0 0.0
  %3994 = vmatprep.subr.mxu0 0.0
  %3995 = vmatpush1.msra.mxu0 0.0
  %3996 = vmatprep.subr.mxu0 0.0
  %3997 = vmatpush1.msra.mxu0 0.0
  %3998 = vmatprep.subr.mxu0 0.0
  %3999 = vmatpush1.msra.mxu0 0.0
  %4000 = vmatprep.subr.mxu0 0.0
  %4001 = vmatpush1.msra.mxu0 0.0
  %4002 = vmatprep.subr.mxu0 0.0
  %4003 = vmatpush1.msra.mxu0 0.0
  %4004 = vmatprep.subr.mxu0 0.0
  %4005 = vmatpush1.msra.mxu0 0.0
  %4006 = vmatprep.subr.mxu0 0.0
  %4007 = vmatpush1.msra.mxu0 0.0
  %4008 = vmatprep.subr.mxu0 0.0
  %4009 = vmatpush1.msra.mxu0 0.0
  %4010 = vmatprep.subr.mxu0 0.0
  %4011 = vmatpush1.msra.mxu0 0.0
  %4012 = vmatprep.subr.mxu0 0.0
  %4013 = vmatpush1.msra.mxu0 0.0
  %4014 = vmatprep.subr.mxu0 0.0
  %4015 = vmatpush1.msra.mxu0 0.0
  %4016 = vmatprep.subr.mxu0 0.0
  %4017 = vmatpush1.msra.mxu0 0.0
  %4018 = vmatprep.mubr.f32.mxu0 0.0
  %4019 = vmatmul.mubr.f32.gmra.mrb[0].mxu0 %v3952
  %v4020 = vpop.f32.mrb[0].mxu0
  %v4021 = vadd.f32 %v3946, %v4020
  %v4022 = vpop.f32.mrb[0].mxu0
  %4023 = vdwg.mxu0
  %v4024 = vadd.f32 %v4021, %v313
  %v4025 = vtanh.pop %v4024
  %v4026 = vmul.f32 %v4025, 0.5
  %v4027 = vadd.f32 %v4026, 0.5
  %v4028 = vmul.f32 %v4027, %v3669
  %4030 = vrot.lane.b32.xlu0 %v4025, 64
  %v4031 = vpop.permute.xlu0 %4030
  %v4033 = vmul.f32 %v4027, %v4031
  %4035 = vrot.lane.b32.xlu0 %v4033, 32
  %v4036 = vpop.permute.xlu0 %4035
  %v4038 = vadd.f32 %v4028, %v4036
  %v4039 = vtanh.pop %v4038
  %4041 = vrot.lane.b32.xlu0 %v4039, 64
  %v4042 = vpop.permute.xlu0 %4041
  %v4044 = vmul.f32 %v4027, %v4042
  %v4045 = vmax.f32 %v4044, 0.0
  %4047 = vrot.lane.b32.xlu0 %v4045, 32
  %v4048 = vpop.permute.xlu0 %4047
  %v4049 = vsel %vm69, %v4048, 0
  %4051 = vmatprep.subr.mxu0 0.0
  %4052 = vmatpush1.msra.mxu0 %v49
  %4053 = vmatprep.subr.mxu0 0.0
  %4054 = vmatpush1.msra.mxu0 %v50
  %4055 = vmatprep.subr.mxu0 0.0
  %4056 = vmatpush1.msra.mxu0 %v51
  %4057 = vmatprep.subr.mxu0 0.0
  %4058 = vmatpush1.msra.mxu0 %v52
  %4059 = vmatprep.subr.mxu0 0.0
  %4060 = vmatpush1.msra.mxu0 0.0
  %4061 = vmatprep.subr.mxu0 0.0
  %4062 = vmatpush1.msra.mxu0 0.0
  %4063 = vmatprep.subr.mxu0 0.0
  %4064 = vmatpush1.msra.mxu0 0.0
  %4065 = vmatprep.subr.mxu0 0.0
  %4066 = vmatpush1.msra.mxu0 0.0
  %4067 = vmatprep.subr.mxu0 0.0
  %4068 = vmatpush1.msra.mxu0 0.0
  %4069 = vmatprep.subr.mxu0 0.0
  %4070 = vmatpush1.msra.mxu0 0.0
  %4071 = vmatprep.subr.mxu0 0.0
  %4072 = vmatpush1.msra.mxu0 0.0
  %4073 = vmatprep.subr.mxu0 0.0
  %4074 = vmatpush1.msra.mxu0 0.0
  %4075 = vmatprep.subr.mxu0 0.0
  %4076 = vmatpush1.msra.mxu0 0.0
  %4077 = vmatprep.subr.mxu0 0.0
  %4078 = vmatpush1.msra.mxu0 0.0
  %4079 = vmatprep.subr.mxu0 0.0
  %4080 = vmatpush1.msra.mxu0 0.0
  %4081 = vmatprep.subr.mxu0 0.0
  %4082 = vmatpush1.msra.mxu0 0.0
  %4083 = vmatprep.subr.mxu0 0.0
  %4084 = vmatpush1.msra.mxu0 0.0
  %4085 = vmatprep.subr.mxu0 0.0
  %4086 = vmatpush1.msra.mxu0 0.0
  %4087 = vmatprep.subr.mxu0 0.0
  %4088 = vmatpush1.msra.mxu0 0.0
  %4089 = vmatprep.subr.mxu0 0.0
  %4090 = vmatpush1.msra.mxu0 0.0
  %4091 = vmatprep.subr.mxu0 0.0
  %4092 = vmatpush1.msra.mxu0 0.0
  %4093 = vmatprep.subr.mxu0 0.0
  %4094 = vmatpush1.msra.mxu0 0.0
  %4095 = vmatprep.subr.mxu0 0.0
  %4096 = vmatpush1.msra.mxu0 0.0
  %4097 = vmatprep.subr.mxu0 0.0
  %4098 = vmatpush1.msra.mxu0 0.0
  %4099 = vmatprep.subr.mxu0 0.0
  %4100 = vmatpush1.msra.mxu0 0.0
  %4101 = vmatprep.subr.mxu0 0.0
  %4102 = vmatpush1.msra.mxu0 0.0
  %4103 = vmatprep.subr.mxu0 0.0
  %4104 = vmatpush1.msra.mxu0 0.0
  %4105 = vmatprep.subr.mxu0 0.0
  %4106 = vmatpush1.msra.mxu0 0.0
  %4107 = vmatprep.subr.mxu0 0.0
  %4108 = vmatpush1.msra.mxu0 0.0
  %4109 = vmatprep.subr.mxu0 0.0
  %4110 = vmatpush1.msra.mxu0 0.0
  %4111 = vmatprep.subr.mxu0 0.0
  %4112 = vmatpush1.msra.mxu0 0.0
  %4113 = vmatprep.subr.mxu0 0.0
  %4114 = vmatpush1.msra.mxu0 0.0
  %4115 = vmatprep.mubr.f32.mxu0 0.0
  %4116 = vmatmul.mubr.f32.gmra.mrb[0].mxu0 %v4049
  %v4117 = vpop.f32.mrb[0].mxu0
  %v4118 = vadd.f32 %v341, %v4117
  %v4119 = vpop.f32.mrb[0].mxu0
  %4120 = vdwg.mxu0
  %v4121 = vmax.f32 %v4118, 0.0
  %v4122 = vand.u32 2147483647, %v4118
  %v4123 = vsub.f32 0.0, %v4122
  %v4124 = vmul.f32 %v4123, 1.442695
  %v4125 = vpow.pop %v4124
  %v4126 = vadd.f32 %v4125, 1.0
  %v4127 = vlog2.pop %v4126
  %v4128 = vmul.f32 %v4127, 0.6931472
  %v4129 = vadd.f32 %v4121, %v4128
  %v4130 = vadd.f32 %v4129, 1e-06
  %s4131 = scalar_lea.vmem %s2, 80
  %v4132 = vld [vmem:[%s4131] sm:$0xff]
  %4134 = vrot.lane.b32.xlu0 %v4132, 1
  %v4135 = vpop.permute.xlu0 %4134
  %v4137 = vmul.f32 %v4130, %v4135
  %4139 = vrot.lane.b32.xlu0 %v4137, 127
  %v4140 = vpop.permute.xlu0 %4139
  %v4142 = vadd.f32 %v4118, %v4140
  %s4143 = scalar_lea.vmem %s0, 88
  %v4144 = vld [vmem:[%s4143] sm:$0xff]
  %4146 = vset.pattern.permute.xlu0 0
  %4147 = vperm.xlu0 %4146, %v4142
  %v4148 = vpop.permute.xlu0 %4147
  %v4150 = vmul.f32 %v4148, %v65
  %v4151 = vadd.f32 %v4144, %v4150
  %4152 = vmatprep.subr.mxu0 0.0
  %4153 = vmatpush1.msra.mxu0 %v36
  %4154 = vmatprep.subr.mxu0 0.0
  %4155 = vmatpush1.msra.mxu0 %v37
  %4156 = vmatprep.subr.mxu0 0.0
  %4157 = vmatpush1.msra.mxu0 %v38
  %4158 = vmatprep.subr.mxu0 0.0
  %4159 = vmatpush1.msra.mxu0 %v39
  %4160 = vmatprep.subr.mxu0 0.0
  %4161 = vmatpush1.msra.mxu0 0.0
  %4162 = vmatprep.subr.mxu0 0.0
  %4163 = vmatpush1.msra.mxu0 0.0
  %4164 = vmatprep.subr.mxu0 0.0
  %4165 = vmatpush1.msra.mxu0 0.0
  %4166 = vmatprep.subr.mxu0 0.0
  %4167 = vmatpush1.msra.mxu0 0.0
  %4168 = vmatprep.subr.mxu0 0.0
  %4169 = vmatpush1.msra.mxu0 0.0
  %4170 = vmatprep.subr.mxu0 0.0
  %4171 = vmatpush1.msra.mxu0 0.0
  %4172 = vmatprep.subr.mxu0 0.0
  %4173 = vmatpush1.msra.mxu0 0.0
  %4174 = vmatprep.subr.mxu0 0.0
  %4175 = vmatpush1.msra.mxu0 0.0
  %4176 = vmatprep.subr.mxu0 0.0
  %4177 = vmatpush1.msra.mxu0 0.0
  %4178 = vmatprep.subr.mxu0 0.0
  %4179 = vmatpush1.msra.mxu0 0.0
  %4180 = vmatprep.subr.mxu0 0.0
  %4181 = vmatpush1.msra.mxu0 0.0
  %4182 = vmatprep.subr.mxu0 0.0
  %4183 = vmatpush1.msra.mxu0 0.0
  %4184 = vmatprep.subr.mxu0 0.0
  %4185 = vmatpush1.msra.mxu0 0.0
  %4186 = vmatprep.subr.mxu0 0.0
  %4187 = vmatpush1.msra.mxu0 0.0
  %4188 = vmatprep.subr.mxu0 0.0
  %4189 = vmatpush1.msra.mxu0 0.0
  %4190 = vmatprep.subr.mxu0 0.0
  %4191 = vmatpush1.msra.mxu0 0.0
  %4192 = vmatprep.subr.mxu0 0.0
  %4193 = vmatpush1.msra.mxu0 0.0
  %4194 = vmatprep.subr.mxu0 0.0
  %4195 = vmatpush1.msra.mxu0 0.0
  %4196 = vmatprep.subr.mxu0 0.0
  %4197 = vmatpush1.msra.mxu0 0.0
  %4198 = vmatprep.subr.mxu0 0.0
  %4199 = vmatpush1.msra.mxu0 0.0
  %4200 = vmatprep.subr.mxu0 0.0
  %4201 = vmatpush1.msra.mxu0 0.0
  %4202 = vmatprep.subr.mxu0 0.0
  %4203 = vmatpush1.msra.mxu0 0.0
  %4204 = vmatprep.subr.mxu0 0.0
  %4205 = vmatpush1.msra.mxu0 0.0
  %4206 = vmatprep.subr.mxu0 0.0
  %4207 = vmatpush1.msra.mxu0 0.0
  %4208 = vmatprep.subr.mxu0 0.0
  %4209 = vmatpush1.msra.mxu0 0.0
  %4210 = vmatprep.subr.mxu0 0.0
  %4211 = vmatpush1.msra.mxu0 0.0
  %4212 = vmatprep.subr.mxu0 0.0
  %4213 = vmatpush1.msra.mxu0 0.0
  %4214 = vmatprep.subr.mxu0 0.0
  %4215 = vmatpush1.msra.mxu0 0.0
  %4216 = vmatprep.mubr.f32.mxu0 0.0
  %4217 = vmatmul.mubr.f32.gmra.mrb[0].mxu0 %v3877
  %v4218 = vpop.f32.mrb[0].mxu0
  %v4219 = vadd.f32 0.0, %v4218
  %v4220 = vpop.f32.mrb[0].mxu0
  %4221 = vdwg.mxu0
  %v4222 = vadd.f32 %v4151, %v4219
  %v4223 = vtanh.pop %v4222
  %v4224 = vmul.f32 %v4223, 0.5
  %v4225 = vadd.f32 %v4224, 0.5
  %v4226 = vmul.f32 %v4225, %v3867
  %4228 = vrot.lane.b32.xlu0 %v4223, 64
  %v4229 = vpop.permute.xlu0 %4228
  %v4231 = vmul.f32 %v4225, %v4229
  %4233 = vrot.lane.b32.xlu0 %v4231, 32
  %v4234 = vpop.permute.xlu0 %4233
  %v4236 = vadd.f32 %v4226, %v4234
  %v4237 = vtanh.pop %v4236
  %4239 = vrot.lane.b32.xlu0 %v4237, 64
  %v4240 = vpop.permute.xlu0 %4239
  %v4242 = vmul.f32 %v4225, %v4240
  %4244 = vrot.lane.b32.xlu0 %v4242, 32
  %v4245 = vpop.permute.xlu0 %4244
  %v4246 = vsel %vm69, %v4245, 0
  %4248 = vmatprep.subr.mxu0 0.0
  %4249 = vmatpush1.msra.mxu0 %v40
  %4250 = vmatprep.subr.mxu0 0.0
  %4251 = vmatpush1.msra.mxu0 %v41
  %4252 = vmatprep.subr.mxu0 0.0
  %4253 = vmatpush1.msra.mxu0 %v42
  %4254 = vmatprep.subr.mxu0 0.0
  %4255 = vmatpush1.msra.mxu0 %v43
  %4256 = vmatprep.subr.mxu0 0.0
  %4257 = vmatpush1.msra.mxu0 0.0
  %4258 = vmatprep.subr.mxu0 0.0
  %4259 = vmatpush1.msra.mxu0 0.0
  %4260 = vmatprep.subr.mxu0 0.0
  %4261 = vmatpush1.msra.mxu0 0.0
  %4262 = vmatprep.subr.mxu0 0.0
  %4263 = vmatpush1.msra.mxu0 0.0
  %4264 = vmatprep.subr.mxu0 0.0
  %4265 = vmatpush1.msra.mxu0 0.0
  %4266 = vmatprep.subr.mxu0 0.0
  %4267 = vmatpush1.msra.mxu0 0.0
  %4268 = vmatprep.subr.mxu0 0.0
  %4269 = vmatpush1.msra.mxu0 0.0
  %4270 = vmatprep.subr.mxu0 0.0
  %4271 = vmatpush1.msra.mxu0 0.0
  %4272 = vmatprep.subr.mxu0 0.0
  %4273 = vmatpush1.msra.mxu0 0.0
  %4274 = vmatprep.subr.mxu0 0.0
  %4275 = vmatpush1.msra.mxu0 0.0
  %4276 = vmatprep.subr.mxu0 0.0
  %4277 = vmatpush1.msra.mxu0 0.0
  %4278 = vmatprep.subr.mxu0 0.0
  %4279 = vmatpush1.msra.mxu0 0.0
  %4280 = vmatprep.subr.mxu0 0.0
  %4281 = vmatpush1.msra.mxu0 0.0
  %4282 = vmatprep.subr.mxu0 0.0
  %4283 = vmatpush1.msra.mxu0 0.0
  %4284 = vmatprep.subr.mxu0 0.0
  %4285 = vmatpush1.msra.mxu0 0.0
  %4286 = vmatprep.subr.mxu0 0.0
  %4287 = vmatpush1.msra.mxu0 0.0
  %4288 = vmatprep.subr.mxu0 0.0
  %4289 = vmatpush1.msra.mxu0 0.0
  %4290 = vmatprep.subr.mxu0 0.0
  %4291 = vmatpush1.msra.mxu0 0.0
  %4292 = vmatprep.subr.mxu0 0.0
  %4293 = vmatpush1.msra.mxu0 0.0
  %4294 = vmatprep.subr.mxu0 0.0
  %4295 = vmatpush1.msra.mxu0 0.0
  %4296 = vmatprep.subr.mxu0 0.0
  %4297 = vmatpush1.msra.mxu0 0.0
  %4298 = vmatprep.subr.mxu0 0.0
  %4299 = vmatpush1.msra.mxu0 0.0
  %4300 = vmatprep.subr.mxu0 0.0
  %4301 = vmatpush1.msra.mxu0 0.0
  %4302 = vmatprep.subr.mxu0 0.0
  %4303 = vmatpush1.msra.mxu0 0.0
  %4304 = vmatprep.subr.mxu0 0.0
  %4305 = vmatpush1.msra.mxu0 0.0
  %4306 = vmatprep.subr.mxu0 0.0
  %4307 = vmatpush1.msra.mxu0 0.0
  %4308 = vmatprep.subr.mxu0 0.0
  %4309 = vmatpush1.msra.mxu0 0.0
  %4310 = vmatprep.subr.mxu0 0.0
  %4311 = vmatpush1.msra.mxu0 0.0
  %4312 = vmatprep.mubr.f32.mxu0 0.0
  %4313 = vmatmul.mubr.f32.gmra.mrb[0].mxu0 %v4246
  %v4314 = vpop.f32.mrb[0].mxu0
  %v4315 = vadd.f32 0.0, %v4314
  %v4316 = vpop.f32.mrb[0].mxu0
  %4317 = vdwg.mxu0
  %4319 = vrot.lane.b32.xlu0 %v4044, 32
  %v4320 = vpop.permute.xlu0 %4319
  %v4321 = vsel %vm69, %v4320, 0
  %4323 = vmatprep.subr.mxu0 0.0
  %4324 = vmatpush1.msra.mxu0 %v44
  %4325 = vmatprep.subr.mxu0 0.0
  %4326 = vmatpush1.msra.mxu0 %v45
  %4327 = vmatprep.subr.mxu0 0.0
  %4328 = vmatpush1.msra.mxu0 %v46
  %4329 = vmatprep.subr.mxu0 0.0
  %4330 = vmatpush1.msra.mxu0 %v47
  %4331 = vmatprep.subr.mxu0 0.0
  %4332 = vmatpush1.msra.mxu0 0.0
  %4333 = vmatprep.subr.mxu0 0.0
  %4334 = vmatpush1.msra.mxu0 0.0
  %4335 = vmatprep.subr.mxu0 0.0
  %4336 = vmatpush1.msra.mxu0 0.0
  %4337 = vmatprep.subr.mxu0 0.0
  %4338 = vmatpush1.msra.mxu0 0.0
  %4339 = vmatprep.subr.mxu0 0.0
  %4340 = vmatpush1.msra.mxu0 0.0
  %4341 = vmatprep.subr.mxu0 0.0
  %4342 = vmatpush1.msra.mxu0 0.0
  %4343 = vmatprep.subr.mxu0 0.0
  %4344 = vmatpush1.msra.mxu0 0.0
  %4345 = vmatprep.subr.mxu0 0.0
  %4346 = vmatpush1.msra.mxu0 0.0
  %4347 = vmatprep.subr.mxu0 0.0
  %4348 = vmatpush1.msra.mxu0 0.0
  %4349 = vmatprep.subr.mxu0 0.0
  %4350 = vmatpush1.msra.mxu0 0.0
  %4351 = vmatprep.subr.mxu0 0.0
  %4352 = vmatpush1.msra.mxu0 0.0
  %4353 = vmatprep.subr.mxu0 0.0
  %4354 = vmatpush1.msra.mxu0 0.0
  %4355 = vmatprep.subr.mxu0 0.0
  %4356 = vmatpush1.msra.mxu0 0.0
  %4357 = vmatprep.subr.mxu0 0.0
  %4358 = vmatpush1.msra.mxu0 0.0
  %4359 = vmatprep.subr.mxu0 0.0
  %4360 = vmatpush1.msra.mxu0 0.0
  %4361 = vmatprep.subr.mxu0 0.0
  %4362 = vmatpush1.msra.mxu0 0.0
  %4363 = vmatprep.subr.mxu0 0.0
  %4364 = vmatpush1.msra.mxu0 0.0
  %4365 = vmatprep.subr.mxu0 0.0
  %4366 = vmatpush1.msra.mxu0 0.0
  %4367 = vmatprep.subr.mxu0 0.0
  %4368 = vmatpush1.msra.mxu0 0.0
  %4369 = vmatprep.subr.mxu0 0.0
  %4370 = vmatpush1.msra.mxu0 0.0
  %4371 = vmatprep.subr.mxu0 0.0
  %4372 = vmatpush1.msra.mxu0 0.0
  %4373 = vmatprep.subr.mxu0 0.0
  %4374 = vmatpush1.msra.mxu0 0.0
  %4375 = vmatprep.subr.mxu0 0.0
  %4376 = vmatpush1.msra.mxu0 0.0
  %4377 = vmatprep.subr.mxu0 0.0
  %4378 = vmatpush1.msra.mxu0 0.0
  %4379 = vmatprep.subr.mxu0 0.0
  %4380 = vmatpush1.msra.mxu0 0.0
  %4381 = vmatprep.subr.mxu0 0.0
  %4382 = vmatpush1.msra.mxu0 0.0
  %4383 = vmatprep.subr.mxu0 0.0
  %4384 = vmatpush1.msra.mxu0 0.0
  %4385 = vmatprep.subr.mxu0 0.0
  %4386 = vmatpush1.msra.mxu0 0.0
  %4387 = vmatprep.mubr.f32.mxu0 0.0
  %4388 = vmatmul.mubr.f32.gmra.mrb[0].mxu0 %v4321
  %v4389 = vpop.f32.mrb[0].mxu0
  %v4390 = vadd.f32 %v4315, %v4389
  %v4391 = vpop.f32.mrb[0].mxu0
  %4392 = vdwg.mxu0
  %v4393 = vadd.f32 %v4390, %v313
  %v4394 = vtanh.pop %v4393
  %v4395 = vmul.f32 %v4394, 0.5
  %v4396 = vadd.f32 %v4395, 0.5
  %v4397 = vmul.f32 %v4396, %v4038
  %4399 = vrot.lane.b32.xlu0 %v4394, 64
  %v4400 = vpop.permute.xlu0 %4399
  %v4402 = vmul.f32 %v4396, %v4400
  %4404 = vrot.lane.b32.xlu0 %v4402, 32
  %v4405 = vpop.permute.xlu0 %4404
  %v4407 = vadd.f32 %v4397, %v4405
  %v4408 = vtanh.pop %v4407
  %4410 = vrot.lane.b32.xlu0 %v4408, 64
  %v4411 = vpop.permute.xlu0 %4410
  %v4413 = vmul.f32 %v4396, %v4411
  %v4414 = vmax.f32 %v4413, 0.0
  %4416 = vrot.lane.b32.xlu0 %v4414, 32
  %v4417 = vpop.permute.xlu0 %4416
  %v4418 = vsel %vm69, %v4417, 0
  %4420 = vmatprep.subr.mxu0 0.0
  %4421 = vmatpush1.msra.mxu0 %v49
  %4422 = vmatprep.subr.mxu0 0.0
  %4423 = vmatpush1.msra.mxu0 %v50
  %4424 = vmatprep.subr.mxu0 0.0
  %4425 = vmatpush1.msra.mxu0 %v51
  %4426 = vmatprep.subr.mxu0 0.0
  %4427 = vmatpush1.msra.mxu0 %v52
  %4428 = vmatprep.subr.mxu0 0.0
  %4429 = vmatpush1.msra.mxu0 0.0
  %4430 = vmatprep.subr.mxu0 0.0
  %4431 = vmatpush1.msra.mxu0 0.0
  %4432 = vmatprep.subr.mxu0 0.0
  %4433 = vmatpush1.msra.mxu0 0.0
  %4434 = vmatprep.subr.mxu0 0.0
  %4435 = vmatpush1.msra.mxu0 0.0
  %4436 = vmatprep.subr.mxu0 0.0
  %4437 = vmatpush1.msra.mxu0 0.0
  %4438 = vmatprep.subr.mxu0 0.0
  %4439 = vmatpush1.msra.mxu0 0.0
  %4440 = vmatprep.subr.mxu0 0.0
  %4441 = vmatpush1.msra.mxu0 0.0
  %4442 = vmatprep.subr.mxu0 0.0
  %4443 = vmatpush1.msra.mxu0 0.0
  %4444 = vmatprep.subr.mxu0 0.0
  %4445 = vmatpush1.msra.mxu0 0.0
  %4446 = vmatprep.subr.mxu0 0.0
  %4447 = vmatpush1.msra.mxu0 0.0
  %4448 = vmatprep.subr.mxu0 0.0
  %4449 = vmatpush1.msra.mxu0 0.0
  %4450 = vmatprep.subr.mxu0 0.0
  %4451 = vmatpush1.msra.mxu0 0.0
  %4452 = vmatprep.subr.mxu0 0.0
  %4453 = vmatpush1.msra.mxu0 0.0
  %4454 = vmatprep.subr.mxu0 0.0
  %4455 = vmatpush1.msra.mxu0 0.0
  %4456 = vmatprep.subr.mxu0 0.0
  %4457 = vmatpush1.msra.mxu0 0.0
  %4458 = vmatprep.subr.mxu0 0.0
  %4459 = vmatpush1.msra.mxu0 0.0
  %4460 = vmatprep.subr.mxu0 0.0
  %4461 = vmatpush1.msra.mxu0 0.0
  %4462 = vmatprep.subr.mxu0 0.0
  %4463 = vmatpush1.msra.mxu0 0.0
  %4464 = vmatprep.subr.mxu0 0.0
  %4465 = vmatpush1.msra.mxu0 0.0
  %4466 = vmatprep.subr.mxu0 0.0
  %4467 = vmatpush1.msra.mxu0 0.0
  %4468 = vmatprep.subr.mxu0 0.0
  %4469 = vmatpush1.msra.mxu0 0.0
  %4470 = vmatprep.subr.mxu0 0.0
  %4471 = vmatpush1.msra.mxu0 0.0
  %4472 = vmatprep.subr.mxu0 0.0
  %4473 = vmatpush1.msra.mxu0 0.0
  %4474 = vmatprep.subr.mxu0 0.0
  %4475 = vmatpush1.msra.mxu0 0.0
  %4476 = vmatprep.subr.mxu0 0.0
  %4477 = vmatpush1.msra.mxu0 0.0
  %4478 = vmatprep.subr.mxu0 0.0
  %4479 = vmatpush1.msra.mxu0 0.0
  %4480 = vmatprep.subr.mxu0 0.0
  %4481 = vmatpush1.msra.mxu0 0.0
  %4482 = vmatprep.subr.mxu0 0.0
  %4483 = vmatpush1.msra.mxu0 0.0
  %4484 = vmatprep.mubr.f32.mxu0 0.0
  %4485 = vmatmul.mubr.f32.gmra.mrb[0].mxu0 %v4418
  %v4486 = vpop.f32.mrb[0].mxu0
  %v4487 = vadd.f32 %v341, %v4486
  %v4488 = vpop.f32.mrb[0].mxu0
  %4489 = vdwg.mxu0
  %v4490 = vmax.f32 %v4487, 0.0
  %v4491 = vand.u32 2147483647, %v4487
  %v4492 = vsub.f32 0.0, %v4491
  %v4493 = vmul.f32 %v4492, 1.442695
  %v4494 = vpow.pop %v4493
  %v4495 = vadd.f32 %v4494, 1.0
  %v4496 = vlog2.pop %v4495
  %v4497 = vmul.f32 %v4496, 0.6931472
  %v4498 = vadd.f32 %v4490, %v4497
  %v4499 = vadd.f32 %v4498, 1e-06
  %s4500 = scalar_lea.vmem %s2, 88
  %v4501 = vld [vmem:[%s4500] sm:$0xff]
  %4503 = vrot.lane.b32.xlu0 %v4501, 1
  %v4504 = vpop.permute.xlu0 %4503
  %v4506 = vmul.f32 %v4499, %v4504
  %4508 = vrot.lane.b32.xlu0 %v4506, 127
  %v4509 = vpop.permute.xlu0 %4508
  %v4511 = vadd.f32 %v4487, %v4509
  %4513 = vrot.lane.b32.xlu0 %v785, 1
  %v4514 = vpop.permute.xlu0 %4513
  %4517 = vrot.lane.b32.xlu0 %v1156, 2
  %v4518 = vpop.permute.xlu0 %4517
  %4521 = vrot.lane.b32.xlu0 %v1527, 3
  %v4522 = vpop.permute.xlu0 %4521
  %4525 = vrot.lane.b32.xlu0 %v1898, 4
  %v4526 = vpop.permute.xlu0 %4525
  %4529 = vrot.lane.b32.xlu0 %v2269, 5
  %v4530 = vpop.permute.xlu0 %4529
  %4533 = vrot.lane.b32.xlu0 %v2640, 6
  %v4534 = vpop.permute.xlu0 %4533
  %4537 = vrot.lane.b32.xlu0 %v3011, 7
  %v4538 = vpop.permute.xlu0 %4537
  %4541 = vrot.lane.b32.xlu0 %v3380, 8
  %v4542 = vpop.permute.xlu0 %4541
  %4545 = vrot.lane.b32.xlu0 %v3749, 9
  %v4546 = vpop.permute.xlu0 %4545
  %4549 = vrot.lane.b32.xlu0 %v4118, 10
  %v4550 = vpop.permute.xlu0 %4549
  %4553 = vrot.lane.b32.xlu0 %v4487, 11
  %v4554 = vpop.permute.xlu0 %4553
  %4557 = vrot.lane.b32.xlu0 %v427, 11
  %v4558 = vpop.permute.xlu0 %4557
  %4561 = vrot.lane.b32.xlu0 %v797, 12
  %v4562 = vpop.permute.xlu0 %4561
  %4565 = vrot.lane.b32.xlu0 %v1168, 13
  %v4566 = vpop.permute.xlu0 %4565
  %4569 = vrot.lane.b32.xlu0 %v1539, 14
  %v4570 = vpop.permute.xlu0 %4569
  %vm4572 = vcmask 7168
  %v4573 = vsel %vm4572, %v415, %v4514
  %vm4574 = vcmask 15360
  %v4575 = vsel %vm4574, %v4573, %v4518
  %vm4576 = vcmask 23552
  %v4577 = vsel %vm4576, %v4575, %v4522
  %vm4578 = vcmask 31744
  %v4579 = vsel %vm4578, %v4577, %v4526
  %vm4580 = vcmask 39936
  %v4581 = vsel %vm4580, %v4579, %v4530
  %vm4582 = vcmask 48128
  %v4583 = vsel %vm4582, %v4581, %v4534
  %vm4584 = vcmask 56320
  %v4585 = vsel %vm4584, %v4583, %v4538
  %vm4586 = vcmask 64512
  %v4587 = vsel %vm4586, %v4585, %v4542
  %vm4588 = vcmask 72704
  %v4589 = vsel %vm4588, %v4587, %v4546
  %vm4590 = vcmask 80896
  %v4591 = vsel %vm4590, %v4589, %v4550
  %vm4592 = vcmask 89088
  %v4593 = vsel %vm4592, %v4591, %v4554
  %vm4594 = vcmask 97280
  %v4595 = vsel %vm4594, %v4593, %v4558
  %vm4596 = vcmask 105472
  %v4597 = vsel %vm4596, %v4595, %v4562
  %vm4598 = vcmask 113664
  %v4599 = vsel %vm4598, %v4597, %v4566
  %vm4600 = vcmask 121856
  %v4601 = vsel %vm4600, %v4599, %v4570
  %4603 = vrot.lane.b32.xlu0 %v1910, 127
  %v4604 = vpop.permute.xlu0 %4603
  %4607 = vrot.lane.b32.xlu0 %v2652, 1
  %v4608 = vpop.permute.xlu0 %4607
  %4611 = vrot.lane.b32.xlu0 %v3023, 2
  %v4612 = vpop.permute.xlu0 %4611
  %4615 = vrot.lane.b32.xlu0 %v3392, 3
  %v4616 = vpop.permute.xlu0 %4615
  %4619 = vrot.lane.b32.xlu0 %v3761, 4
  %v4620 = vpop.permute.xlu0 %4619
  %4623 = vrot.lane.b32.xlu0 %v4130, 5
  %v4624 = vpop.permute.xlu0 %4623
  %4627 = vrot.lane.b32.xlu0 %v4499, 6
  %v4628 = vpop.permute.xlu0 %4627
  %4631 = vrot.lane.b32.xlu0 %v438, 8
  %v4632 = vpop.permute.xlu0 %4631
  %4635 = vrot.lane.b32.xlu0 %v809, 9
  %v4636 = vpop.permute.xlu0 %4635
  %4639 = vrot.lane.b32.xlu0 %v1180, 10
  %v4640 = vpop.permute.xlu0 %4639
  %4643 = vrot.lane.b32.xlu0 %v1551, 11
  %v4644 = vpop.permute.xlu0 %4643
  %4647 = vrot.lane.b32.xlu0 %v1922, 12
  %v4648 = vpop.permute.xlu0 %4647
  %4651 = vrot.lane.b32.xlu0 %v2293, 13
  %v4652 = vpop.permute.xlu0 %4651
  %4655 = vrot.lane.b32.xlu0 %v2664, 14
  %v4656 = vpop.permute.xlu0 %4655
  %4658 = vrot.lane.b32.xlu0 %v3035, 15
  %v4659 = vpop.permute.xlu0 %4658
  %v4661 = vsel %vm4572, %v4604, %v2281
  %v4662 = vsel %vm4574, %v4661, %v4608
  %v4663 = vsel %vm4576, %v4662, %v4612
  %v4664 = vsel %vm4578, %v4663, %v4616
  %v4665 = vsel %vm4580, %v4664, %v4620
  %v4666 = vsel %vm4582, %v4665, %v4624
  %v4667 = vsel %vm4584, %v4666, %v4628
  %v4668 = vsel %vm4586, %v4667, %v4632
  %v4669 = vsel %vm4588, %v4668, %v4636
  %v4670 = vsel %vm4590, %v4669, %v4640
  %v4671 = vsel %vm4592, %v4670, %v4644
  %v4672 = vsel %vm4594, %v4671, %v4648
  %v4673 = vsel %vm4596, %v4672, %v4652
  %v4674 = vsel %vm4598, %v4673, %v4656
  %v4675 = vsel %vm4600, %v4674, %v4659
  %4676 = vrot.lane.b32.xlu0 %v3773, 1
  %v4677 = vpop.permute.xlu0 %4676
  %4679 = vrot.lane.b32.xlu0 %v4142, 2
  %v4680 = vpop.permute.xlu0 %4679
  %4683 = vrot.lane.b32.xlu0 %v4511, 3
  %v4684 = vpop.permute.xlu0 %4683
  %v4686 = vsel %vm4572, %v3404, %v4677
  %v4687 = vsel %vm4574, %v4686, %v4680
  %v4688 = vsel %vm4576, %v4687, %v4684
  %4690 = vrot.lane.b32.xlu0 %v4675, 16
  %v4691 = vpop.permute.xlu0 %4690
  %4694 = vrot.lane.b32.xlu0 %v4688, 32
  %v4695 = vpop.permute.xlu0 %4694
  %vm4697 = vcmask 130048
  %v4698 = vsel %vm4697, %v4601, %v4691
  %v4699 = vsel %vm69, %v4698, %v4695
  %vm4700 = vcmask 293888
  %4701 = vst.msk [vmem:[%s10] sm:$0xff] %vm4700, %v4699
  // Predicated region
  $region42: #{deepar_forward.1} parent=0 // pred_check
    _
  $region43: #{deepar_forward.1} parent=0 // pred_check_branch
    %4703 = sbr.rel (0) target = $region45
  $region44: #{deepar_forward.1} parent=0 // pred_region
    _
  $region45: #{deepar_forward.1} parent=0 // pred_fallthru
    _
  // Predicated region
  $region46: #{deepar_forward.1} parent=0 // pred_check
    _
  $region47: #{deepar_forward.1} parent=0 // pred_check_branch
    %4705 = sbr.rel (0) target = $region49
  $region48: #{deepar_forward.1} parent=0 // pred_region
    _
  $region49: #{deepar_forward.1} parent=0 // pred_fallthru
    _

</llo_original>
